<compile_context>
chip_gen: v5e
topology: v5e:2x2
jax: 0.10.0
libtpu: 0.0.40
codegen_flags: <defaults>
</compile_context>

<pallas_src>
import math
from functools import partial

import jax
import jax.numpy as jnp
from jax.experimental import pallas as pl
from jax.experimental.pallas import tpu as pltpu

EPS = 1e-6

STACK_KEYS = ("a1", "n1b", "wqkv", "bqkv", "wo", "bo",
              "a2", "n2b", "w1", "f1b", "w2", "f2b")


# ---------------------------------------------------------------------------
# In-kernel helpers
# ---------------------------------------------------------------------------
def _norm(x, alpha, bias, d):
    # Tutorial Norm: alpha * (x - mean) / (std + eps) + bias,
    # std is torch's unbiased std (divides by d - 1).
    mean = jnp.mean(x, axis=-1, keepdims=True)
    xc = x - mean
    var = jnp.sum(xc * xc, axis=-1, keepdims=True) * (1.0 / (d - 1))
    std = jnp.sqrt(var)
    inv = 1.0 / (std + EPS)          # exact reciprocal; only [rows,1] elements
    return alpha * (xc * inv) + bias


# ---------------------------------------------------------------------------
# Fused encoder stack kernel.
# Grid = (batch blocks, layers); layer axis is innermost ("arbitrary").
# Activations live in the output VMEM block across the layer axis.
# ---------------------------------------------------------------------------
def encoder_stack_kernel(x_ref, mask_ref,
                         a1_ref, n1b_ref, wqkv_ref, bqkv_ref, wo_ref, bo_ref,
                         a2_ref, n2b_ref, w1_ref, f1b_ref, w2_ref, f2b_ref,
                         fa_ref, fb_ref, o_ref,
                         *, heads, d_model, d_ff, seq, bt, n_layers, ff_chunk):
    layer = pl.program_id(1)
    dk = d_model // heads
    R = bt * seq
    scale = 1.0 / math.sqrt(dk)

    # Layer 0 seeds the resident output block with the embedded+PE input;
    # later layers read the previous layer's activations straight from VMEM.
    @pl.when(layer == 0)
    def _():
        o_ref[...] = x_ref[...]

    x = o_ref[...].reshape(R, d_model)                      # [R, D] f32

    m = mask_ref[...]                                       # [bt, 1, S]
    mbias = jnp.where(m == 0, jnp.float32(-1e9), jnp.float32(0.0))

    # ---------------- multi-head self-attention (pre-norm) -----------------
    xn = _norm(x, a1_ref[0], n1b_ref[0], d_model).astype(jnp.bfloat16)

    # Fused q/k/v projection: one [R,D]x[D,3D] MXU matmul + one bias add.
    qkv = (jnp.dot(xn, wqkv_ref[0], preferred_element_type=jnp.float32)
           + bqkv_ref[0])                                   # [R, 3D] f32
    qkv3 = qkv.reshape(bt, seq, 3 * d_model)

    def gather_heads(base, s=None):
        # [bt, S, 3D] slab -> head-batched [bt*heads, S, dk] bf16.
        parts = []
        for h in range(heads):
            c0 = base + h * dk
            t = qkv3[:, :, c0:c0 + dk]
            if s is not None:
                t = t * s
            parts.append(t.reshape(bt, 1, seq, dk))
        return (jnp.concatenate(parts, axis=1)
                .reshape(bt * heads, seq, dk).astype(jnp.bfloat16))

    qh = gather_heads(0, scale)                 # 1/sqrt(dk) hoisted onto q
    kh = gather_heads(d_model)
    vh = gather_heads(2 * d_model)

    # Single head-batched score / softmax / PV pass (batch = bt*heads).
    sc = jnp.einsum('bqd,bkd->bqk', qh, kh,
                    preferred_element_type=jnp.float32)     # [bt*h, S, S]
    sc = (sc.reshape(bt, heads, seq, seq)
          + mbias[:, None, :, :]).reshape(bt * heads, seq, seq)
    sc = sc - jnp.max(sc, axis=-1, keepdims=True)
    p = jnp.exp(sc)
    p = p * pl.reciprocal(jnp.sum(p, axis=-1, keepdims=True), approx=True)
    oh = jnp.einsum('bqk,bkd->bqd', p.astype(jnp.bfloat16), vh,
                    preferred_element_type=jnp.float32)     # [bt*h, S, dk]

    # Merge heads back to [R, D] and do ONE full-K output projection.
    oh4 = oh.reshape(bt, heads, seq, dk)
    heads_out = jnp.concatenate([oh4[:, h, :, :] for h in range(heads)],
                                axis=-1).reshape(R, d_model)
    attn = (jnp.dot(heads_out.astype(jnp.bfloat16), wo_ref[0],
                    preferred_element_type=jnp.float32) + bo_ref[0])
    x = x + attn                                            # dropout_1 = identity

    # -------------------- feed-forward (pre-norm), d_ff-chunked ------------
    xn2 = _norm(x, a2_ref[0], n2b_ref[0], d_model).astype(jnp.bfloat16)
    ff = jnp.zeros((R, d_model), jnp.float32)
    for c0 in range(0, d_ff, ff_chunk):
        c1 = c0 + ff_chunk
        hdn = jnp.maximum(
            jnp.dot(xn2, w1_ref[0, :, c0:c1],
                    preferred_element_type=jnp.float32) + f1b_ref[0, :, c0:c1],
            0.0)
        ff = ff + jnp.dot(hdn.astype(jnp.bfloat16), w2_ref[0, c0:c1, :],
                          preferred_element_type=jnp.float32)
    x = x + ff + f2b_ref[0]                                 # dropout_2 = identity

    o_ref[...] = x.reshape(bt, seq, d_model)

    # Final encoder Norm fused into the last layer step (no extra launch).
    @pl.when(layer == n_layers - 1)
    def _():
        o_ref[...] = _norm(x, fa_ref[...], fb_ref[...],
                           d_model).reshape(bt, seq, d_model)


def final_norm_kernel(x_ref, a_ref, b_ref, o_ref, *, d_model, seq, bt):
    x = x_ref[...].reshape(bt * seq, d_model)
    o_ref[...] = _norm(x, a_ref[...], b_ref[...], d_model).reshape(bt, seq, d_model)


# ---------------------------------------------------------------------------
# Wrappers
# ---------------------------------------------------------------------------
def _pick_block_batch(batch, seq, target_rows=512):
    """~target_rows rows per grid step, but keep >=2 grid steps when B >= 2
    so both v7x TensorCores get work from the 'parallel' batch axis."""
    bt = max(1, target_rows // max(seq, 1))
    if batch >= 2:
        bt = min(bt, pl.cdiv(batch, 2))
    return max(1, min(bt, batch))


def _pick_ff_chunk(d_ff):
    for c in (512, 256, 128):
        if d_ff > c and d_ff % c == 0:
            return c
    return d_ff


def _vmem_limit_bytes(bt, seq, d_model, d_ff, heads, ff_chunk):
    R = bt * seq
    f32, bf16 = 4, 2
    x_blk = bt * seq * d_model * f32
    m_blk = bt * seq * 4
    w_blk = (3 * d_model * d_model + d_model * d_model
             + 2 * d_model * d_ff) * bf16
    b_blk = (3 * d_model + 6 * d_model + d_ff) * f32
    # double-buffered pipelined blocks + resident output block + final params
    pipelined = 2 * (x_blk + m_blk + w_blk + b_blk) + 2 * x_blk + 4 * d_model * f32
    live = (R * 3 * d_model * f32                      # fused qkv
            + 3 * R * d_model * bf16                   # head-batched q/k/v
            + 2 * bt * heads * seq * seq * f32         # scores + probs
            + 6 * R * d_model * f32                    # attn/ff/x working set
            + 2 * R * ff_chunk * f32)                  # FF hidden chunk
    total = pipelined + live
    return int(min(max(total * 3 // 2, 32 * 1024 * 1024), 96 * 1024 * 1024))


def encoder_stack(x, mask, stack, final_alpha, final_bias, heads):
    B, S, D = x.shape
    N = stack["wqkv"].shape[0]
    d_ff = stack["w1"].shape[-1]
    assert D % heads == 0

    bt = _pick_block_batch(B, S)
    Bp = pl.cdiv(B, bt) * bt
    if Bp != B:                       # pad batch to a multiple of bt
        x = jnp.pad(x, ((0, Bp - B), (0, 0), (0, 0)))
        mask = jnp.pad(mask, ((0, Bp - B), (0, 0), (0, 0)))
    ff_chunk = _pick_ff_chunk(d_ff)

    layer_ops = [stack[k] for k in STACK_KEYS]

    def layer_spec(arr):              # per-layer block, streamed along layer axis
        nd = arr.ndim
        return pl.BlockSpec((1,) + arr.shape[1:],
                            lambda b, l, _nd=nd: (l,) + (0,) * (_nd - 1))

    def const_spec(arr):              # grid-invariant (final norm params)
        nd = arr.ndim
        return pl.BlockSpec(arr.shape, lambda b, l, _nd=nd: (0,) * _nd)

    kernel = partial(encoder_stack_kernel, heads=heads, d_model=D, d_ff=d_ff,
                     seq=S, bt=bt, n_layers=N, ff_chunk=ff_chunk)

    out = pl.pallas_call(
        kernel,
        out_shape=jax.ShapeDtypeStruct((Bp, S, D), jnp.float32),
        grid=(Bp // bt, N),
        in_specs=[pl.BlockSpec((bt, S, D), lambda b, l: (b, 0, 0)),
                  pl.BlockSpec((bt, 1, S), lambda b, l: (b, 0, 0))]
                 + [layer_spec(a) for a in layer_ops]
                 + [const_spec(final_alpha), const_spec(final_bias)],
        out_specs=pl.BlockSpec((bt, S, D), lambda b, l: (b, 0, 0)),
        compiler_params=pltpu.CompilerParams(
            dimension_semantics=("parallel", "arbitrary"),
            vmem_limit_bytes=_vmem_limit_bytes(bt, S, D, d_ff, heads, ff_chunk)),
    )(x, mask, *layer_ops, final_alpha, final_bias)
    return out[:B] if Bp != B else out


def final_norm(x, alpha, bias):
    # Only used in the degenerate N == 0 case; otherwise fused into the stack.
    B, S, D = x.shape
    bt = _pick_block_batch(B, S)
    Bp = pl.cdiv(B, bt) * bt
    if Bp != B:
        x = jnp.pad(x, ((0, Bp - B), (0, 0), (0, 0)))
    out = pl.pallas_call(
        partial(final_norm_kernel, d_model=D, seq=S, bt=bt),
        out_shape=jax.ShapeDtypeStruct((Bp, S, D), jnp.float32),
        grid=(Bp // bt,),
        in_specs=[pl.BlockSpec((bt, S, D), lambda b: (b, 0, 0)),
                  pl.BlockSpec(alpha.shape, lambda b: (0, 0)),
                  pl.BlockSpec(bias.shape, lambda b: (0, 0))],
        out_specs=pl.BlockSpec((bt, S, D), lambda b: (b, 0, 0)),
        compiler_params=pltpu.CompilerParams(dimension_semantics=("parallel",)),
    )(x, alpha, bias)
    return out[:B] if Bp != B else out


# ---------------------------------------------------------------------------
# Parameter construction (deterministic, in-script) and full forward pass.
# ---------------------------------------------------------------------------
def make_positional_encoding(max_len, d_model):
    # Tutorial formula: exponent 2*col/d_model for every column,
    # sin at even columns, cos at odd columns.
    pos = jnp.arange(max_len, dtype=jnp.float32)[:, None]
    col = jnp.arange(d_model, dtype=jnp.float32)[None, :]
    angle = pos / jnp.power(10000.0, 2.0 * col / d_model)
    even = (jnp.arange(d_model)[None, :] % 2) == 0
    return jnp.where(even, jnp.sin(angle), jnp.cos(angle))      # [max_len, D]


def init_params(key, vocab_size, d_model, N, heads, d_ff=2048):
    keys = jax.random.split(key, 1 + max(N, 1))
    embed = 0.02 * jax.random.normal(keys[0], (vocab_size, d_model), jnp.float32)

    def lin(k, fan_in, fan_out):
        bound = 1.0 / math.sqrt(fan_in)
        return jax.random.uniform(k, (fan_in, fan_out), jnp.float32, -bound, bound)

    cols = {k: [] for k in STACK_KEYS}
    for i in range(N):
        kq, kk, kv, ko, k1, k2 = jax.random.split(keys[1 + i], 6)
        wq = lin(kq, d_model, d_model)
        wk = lin(kk, d_model, d_model)
        wv = lin(kv, d_model, d_model)
        cols["wqkv"].append(jnp.concatenate([wq, wk, wv], axis=1).astype(jnp.bfloat16))
        cols["bqkv"].append(jnp.zeros((1, 3 * d_model), jnp.float32))
        cols["wo"].append(lin(ko, d_model, d_model).astype(jnp.bfloat16))
        cols["bo"].append(jnp.zeros((1, d_model), jnp.float32))
        cols["w1"].append(lin(k1, d_model, d_ff).astype(jnp.bfloat16))
        cols["f1b"].append(jnp.zeros((1, d_ff), jnp.float32))
        cols["w2"].append(lin(k2, d_ff, d_model).astype(jnp.bfloat16))
        cols["f2b"].append(jnp.zeros((1, d_model), jnp.float32))
        cols["a1"].append(jnp.ones((1, d_model), jnp.float32))
        cols["n1b"].append(jnp.zeros((1, d_model), jnp.float32))
        cols["a2"].append(jnp.ones((1, d_model), jnp.float32))
        cols["n2b"].append(jnp.zeros((1, d_model), jnp.float32))

    stack = {k: jnp.stack(v) for k, v in cols.items()} if N > 0 else None
    return {"embed": embed, "stack": stack,
            "final_alpha": jnp.ones((1, d_model), jnp.float32),
            "final_bias": jnp.zeros((1, d_model), jnp.float32)}


def encoder_forward(src, mask, params, d_model, heads):
    B, S = src.shape
    # Embedding lookup (glue) + positional encoding (glue).
    x = jnp.take(params["embed"], src, axis=0)                  # [B, S, D]
    pe = make_positional_encoding(S, d_model)                   # [S, D]
    x = x * math.sqrt(d_model) + pe[None, :, :]
    if params["stack"] is None:                                 # N == 0
        return final_norm(x, params["final_alpha"], params["final_bias"])
    # Whole encoder stack (N layers + final Norm) in one fused pallas_call.
    return encoder_stack(x, mask, params["stack"],
                         params["final_alpha"], params["final_bias"], heads)


# ---------------------------------------------------------------------------
if __name__ == "__main__":
    vocab_size, d_model, N, heads, dropout = 50, 32, 2, 4, 0.0
    B, S = 2, 8

    key = jax.random.PRNGKey(0)
    k_param, k_src = jax.random.split(key)
    params = init_params(k_param, vocab_size, d_model, N, heads)

    src = jax.random.randint(k_src, (B, S), 0, vocab_size, dtype=jnp.int32)
    mask = jnp.ones((B, 1, S), dtype=jnp.int32)

    out = encoder_forward(src, mask, params, d_model, heads)
    out = jax.block_until_ready(out)
    assert out.shape == (B, S, d_model)
    assert bool(jnp.isfinite(out).all())
    print("KERNEL_OK")
</pallas_src>

<mosaic_0001>
module attributes {stable_mosaic.version = 11 : i64} {
  func.func @encoder_stack_kernel(%arg0: i32, %arg1: i32, %arg2: memref<1x8x32xf32, #tpu.memory_space<vmem>>, %arg3: memref<1x1x8xi32, #tpu.memory_space<vmem>>, %arg4: memref<1x1x32xf32, #tpu.memory_space<vmem>>, %arg5: memref<1x1x32xf32, #tpu.memory_space<vmem>>, %arg6: memref<1x32x96xbf16, #tpu.memory_space<vmem>>, %arg7: memref<1x1x96xf32, #tpu.memory_space<vmem>>, %arg8: memref<1x32x32xbf16, #tpu.memory_space<vmem>>, %arg9: memref<1x1x32xf32, #tpu.memory_space<vmem>>, %arg10: memref<1x1x32xf32, #tpu.memory_space<vmem>>, %arg11: memref<1x1x32xf32, #tpu.memory_space<vmem>>, %arg12: memref<1x32x2048xbf16, #tpu.memory_space<vmem>>, %arg13: memref<1x1x2048xf32, #tpu.memory_space<vmem>>, %arg14: memref<1x2048x32xbf16, #tpu.memory_space<vmem>>, %arg15: memref<1x1x32xf32, #tpu.memory_space<vmem>>, %arg16: memref<1x32xf32, #tpu.memory_space<vmem>>, %arg17: memref<1x32xf32, #tpu.memory_space<vmem>>, %arg18: memref<1x8x32xf32, #tpu.memory_space<vmem>>) attributes {dimension_semantics = [#tpu.dimension_semantics<parallel>, #tpu.dimension_semantics<arbitrary>], iteration_bounds = array<i64: 2, 2>, scalar_prefetch = 0 : i64, scratch_operands = 0 : i64, tpu.core_type = #tpu.core_type<tc>, window_params = [{transform_indices = @transform_0, window_bounds = array<i64: 1, 8, 32>}, {transform_indices = @transform_1, window_bounds = array<i64: 1, 1, 8>}, {transform_indices = @transform_2, window_bounds = array<i64: 1, 1, 32>}, {transform_indices = @transform_3, window_bounds = array<i64: 1, 1, 32>}, {transform_indices = @transform_4, window_bounds = array<i64: 1, 32, 96>}, {transform_indices = @transform_5, window_bounds = array<i64: 1, 1, 96>}, {transform_indices = @transform_6, window_bounds = array<i64: 1, 32, 32>}, {transform_indices = @transform_7, window_bounds = array<i64: 1, 1, 32>}, {transform_indices = @transform_8, window_bounds = array<i64: 1, 1, 32>}, {transform_indices = @transform_9, window_bounds = array<i64: 1, 1, 32>}, {transform_indices = @transform_10, window_bounds = array<i64: 1, 32, 2048>}, {transform_indices = @transform_11, window_bounds = array<i64: 1, 1, 2048>}, {transform_indices = @transform_12, window_bounds = array<i64: 1, 2048, 32>}, {transform_indices = @transform_13, window_bounds = array<i64: 1, 1, 32>}, {pipeline_mode = #tpu.pipeline_mode<synchronous>, transform_indices = @transform_14, window_bounds = array<i64: 1, 32>}, {pipeline_mode = #tpu.pipeline_mode<synchronous>, transform_indices = @transform_15, window_bounds = array<i64: 1, 32>}, {transform_indices = @transform_16, window_bounds = array<i64: 1, 8, 32>}]} {
    %c0_i32 = arith.constant 0 : i32
    %0 = arith.cmpi eq, %arg1, %c0_i32 : i32
    %1 = arith.extui %0 : i1 to i32
    %c0_i32_0 = arith.constant 0 : i32
    %2 = arith.cmpi ne, %1, %c0_i32_0 : i32
    scf.if %2 {
      %c0_107 = arith.constant 0 : index
      %c0_108 = arith.constant 0 : index
      %c0_109 = arith.constant 0 : index
      %219 = vector.load %arg2[%c0_107, %c0_108, %c0_109] : memref<1x8x32xf32, #tpu.memory_space<vmem>>, vector<1x8x32xf32>
      %c0_110 = arith.constant 0 : index
      %c0_111 = arith.constant 0 : index
      %c0_112 = arith.constant 0 : index
      %220 = vector.load %arg18[%c0_110, %c0_111, %c0_112] : memref<1x8x32xf32, #tpu.memory_space<vmem>>, vector<1x8x32xf32>
      tpu.vector_store %arg18[%c0_110, %c0_111, %c0_112], %219 {strides = array<i32>} : memref<1x8x32xf32, #tpu.memory_space<vmem>>, vector<1x8x32xf32>,
    } else {
    }
    %c0 = arith.constant 0 : index
    %c0_1 = arith.constant 0 : index
    %c0_2 = arith.constant 0 : index
    %3 = vector.load %arg18[%c0, %c0_1, %c0_2] : memref<1x8x32xf32, #tpu.memory_space<vmem>>, vector<1x8x32xf32>
    %4 = vector.shape_cast %3 : vector<1x8x32xf32> to vector<8x32xf32>
    %c0_3 = arith.constant 0 : index
    %c0_4 = arith.constant 0 : index
    %c0_5 = arith.constant 0 : index
    %5 = vector.load %arg3[%c0_3, %c0_4, %c0_5] : memref<1x1x8xi32, #tpu.memory_space<vmem>>, vector<1x1x8xi32>
    %c0_i32_6 = arith.constant 0 : i32
    %6 = vector.broadcast %c0_i32_6 : i32 to vector<1x1x8xi32>
    %7 = arith.cmpi eq, %5, %6 : vector<1x1x8xi32>
    %cst = arith.constant -1.000000e+09 : f32
    %cst_7 = arith.constant 0.000000e+00 : f32
    %8 = vector.broadcast %cst : f32 to vector<1x1x8xf32>
    %9 = vector.broadcast %cst_7 : f32 to vector<1x1x8xf32>
    %10 = arith.select %7, %8, %9 : vector<1x1x8xi1>, vector<1x1x8xf32>
    %c0_8 = arith.constant 0 : index
    %c0_9 = arith.constant 0 : index
    %c0_10 = arith.constant 0 : index
    %11 = vector.load %arg4[%c0_8, %c0_9, %c0_10] : memref<1x1x32xf32, #tpu.memory_space<vmem>>, vector<1x1x32xf32>
    %12 = vector.shape_cast %11 : vector<1x1x32xf32> to vector<1x32xf32>
    %c0_11 = arith.constant 0 : index
    %c0_12 = arith.constant 0 : index
    %c0_13 = arith.constant 0 : index
    %13 = vector.load %arg5[%c0_11, %c0_12, %c0_13] : memref<1x1x32xf32, #tpu.memory_space<vmem>>, vector<1x1x32xf32>
    %14 = vector.shape_cast %13 : vector<1x1x32xf32> to vector<1x32xf32>
    %cst_14 = arith.constant dense<0.000000e+00> : vector<8xf32>
    %15 = vector.multi_reduction <add>, %4, %cst_14 [1] : vector<8x32xf32> to vector<8xf32>
    %16 = vector.shape_cast %15 : vector<8xf32> to vector<8x1xf32>
    %cst_15 = arith.constant 3.200000e+01 : f32
    %17 = vector.broadcast %cst_15 : f32 to vector<8x1xf32>
    %18 = arith.divf %16, %17 : vector<8x1xf32>
    %19 = vector.broadcast %18 : vector<8x1xf32> to vector<8x32xf32>
    %20 = arith.subf %4, %19 : vector<8x32xf32>
    %21 = arith.mulf %20, %20 : vector<8x32xf32>
    %cst_16 = arith.constant dense<0.000000e+00> : vector<8xf32>
    %22 = vector.multi_reduction <add>, %21, %cst_16 [1] : vector<8x32xf32> to vector<8xf32>
    %23 = vector.shape_cast %22 : vector<8xf32> to vector<8x1xf32>
    %cst_17 = arith.constant 0.0322580636 : f32
    %24 = vector.broadcast %cst_17 : f32 to vector<8x1xf32>
    %25 = arith.mulf %23, %24 : vector<8x1xf32>
    %26 = math.sqrt %25 : vector<8x1xf32>
    %cst_18 = arith.constant 9.99999997E-7 : f32
    %27 = vector.broadcast %cst_18 : f32 to vector<8x1xf32>
    %28 = arith.addf %26, %27 : vector<8x1xf32>
    %cst_19 = arith.constant 1.000000e+00 : f32
    %29 = vector.broadcast %cst_19 : f32 to vector<8x1xf32>
    %30 = arith.divf %29, %28 : vector<8x1xf32>
    %31 = vector.broadcast %30 : vector<8x1xf32> to vector<8x32xf32>
    %32 = arith.mulf %20, %31 : vector<8x32xf32>
    %33 = vector.broadcast %12 : vector<1x32xf32> to vector<8x32xf32>
    %34 = arith.mulf %33, %32 : vector<8x32xf32>
    %35 = vector.broadcast %14 : vector<1x32xf32> to vector<8x32xf32>
    %36 = arith.addf %34, %35 : vector<8x32xf32>
    %37 = arith.truncf %36 : vector<8x32xf32> to vector<8x32xbf16>
    %c0_20 = arith.constant 0 : index
    %c0_21 = arith.constant 0 : index
    %c0_22 = arith.constant 0 : index
    %38 = vector.load %arg6[%c0_20, %c0_21, %c0_22] : memref<1x32x96xbf16, #tpu.memory_space<vmem>>, vector<1x32x96xbf16>
    %39 = vector.shape_cast %38 : vector<1x32x96xbf16> to vector<32x96xbf16>
    %cst_23 = arith.constant dense<0.000000e+00> : vector<8x96xf32>
    %40 = tpu.matmul %37, %39, %cst_23 {dimension_numbers = #tpu.dot_dimension_numbers<[1], [0], [0], [1], [0, 0, 1, 1], [], []>} : vector<8x32xbf16>, vector<32x96xbf16>, vector<8x96xf32> -> vector<8x96xf32>
    %c0_24 = arith.constant 0 : index
    %c0_25 = arith.constant 0 : index
    %c0_26 = arith.constant 0 : index
    %41 = vector.load %arg7[%c0_24, %c0_25, %c0_26] : memref<1x1x96xf32, #tpu.memory_space<vmem>>, vector<1x1x96xf32>
    %42 = vector.shape_cast %41 : vector<1x1x96xf32> to vector<1x96xf32>
    %43 = vector.broadcast %42 : vector<1x96xf32> to vector<8x96xf32>
    %44 = arith.addf %40, %43 : vector<8x96xf32>
    %45 = vector.shape_cast %44 : vector<8x96xf32> to vector<1x8x96xf32>
    %46 = vector.extract_strided_slice %45 {offsets = [0, 0, 0], sizes = [1, 8, 8], strides = [1, 1, 1]} : vector<1x8x96xf32> to vector<1x8x8xf32>
    %cst_27 = arith.constant 0.353553385 : f32
    %47 = vector.broadcast %cst_27 : f32 to vector<1x8x8xf32>
    %48 = arith.mulf %46, %47 : vector<1x8x8xf32>
    %49 = vector.shape_cast %48 : vector<1x8x8xf32> to vector<1x1x8x8xf32>
    %50 = vector.extract_strided_slice %45 {offsets = [0, 0, 8], sizes = [1, 8, 8], strides = [1, 1, 1]} : vector<1x8x96xf32> to vector<1x8x8xf32>
    %cst_28 = arith.constant 0.353553385 : f32
    %51 = vector.broadcast %cst_28 : f32 to vector<1x8x8xf32>
    %52 = arith.mulf %50, %51 : vector<1x8x8xf32>
    %53 = vector.shape_cast %52 : vector<1x8x8xf32> to vector<1x1x8x8xf32>
    %54 = vector.extract_strided_slice %45 {offsets = [0, 0, 16], sizes = [1, 8, 8], strides = [1, 1, 1]} : vector<1x8x96xf32> to vector<1x8x8xf32>
    %cst_29 = arith.constant 0.353553385 : f32
    %55 = vector.broadcast %cst_29 : f32 to vector<1x8x8xf32>
    %56 = arith.mulf %54, %55 : vector<1x8x8xf32>
    %57 = vector.shape_cast %56 : vector<1x8x8xf32> to vector<1x1x8x8xf32>
    %58 = vector.extract_strided_slice %45 {offsets = [0, 0, 24], sizes = [1, 8, 8], strides = [1, 1, 1]} : vector<1x8x96xf32> to vector<1x8x8xf32>
    %cst_30 = arith.constant 0.353553385 : f32
    %59 = vector.broadcast %cst_30 : f32 to vector<1x8x8xf32>
    %60 = arith.mulf %58, %59 : vector<1x8x8xf32>
    %61 = vector.shape_cast %60 : vector<1x8x8xf32> to vector<1x1x8x8xf32>
    %62 = tpu.concatenate %49, %53, %57, %61 in 1 : vector<1x1x8x8xf32>, vector<1x1x8x8xf32>, vector<1x1x8x8xf32>, vector<1x1x8x8xf32> -> vector<1x4x8x8xf32>
    %63 = vector.shape_cast %62 : vector<1x4x8x8xf32> to vector<4x8x8xf32>
    %64 = arith.truncf %63 : vector<4x8x8xf32> to vector<4x8x8xbf16>
    %65 = vector.extract_strided_slice %45 {offsets = [0, 0, 32], sizes = [1, 8, 8], strides = [1, 1, 1]} : vector<1x8x96xf32> to vector<1x8x8xf32>
    %66 = vector.shape_cast %65 : vector<1x8x8xf32> to vector<1x1x8x8xf32>
    %67 = vector.extract_strided_slice %45 {offsets = [0, 0, 40], sizes = [1, 8, 8], strides = [1, 1, 1]} : vector<1x8x96xf32> to vector<1x8x8xf32>
    %68 = vector.shape_cast %67 : vector<1x8x8xf32> to vector<1x1x8x8xf32>
    %69 = vector.extract_strided_slice %45 {offsets = [0, 0, 48], sizes = [1, 8, 8], strides = [1, 1, 1]} : vector<1x8x96xf32> to vector<1x8x8xf32>
    %70 = vector.shape_cast %69 : vector<1x8x8xf32> to vector<1x1x8x8xf32>
    %71 = vector.extract_strided_slice %45 {offsets = [0, 0, 56], sizes = [1, 8, 8], strides = [1, 1, 1]} : vector<1x8x96xf32> to vector<1x8x8xf32>
    %72 = vector.shape_cast %71 : vector<1x8x8xf32> to vector<1x1x8x8xf32>
    %73 = tpu.concatenate %66, %68, %70, %72 in 1 : vector<1x1x8x8xf32>, vector<1x1x8x8xf32>, vector<1x1x8x8xf32>, vector<1x1x8x8xf32> -> vector<1x4x8x8xf32>
    %74 = vector.shape_cast %73 : vector<1x4x8x8xf32> to vector<4x8x8xf32>
    %75 = arith.truncf %74 : vector<4x8x8xf32> to vector<4x8x8xbf16>
    %76 = vector.extract_strided_slice %45 {offsets = [0, 0, 64], sizes = [1, 8, 8], strides = [1, 1, 1]} : vector<1x8x96xf32> to vector<1x8x8xf32>
    %77 = vector.shape_cast %76 : vector<1x8x8xf32> to vector<1x1x8x8xf32>
    %78 = vector.extract_strided_slice %45 {offsets = [0, 0, 72], sizes = [1, 8, 8], strides = [1, 1, 1]} : vector<1x8x96xf32> to vector<1x8x8xf32>
    %79 = vector.shape_cast %78 : vector<1x8x8xf32> to vector<1x1x8x8xf32>
    %80 = vector.extract_strided_slice %45 {offsets = [0, 0, 80], sizes = [1, 8, 8], strides = [1, 1, 1]} : vector<1x8x96xf32> to vector<1x8x8xf32>
    %81 = vector.shape_cast %80 : vector<1x8x8xf32> to vector<1x1x8x8xf32>
    %82 = vector.extract_strided_slice %45 {offsets = [0, 0, 88], sizes = [1, 8, 8], strides = [1, 1, 1]} : vector<1x8x96xf32> to vector<1x8x8xf32>
    %83 = vector.shape_cast %82 : vector<1x8x8xf32> to vector<1x1x8x8xf32>
    %84 = tpu.concatenate %77, %79, %81, %83 in 1 : vector<1x1x8x8xf32>, vector<1x1x8x8xf32>, vector<1x1x8x8xf32>, vector<1x1x8x8xf32> -> vector<1x4x8x8xf32>
    %85 = vector.shape_cast %84 : vector<1x4x8x8xf32> to vector<4x8x8xf32>
    %86 = arith.truncf %85 : vector<4x8x8xf32> to vector<4x8x8xbf16>
    "tpu.trace_start"() <{level = 10 : i32, message = "bqd,bkd->bqk"}> : () -> ()
    %cst_31 = arith.constant dense<0.000000e+00> : vector<4x8x8xf32>
    %87 = tpu.matmul %64, %75, %cst_31 {dimension_numbers = #tpu.dot_dimension_numbers<[2], [2], [1], [1], [0, 0, 0, 1, 1, 1], [0], [0]>} : vector<4x8x8xbf16>, vector<4x8x8xbf16>, vector<4x8x8xf32> -> vector<4x8x8xf32>
    "tpu.trace_stop"() : () -> ()
    %88 = vector.shape_cast %87 : vector<4x8x8xf32> to vector<1x4x8x8xf32>
    %89 = vector.shape_cast %10 : vector<1x1x8xf32> to vector<1x1x1x8xf32>
    %90 = vector.broadcast %89 : vector<1x1x1x8xf32> to vector<1x4x8x8xf32>
    %91 = arith.addf %88, %90 : vector<1x4x8x8xf32>
    %92 = vector.shape_cast %91 : vector<1x4x8x8xf32> to vector<4x8x8xf32>
    %cst_32 = arith.constant dense<0xFF800000> : vector<4x8xf32>
    %93 = vector.multi_reduction <maximumf>, %92, %cst_32 [2] : vector<4x8x8xf32> to vector<4x8xf32>
    %94 = vector.shape_cast %93 : vector<4x8xf32> to vector<4x8x1xf32>
    %95 = vector.broadcast %94 : vector<4x8x1xf32> to vector<4x8x8xf32>
    %96 = arith.subf %92, %95 : vector<4x8x8xf32>
    %97 = math.exp %96 : vector<4x8x8xf32>
    %cst_33 = arith.constant dense<0.000000e+00> : vector<4x8xf32>
    %98 = vector.multi_reduction <add>, %97, %cst_33 [2] : vector<4x8x8xf32> to vector<4x8xf32>
    %99 = vector.shape_cast %98 : vector<4x8xf32> to vector<4x8x1xf32>
    %100 = tpu.reciprocal %99 {approx = true} : vector<4x8x1xf32> -> vector<4x8x1xf32>
    %101 = vector.broadcast %100 : vector<4x8x1xf32> to vector<4x8x8xf32>
    %102 = arith.mulf %97, %101 : vector<4x8x8xf32>
    %103 = arith.truncf %102 : vector<4x8x8xf32> to vector<4x8x8xbf16>
    "tpu.trace_start"() <{level = 10 : i32, message = "bqk,bkd->bqd"}> : () -> ()
    %cst_34 = arith.constant dense<0.000000e+00> : vector<4x8x8xf32>
    %104 = tpu.matmul %103, %86, %cst_34 {dimension_numbers = #tpu.dot_dimension_numbers<[2], [1], [1], [2], [0, 0, 0, 1, 1, 2], [0], [0]>} : vector<4x8x8xbf16>, vector<4x8x8xbf16>, vector<4x8x8xf32> -> vector<4x8x8xf32>
    "tpu.trace_stop"() : () -> ()
    %105 = vector.shape_cast %104 : vector<4x8x8xf32> to vector<1x4x8x8xf32>
    %106 = vector.extract_strided_slice %105 {offsets = [0, 0, 0, 0], sizes = [1, 1, 8, 8], strides = [1, 1, 1, 1]} : vector<1x4x8x8xf32> to vector<1x1x8x8xf32>
    %107 = vector.shape_cast %106 : vector<1x1x8x8xf32> to vector<1x8x8xf32>
    %108 = vector.extract_strided_slice %105 {offsets = [0, 1, 0, 0], sizes = [1, 1, 8, 8], strides = [1, 1, 1, 1]} : vector<1x4x8x8xf32> to vector<1x1x8x8xf32>
    %109 = vector.shape_cast %108 : vector<1x1x8x8xf32> to vector<1x8x8xf32>
    %110 = vector.extract_strided_slice %105 {offsets = [0, 2, 0, 0], sizes = [1, 1, 8, 8], strides = [1, 1, 1, 1]} : vector<1x4x8x8xf32> to vector<1x1x8x8xf32>
    %111 = vector.shape_cast %110 : vector<1x1x8x8xf32> to vector<1x8x8xf32>
    %112 = vector.extract_strided_slice %105 {offsets = [0, 3, 0, 0], sizes = [1, 1, 8, 8], strides = [1, 1, 1, 1]} : vector<1x4x8x8xf32> to vector<1x1x8x8xf32>
    %113 = vector.shape_cast %112 : vector<1x1x8x8xf32> to vector<1x8x8xf32>
    %114 = tpu.concatenate %107, %109, %111, %113 in 2 : vector<1x8x8xf32>, vector<1x8x8xf32>, vector<1x8x8xf32>, vector<1x8x8xf32> -> vector<1x8x32xf32>
    %115 = vector.shape_cast %114 : vector<1x8x32xf32> to vector<8x32xf32>
    %116 = arith.truncf %115 : vector<8x32xf32> to vector<8x32xbf16>
    %c0_35 = arith.constant 0 : index
    %c0_36 = arith.constant 0 : index
    %c0_37 = arith.constant 0 : index
    %117 = vector.load %arg8[%c0_35, %c0_36, %c0_37] : memref<1x32x32xbf16, #tpu.memory_space<vmem>>, vector<1x32x32xbf16>
    %118 = vector.shape_cast %117 : vector<1x32x32xbf16> to vector<32x32xbf16>
    %cst_38 = arith.constant dense<0.000000e+00> : vector<8x32xf32>
    %119 = tpu.matmul %116, %118, %cst_38 {dimension_numbers = #tpu.dot_dimension_numbers<[1], [0], [0], [1], [0, 0, 1, 1], [], []>} : vector<8x32xbf16>, vector<32x32xbf16>, vector<8x32xf32> -> vector<8x32xf32>
    %c0_39 = arith.constant 0 : index
    %c0_40 = arith.constant 0 : index
    %c0_41 = arith.constant 0 : index
    %120 = vector.load %arg9[%c0_39, %c0_40, %c0_41] : memref<1x1x32xf32, #tpu.memory_space<vmem>>, vector<1x1x32xf32>
    %121 = vector.shape_cast %120 : vector<1x1x32xf32> to vector<1x32xf32>
    %122 = vector.broadcast %121 : vector<1x32xf32> to vector<8x32xf32>
    %123 = arith.addf %119, %122 : vector<8x32xf32>
    %124 = arith.addf %4, %123 : vector<8x32xf32>
    %c0_42 = arith.constant 0 : index
    %c0_43 = arith.constant 0 : index
    %c0_44 = arith.constant 0 : index
    %125 = vector.load %arg10[%c0_42, %c0_43, %c0_44] : memref<1x1x32xf32, #tpu.memory_space<vmem>>, vector<1x1x32xf32>
    %126 = vector.shape_cast %125 : vector<1x1x32xf32> to vector<1x32xf32>
    %c0_45 = arith.constant 0 : index
    %c0_46 = arith.constant 0 : index
    %c0_47 = arith.constant 0 : index
    %127 = vector.load %arg11[%c0_45, %c0_46, %c0_47] : memref<1x1x32xf32, #tpu.memory_space<vmem>>, vector<1x1x32xf32>
    %128 = vector.shape_cast %127 : vector<1x1x32xf32> to vector<1x32xf32>
    %cst_48 = arith.constant dense<0.000000e+00> : vector<8xf32>
    %129 = vector.multi_reduction <add>, %124, %cst_48 [1] : vector<8x32xf32> to vector<8xf32>
    %130 = vector.shape_cast %129 : vector<8xf32> to vector<8x1xf32>
    %cst_49 = arith.constant 3.200000e+01 : f32
    %131 = vector.broadcast %cst_49 : f32 to vector<8x1xf32>
    %132 = arith.divf %130, %131 : vector<8x1xf32>
    %133 = vector.broadcast %132 : vector<8x1xf32> to vector<8x32xf32>
    %134 = arith.subf %124, %133 : vector<8x32xf32>
    %135 = arith.mulf %134, %134 : vector<8x32xf32>
    %cst_50 = arith.constant dense<0.000000e+00> : vector<8xf32>
    %136 = vector.multi_reduction <add>, %135, %cst_50 [1] : vector<8x32xf32> to vector<8xf32>
    %137 = vector.shape_cast %136 : vector<8xf32> to vector<8x1xf32>
    %cst_51 = arith.constant 0.0322580636 : f32
    %138 = vector.broadcast %cst_51 : f32 to vector<8x1xf32>
    %139 = arith.mulf %137, %138 : vector<8x1xf32>
    %140 = math.sqrt %139 : vector<8x1xf32>
    %cst_52 = arith.constant 9.99999997E-7 : f32
    %141 = vector.broadcast %cst_52 : f32 to vector<8x1xf32>
    %142 = arith.addf %140, %141 : vector<8x1xf32>
    %cst_53 = arith.constant 1.000000e+00 : f32
    %143 = vector.broadcast %cst_53 : f32 to vector<8x1xf32>
    %144 = arith.divf %143, %142 : vector<8x1xf32>
    %145 = vector.broadcast %144 : vector<8x1xf32> to vector<8x32xf32>
    %146 = arith.mulf %134, %145 : vector<8x32xf32>
    %147 = vector.broadcast %126 : vector<1x32xf32> to vector<8x32xf32>
    %148 = arith.mulf %147, %146 : vector<8x32xf32>
    %149 = vector.broadcast %128 : vector<1x32xf32> to vector<8x32xf32>
    %150 = arith.addf %148, %149 : vector<8x32xf32>
    %151 = arith.truncf %150 : vector<8x32xf32> to vector<8x32xbf16>
    %cst_54 = arith.constant 0.000000e+00 : f32
    %152 = vector.broadcast %cst_54 : f32 to vector<8x32xf32>
    %c0_55 = arith.constant 0 : index
    %c0_56 = arith.constant 0 : index
    %c0_57 = arith.constant 0 : index
    %153 = vector.load %arg12[%c0_55, %c0_56, %c0_57] : memref<1x32x2048xbf16, #tpu.memory_space<vmem>>, vector<1x32x512xbf16>
    %154 = vector.shape_cast %153 : vector<1x32x512xbf16> to vector<32x512xbf16>
    %cst_58 = arith.constant dense<0.000000e+00> : vector<8x512xf32>
    %155 = tpu.matmul %151, %154, %cst_58 {dimension_numbers = #tpu.dot_dimension_numbers<[1], [0], [0], [1], [0, 0, 1, 1], [], []>} : vector<8x32xbf16>, vector<32x512xbf16>, vector<8x512xf32> -> vector<8x512xf32>
    %c0_59 = arith.constant 0 : index
    %c0_60 = arith.constant 0 : index
    %c0_61 = arith.constant 0 : index
    %156 = vector.load %arg13[%c0_59, %c0_60, %c0_61] : memref<1x1x2048xf32, #tpu.memory_space<vmem>>, vector<1x1x512xf32>
    %157 = vector.shape_cast %156 : vector<1x1x512xf32> to vector<1x512xf32>
    %158 = vector.broadcast %157 : vector<1x512xf32> to vector<8x512xf32>
    %159 = arith.addf %155, %158 : vector<8x512xf32>
    %cst_62 = arith.constant 0.000000e+00 : f32
    %160 = vector.broadcast %cst_62 : f32 to vector<8x512xf32>
    %161 = arith.maximumf %159, %160 : vector<8x512xf32>
    %162 = arith.truncf %161 : vector<8x512xf32> to vector<8x512xbf16>
    %c0_63 = arith.constant 0 : index
    %c0_64 = arith.constant 0 : index
    %c0_65 = arith.constant 0 : index
    %163 = vector.load %arg14[%c0_63, %c0_64, %c0_65] : memref<1x2048x32xbf16, #tpu.memory_space<vmem>>, vector<1x512x32xbf16>
    %164 = vector.shape_cast %163 : vector<1x512x32xbf16> to vector<512x32xbf16>
    %cst_66 = arith.constant dense<0.000000e+00> : vector<8x32xf32>
    %165 = tpu.matmul %162, %164, %cst_66 {dimension_numbers = #tpu.dot_dimension_numbers<[1], [0], [0], [1], [0, 0, 1, 1], [], []>} : vector<8x512xbf16>, vector<512x32xbf16>, vector<8x32xf32> -> vector<8x32xf32>
    %166 = arith.addf %152, %165 : vector<8x32xf32>
    %c0_67 = arith.constant 0 : index
    %c0_68 = arith.constant 0 : index
    %c512 = arith.constant 512 : index
    %167 = vector.load %arg12[%c0_67, %c0_68, %c512] : memref<1x32x2048xbf16, #tpu.memory_space<vmem>>, vector<1x32x512xbf16>
    %168 = vector.shape_cast %167 : vector<1x32x512xbf16> to vector<32x512xbf16>
    %cst_69 = arith.constant dense<0.000000e+00> : vector<8x512xf32>
    %169 = tpu.matmul %151, %168, %cst_69 {dimension_numbers = #tpu.dot_dimension_numbers<[1], [0], [0], [1], [0, 0, 1, 1], [], []>} : vector<8x32xbf16>, vector<32x512xbf16>, vector<8x512xf32> -> vector<8x512xf32>
    %c0_70 = arith.constant 0 : index
    %c0_71 = arith.constant 0 : index
    %c512_72 = arith.constant 512 : index
    %170 = vector.load %arg13[%c0_70, %c0_71, %c512_72] : memref<1x1x2048xf32, #tpu.memory_space<vmem>>, vector<1x1x512xf32>
    %171 = vector.shape_cast %170 : vector<1x1x512xf32> to vector<1x512xf32>
    %172 = vector.broadcast %171 : vector<1x512xf32> to vector<8x512xf32>
    %173 = arith.addf %169, %172 : vector<8x512xf32>
    %cst_73 = arith.constant 0.000000e+00 : f32
    %174 = vector.broadcast %cst_73 : f32 to vector<8x512xf32>
    %175 = arith.maximumf %173, %174 : vector<8x512xf32>
    %176 = arith.truncf %175 : vector<8x512xf32> to vector<8x512xbf16>
    %c0_74 = arith.constant 0 : index
    %c512_75 = arith.constant 512 : index
    %c0_76 = arith.constant 0 : index
    %177 = vector.load %arg14[%c0_74, %c512_75, %c0_76] : memref<1x2048x32xbf16, #tpu.memory_space<vmem>>, vector<1x512x32xbf16>
    %178 = vector.shape_cast %177 : vector<1x512x32xbf16> to vector<512x32xbf16>
    %cst_77 = arith.constant dense<0.000000e+00> : vector<8x32xf32>
    %179 = tpu.matmul %176, %178, %cst_77 {dimension_numbers = #tpu.dot_dimension_numbers<[1], [0], [0], [1], [0, 0, 1, 1], [], []>} : vector<8x512xbf16>, vector<512x32xbf16>, vector<8x32xf32> -> vector<8x32xf32>
    %180 = arith.addf %166, %179 : vector<8x32xf32>
    %c0_78 = arith.constant 0 : index
    %c0_79 = arith.constant 0 : index
    %c1024 = arith.constant 1024 : index
    %181 = vector.load %arg12[%c0_78, %c0_79, %c1024] : memref<1x32x2048xbf16, #tpu.memory_space<vmem>>, vector<1x32x512xbf16>
    %182 = vector.shape_cast %181 : vector<1x32x512xbf16> to vector<32x512xbf16>
    %cst_80 = arith.constant dense<0.000000e+00> : vector<8x512xf32>
    %183 = tpu.matmul %151, %182, %cst_80 {dimension_numbers = #tpu.dot_dimension_numbers<[1], [0], [0], [1], [0, 0, 1, 1], [], []>} : vector<8x32xbf16>, vector<32x512xbf16>, vector<8x512xf32> -> vector<8x512xf32>
    %c0_81 = arith.constant 0 : index
    %c0_82 = arith.constant 0 : index
    %c1024_83 = arith.constant 1024 : index
    %184 = vector.load %arg13[%c0_81, %c0_82, %c1024_83] : memref<1x1x2048xf32, #tpu.memory_space<vmem>>, vector<1x1x512xf32>
    %185 = vector.shape_cast %184 : vector<1x1x512xf32> to vector<1x512xf32>
    %186 = vector.broadcast %185 : vector<1x512xf32> to vector<8x512xf32>
    %187 = arith.addf %183, %186 : vector<8x512xf32>
    %cst_84 = arith.constant 0.000000e+00 : f32
    %188 = vector.broadcast %cst_84 : f32 to vector<8x512xf32>
    %189 = arith.maximumf %187, %188 : vector<8x512xf32>
    %190 = arith.truncf %189 : vector<8x512xf32> to vector<8x512xbf16>
    %c0_85 = arith.constant 0 : index
    %c1024_86 = arith.constant 1024 : index
    %c0_87 = arith.constant 0 : index
    %191 = vector.load %arg14[%c0_85, %c1024_86, %c0_87] : memref<1x2048x32xbf16, #tpu.memory_space<vmem>>, vector<1x512x32xbf16>
    %192 = vector.shape_cast %191 : vector<1x512x32xbf16> to vector<512x32xbf16>
    %cst_88 = arith.constant dense<0.000000e+00> : vector<8x32xf32>
    %193 = tpu.matmul %190, %192, %cst_88 {dimension_numbers = #tpu.dot_dimension_numbers<[1], [0], [0], [1], [0, 0, 1, 1], [], []>} : vector<8x512xbf16>, vector<512x32xbf16>, vector<8x32xf32> -> vector<8x32xf32>
    %194 = arith.addf %180, %193 : vector<8x32xf32>
    %c0_89 = arith.constant 0 : index
    %c0_90 = arith.constant 0 : index
    %c1536 = arith.constant 1536 : index
    %195 = vector.load %arg12[%c0_89, %c0_90, %c1536] : memref<1x32x2048xbf16, #tpu.memory_space<vmem>>, vector<1x32x512xbf16>
    %196 = vector.shape_cast %195 : vector<1x32x512xbf16> to vector<32x512xbf16>
    %cst_91 = arith.constant dense<0.000000e+00> : vector<8x512xf32>
    %197 = tpu.matmul %151, %196, %cst_91 {dimension_numbers = #tpu.dot_dimension_numbers<[1], [0], [0], [1], [0, 0, 1, 1], [], []>} : vector<8x32xbf16>, vector<32x512xbf16>, vector<8x512xf32> -> vector<8x512xf32>
    %c0_92 = arith.constant 0 : index
    %c0_93 = arith.constant 0 : index
    %c1536_94 = arith.constant 1536 : index
    %198 = vector.load %arg13[%c0_92, %c0_93, %c1536_94] : memref<1x1x2048xf32, #tpu.memory_space<vmem>>, vector<1x1x512xf32>
    %199 = vector.shape_cast %198 : vector<1x1x512xf32> to vector<1x512xf32>
    %200 = vector.broadcast %199 : vector<1x512xf32> to vector<8x512xf32>
    %201 = arith.addf %197, %200 : vector<8x512xf32>
    %cst_95 = arith.constant 0.000000e+00 : f32
    %202 = vector.broadcast %cst_95 : f32 to vector<8x512xf32>
    %203 = arith.maximumf %201, %202 : vector<8x512xf32>
    %204 = arith.truncf %203 : vector<8x512xf32> to vector<8x512xbf16>
    %c0_96 = arith.constant 0 : index
    %c1536_97 = arith.constant 1536 : index
    %c0_98 = arith.constant 0 : index
    %205 = vector.load %arg14[%c0_96, %c1536_97, %c0_98] : memref<1x2048x32xbf16, #tpu.memory_space<vmem>>, vector<1x512x32xbf16>
    %206 = vector.shape_cast %205 : vector<1x512x32xbf16> to vector<512x32xbf16>
    %cst_99 = arith.constant dense<0.000000e+00> : vector<8x32xf32>
    %207 = tpu.matmul %204, %206, %cst_99 {dimension_numbers = #tpu.dot_dimension_numbers<[1], [0], [0], [1], [0, 0, 1, 1], [], []>} : vector<8x512xbf16>, vector<512x32xbf16>, vector<8x32xf32> -> vector<8x32xf32>
    %208 = arith.addf %194, %207 : vector<8x32xf32>
    %209 = arith.addf %124, %208 : vector<8x32xf32>
    %c0_100 = arith.constant 0 : index
    %c0_101 = arith.constant 0 : index
    %c0_102 = arith.constant 0 : index
    %210 = vector.load %arg15[%c0_100, %c0_101, %c0_102] : memref<1x1x32xf32, #tpu.memory_space<vmem>>, vector<1x1x32xf32>
    %211 = vector.shape_cast %210 : vector<1x1x32xf32> to vector<1x32xf32>
    %212 = vector.broadcast %211 : vector<1x32xf32> to vector<8x32xf32>
    %213 = arith.addf %209, %212 : vector<8x32xf32>
    %214 = vector.shape_cast %213 : vector<8x32xf32> to vector<1x8x32xf32>
    %c0_103 = arith.constant 0 : index
    %c0_104 = arith.constant 0 : index
    %c0_105 = arith.constant 0 : index
    %215 = vector.load %arg18[%c0_103, %c0_104, %c0_105] : memref<1x8x32xf32, #tpu.memory_space<vmem>>, vector<1x8x32xf32>
    tpu.vector_store %arg18[%c0_103, %c0_104, %c0_105], %214 {strides = array<i32>} : memref<1x8x32xf32, #tpu.memory_space<vmem>>, vector<1x8x32xf32>,
    %c1_i32 = arith.constant 1 : i32
    %216 = arith.cmpi eq, %arg1, %c1_i32 : i32
    %217 = arith.extui %216 : i1 to i32
    %c0_i32_106 = arith.constant 0 : i32
    %218 = arith.cmpi ne, %217, %c0_i32_106 : i32
    scf.if %218 {
      %c0_107 = arith.constant 0 : index
      %c0_108 = arith.constant 0 : index
      %219 = vector.load %arg16[%c0_107, %c0_108] : memref<1x32xf32, #tpu.memory_space<vmem>>, vector<1x32xf32>
      %c0_109 = arith.constant 0 : index
      %c0_110 = arith.constant 0 : index
      %220 = vector.load %arg17[%c0_109, %c0_110] : memref<1x32xf32, #tpu.memory_space<vmem>>, vector<1x32xf32>
      %cst_111 = arith.constant dense<0.000000e+00> : vector<8xf32>
      %221 = vector.multi_reduction <add>, %213, %cst_111 [1] : vector<8x32xf32> to vector<8xf32>
      %222 = vector.shape_cast %221 : vector<8xf32> to vector<8x1xf32>
      %cst_112 = arith.constant 3.200000e+01 : f32
      %223 = vector.broadcast %cst_112 : f32 to vector<8x1xf32>
      %224 = arith.divf %222, %223 : vector<8x1xf32>
      %225 = vector.broadcast %224 : vector<8x1xf32> to vector<8x32xf32>
      %226 = arith.subf %213, %225 : vector<8x32xf32>
      %227 = arith.mulf %226, %226 : vector<8x32xf32>
      %cst_113 = arith.constant dense<0.000000e+00> : vector<8xf32>
      %228 = vector.multi_reduction <add>, %227, %cst_113 [1] : vector<8x32xf32> to vector<8xf32>
      %229 = vector.shape_cast %228 : vector<8xf32> to vector<8x1xf32>
      %cst_114 = arith.constant 0.0322580636 : f32
      %230 = vector.broadcast %cst_114 : f32 to vector<8x1xf32>
      %231 = arith.mulf %229, %230 : vector<8x1xf32>
      %232 = math.sqrt %231 : vector<8x1xf32>
      %cst_115 = arith.constant 9.99999997E-7 : f32
      %233 = vector.broadcast %cst_115 : f32 to vector<8x1xf32>
      %234 = arith.addf %232, %233 : vector<8x1xf32>
      %cst_116 = arith.constant 1.000000e+00 : f32
      %235 = vector.broadcast %cst_116 : f32 to vector<8x1xf32>
      %236 = arith.divf %235, %234 : vector<8x1xf32>
      %237 = vector.broadcast %236 : vector<8x1xf32> to vector<8x32xf32>
      %238 = arith.mulf %226, %237 : vector<8x32xf32>
      %239 = vector.broadcast %219 : vector<1x32xf32> to vector<8x32xf32>
      %240 = arith.mulf %239, %238 : vector<8x32xf32>
      %241 = vector.broadcast %220 : vector<1x32xf32> to vector<8x32xf32>
      %242 = arith.addf %240, %241 : vector<8x32xf32>
      %243 = vector.shape_cast %242 : vector<8x32xf32> to vector<1x8x32xf32>
      %c0_117 = arith.constant 0 : index
      %c0_118 = arith.constant 0 : index
      %c0_119 = arith.constant 0 : index
      %244 = vector.load %arg18[%c0_117, %c0_118, %c0_119] : memref<1x8x32xf32, #tpu.memory_space<vmem>>, vector<1x8x32xf32>
      tpu.vector_store %arg18[%c0_117, %c0_118, %c0_119], %243 {strides = array<i32>} : memref<1x8x32xf32, #tpu.memory_space<vmem>>, vector<1x8x32xf32>,
    } else {
    }
    return
  }
  func.func @transform_0(%arg0: i32, %arg1: i32) -> (i32, i32, i32) {
    %c0_i32 = arith.constant 0 : i32
    %c0_i32_0 = arith.constant 0 : i32
    %c0_i32_1 = arith.constant 0 : i32
    return %arg0, %c0_i32, %c0_i32_0 : i32, i32, i32
  }
  func.func @transform_1(%arg0: i32, %arg1: i32) -> (i32, i32, i32) {
    %c0_i32 = arith.constant 0 : i32
    %c0_i32_0 = arith.constant 0 : i32
    %c0_i32_1 = arith.constant 0 : i32
    return %arg0, %c0_i32, %c0_i32_0 : i32, i32, i32
  }
  func.func @transform_2(%arg0: i32, %arg1: i32) -> (i32, i32, i32) {
    %c0_i32 = arith.constant 0 : i32
    %c0_i32_0 = arith.constant 0 : i32
    %c0_i32_1 = arith.constant 0 : i32
    return %arg1, %c0_i32, %c0_i32_0 : i32, i32, i32
  }
  func.func @transform_3(%arg0: i32, %arg1: i32) -> (i32, i32, i32) {
    %c0_i32 = arith.constant 0 : i32
    %c0_i32_0 = arith.constant 0 : i32
    %c0_i32_1 = arith.constant 0 : i32
    return %arg1, %c0_i32, %c0_i32_0 : i32, i32, i32
  }
  func.func @transform_4(%arg0: i32, %arg1: i32) -> (i32, i32, i32) {
    %c0_i32 = arith.constant 0 : i32
    %c0_i32_0 = arith.constant 0 : i32
    %c0_i32_1 = arith.constant 0 : i32
    return %arg1, %c0_i32, %c0_i32_0 : i32, i32, i32
  }
  func.func @transform_5(%arg0: i32, %arg1: i32) -> (i32, i32, i32) {
    %c0_i32 = arith.constant 0 : i32
    %c0_i32_0 = arith.constant 0 : i32
    %c0_i32_1 = arith.constant 0 : i32
    return %arg1, %c0_i32, %c0_i32_0 : i32, i32, i32
  }
  func.func @transform_6(%arg0: i32, %arg1: i32) -> (i32, i32, i32) {
    %c0_i32 = arith.constant 0 : i32
    %c0_i32_0 = arith.constant 0 : i32
    %c0_i32_1 = arith.constant 0 : i32
    return %arg1, %c0_i32, %c0_i32_0 : i32, i32, i32
  }
  func.func @transform_7(%arg0: i32, %arg1: i32) -> (i32, i32, i32) {
    %c0_i32 = arith.constant 0 : i32
    %c0_i32_0 = arith.constant 0 : i32
    %c0_i32_1 = arith.constant 0 : i32
    return %arg1, %c0_i32, %c0_i32_0 : i32, i32, i32
  }
  func.func @transform_8(%arg0: i32, %arg1: i32) -> (i32, i32, i32) {
    %c0_i32 = arith.constant 0 : i32
    %c0_i32_0 = arith.constant 0 : i32
    %c0_i32_1 = arith.constant 0 : i32
    return %arg1, %c0_i32, %c0_i32_0 : i32, i32, i32
  }
  func.func @transform_9(%arg0: i32, %arg1: i32) -> (i32, i32, i32) {
    %c0_i32 = arith.constant 0 : i32
    %c0_i32_0 = arith.constant 0 : i32
    %c0_i32_1 = arith.constant 0 : i32
    return %arg1, %c0_i32, %c0_i32_0 : i32, i32, i32
  }
  func.func @transform_10(%arg0: i32, %arg1: i32) -> (i32, i32, i32) {
    %c0_i32 = arith.constant 0 : i32
    %c0_i32_0 = arith.constant 0 : i32
    %c0_i32_1 = arith.constant 0 : i32
    return %arg1, %c0_i32, %c0_i32_0 : i32, i32, i32
  }
  func.func @transform_11(%arg0: i32, %arg1: i32) -> (i32, i32, i32) {
    %c0_i32 = arith.constant 0 : i32
    %c0_i32_0 = arith.constant 0 : i32
    %c0_i32_1 = arith.constant 0 : i32
    return %arg1, %c0_i32, %c0_i32_0 : i32, i32, i32
  }
  func.func @transform_12(%arg0: i32, %arg1: i32) -> (i32, i32, i32) {
    %c0_i32 = arith.constant 0 : i32
    %c0_i32_0 = arith.constant 0 : i32
    %c0_i32_1 = arith.constant 0 : i32
    return %arg1, %c0_i32, %c0_i32_0 : i32, i32, i32
  }
  func.func @transform_13(%arg0: i32, %arg1: i32) -> (i32, i32, i32) {
    %c0_i32 = arith.constant 0 : i32
    %c0_i32_0 = arith.constant 0 : i32
    %c0_i32_1 = arith.constant 0 : i32
    return %arg1, %c0_i32, %c0_i32_0 : i32, i32, i32
  }
  func.func @transform_14(%arg0: i32, %arg1: i32) -> (i32, i32) {
    %c0_i32 = arith.constant 0 : i32
    %c0_i32_0 = arith.constant 0 : i32
    %c0_i32_1 = arith.constant 0 : i32
    return %c0_i32, %c0_i32_0 : i32, i32
  }
  func.func @transform_15(%arg0: i32, %arg1: i32) -> (i32, i32) {
    %c0_i32 = arith.constant 0 : i32
    %c0_i32_0 = arith.constant 0 : i32
    %c0_i32_1 = arith.constant 0 : i32
    return %c0_i32, %c0_i32_0 : i32, i32
  }
  func.func @transform_16(%arg0: i32, %arg1: i32) -> (i32, i32, i32) {
    %c0_i32 = arith.constant 0 : i32
    %c0_i32_0 = arith.constant 0 : i32
    %c0_i32_1 = arith.constant 0 : i32
    return %arg0, %c0_i32, %c0_i32_0 : i32, i32, i32
  }
}

</mosaic_0001>

<llo_original>
// kernel: tpu_custom_call.1
$region0: #{tpu_custom_call.1}
  #allocation0 [shape = 'u32[]', space=smem, size = 0x4, offset = 0x4, fixed_abs, tag = 'smem constant byte address 0x4 - core index']
  #allocation1 [shape = 'u32[72,128]{1,0:T(1,128)}', space=vmem, size = 0x9000, scoped, tag = 'internal scratch']
  %s0 = inlined_call_operand.vmem [shape: f32[2,8,32], index: 0, kind: input, shape index: {}]
  %s1 = inlined_call_operand.vmem [shape: s32[2,1,8], index: 1, kind: input, shape index: {}]
  %s2 = inlined_call_operand.vmem [shape: f32[2,1,32], index: 2, kind: input, shape index: {}]
  %s3 = inlined_call_operand.vmem [shape: f32[2,1,32], index: 3, kind: input, shape index: {}]
  %s4 = inlined_call_operand.vmem [shape: bf16[2,32,96], index: 4, kind: input, shape index: {}]
  %s5 = inlined_call_operand.vmem [shape: f32[2,1,96], index: 5, kind: input, shape index: {}]
  %s6 = inlined_call_operand.vmem [shape: bf16[2,32,32], index: 6, kind: input, shape index: {}]
  %s7 = inlined_call_operand.vmem [shape: f32[2,1,32], index: 7, kind: input, shape index: {}]
  %s8 = inlined_call_operand.vmem [shape: f32[2,1,32], index: 8, kind: input, shape index: {}]
  %s9 = inlined_call_operand.vmem [shape: f32[2,1,32], index: 9, kind: input, shape index: {}]
  %s10 = inlined_call_operand.vmem [shape: bf16[2,32,2048], index: 10, kind: input, shape index: {}]
  %s11 = inlined_call_operand.vmem [shape: f32[2,1,2048], index: 11, kind: input, shape index: {}]
  %s12 = inlined_call_operand.vmem [shape: bf16[2,2048,32], index: 12, kind: input, shape index: {}]
  %s13 = inlined_call_operand.vmem [shape: f32[2,1,32], index: 13, kind: input, shape index: {}]
  %s14 = inlined_call_operand.vmem [shape: f32[1,32], index: 14, kind: input, shape index: {}]
  %s15 = inlined_call_operand.vmem [shape: f32[1,32], index: 15, kind: input, shape index: {}]
  %s16 = inlined_call_operand.hbm [shape: f32[2,8,32], index: 16, kind: output, shape index: {}]
  %s17 = sld [smem:[#allocation0]]
  $region105: #{tpu_custom_call.1} parent=0
    _
  %s19 = ssub.s32 1, %s17
  %s20 = scalar_select 0, %s19, %s17
  $region1: #{tpu_custom_call.1} parent=0
    #allocation2 [shape = 'u8[8192]{0}', space=vmem, size = 0x2000, scoped, tag = 'output window, operand 0']
    #allocation3 [shape = 's32[2]{0}', space=sflag, size = 0x8, scoped, tag = 'scoped memory for tpu_custom_call.1']
    %21 = vsyncpa [#allocation3], 0
    %s22 = scalar_lea.sflag [#allocation3], 1
    %23 = vsyncpa %s22, 0
    loop: start=0, step=1, limit=6
    $region2: #{tpu_custom_call.1} parent=1 // loop_pre_header
      _
    $region3: #{tpu_custom_call.1} parent=1 // loop_header
      %s25 = sphi 0, %s29
      %p26 = scmp.ge.s32.totalorder %s25, 6
      %s32 = sphi 0, %s44
      %s33 = sphi 0, %s40
      %s34 = sphi 0, %s32
      %s35 = sphi 0, %s33
      %s36 = sphi 0, %s34
      %s37 = sphi 0, %s35
      %s47 = sphi 0, %s49
      %s50 = sphi 0, %s47
      %s51 = sphi 0, %s50
      %s67 = sphi 0, %s51
      %s73 = sphi 0, %s75
      %s76 = sphi 0, %s73
      %s77 = sphi 0, %s76
      %s93 = sphi 0, %s77
      %s99 = sphi 0, %s101
      %s102 = sphi 0, %s99
      %s103 = sphi 0, %s102
      %s119 = sphi 0, %s103
      %s125 = sphi 0, %s127
      %s128 = sphi 0, %s125
      %s129 = sphi 0, %s128
      %s145 = sphi 0, %s129
      %s151 = sphi 0, %s153
      %s154 = sphi 0, %s151
      %s155 = sphi 0, %s154
      %s171 = sphi 0, %s155
      %s177 = sphi 0, %s179
      %s180 = sphi 0, %s177
      %s181 = sphi 0, %s180
      %s197 = sphi 0, %s181
      %s203 = sphi 0, %s205
      %s206 = sphi 0, %s203
      %s207 = sphi 0, %s206
      %s223 = sphi 0, %s207
      %s229 = sphi 0, %s231
      %s232 = sphi 0, %s229
      %s233 = sphi 0, %s232
      %s249 = sphi 0, %s233
      %s255 = sphi 0, %s257
      %s258 = sphi 0, %s255
      %s259 = sphi 0, %s258
      %s275 = sphi 0, %s259
      %s281 = sphi 0, %s283
      %s284 = sphi 0, %s281
      %s285 = sphi 0, %s284
      %s301 = sphi 0, %s285
      %s307 = sphi 0, %s309
      %s310 = sphi 0, %s307
      %s311 = sphi 0, %s310
      %s327 = sphi 0, %s311
      %s333 = sphi 0, %s335
      %s336 = sphi 0, %s333
      %s337 = sphi 0, %s336
      %s353 = sphi 0, %s337
      %s359 = sphi 0, %s361
      %s362 = sphi 0, %s359
      %s363 = sphi 0, %s362
      %s379 = sphi 0, %s363
      %s385 = sphi 0, %s387
      %s388 = sphi 0, %s385
      %s389 = sphi 0, %s388
      %s405 = sphi 0, %s389
      %s409 = sphi 0, %s409
      %s411 = sphi 0, %s409
      %s412 = sphi 0, %s411
      %s426 = sphi 0, %s412
      %s430 = sphi 0, %s430
      %s432 = sphi 0, %s430
      %s433 = sphi 0, %s432
      %s447 = sphi 0, %s433
      %s453 = sphi 0, %s455
      %s456 = sphi 0, %s453
      %s457 = sphi 0, %s456
      %s473 = sphi 0, %s457
    $region4: #{tpu_custom_call.1} parent=1 // loop_header_branch
      %28 = sbr.rel (%p26) target = $region8
    $region5: #{tpu_custom_call.1} parent=1 // loop_body
      %s30 = ssub.s32 %s25, 1
      %s31 = ssub.s32 %s25, 2
      %s38 = sadd.s32 1, %s33
      %p39 = scmp.ge.s32.totalorder %s38, 2
      %s40 = scalar_select %p39, 0, %s38
      %s41 = sadd.s32 1, %s32
      %s42 = scalar_select %p39, %s41, %s32
      %p43 = scmp.ge.s32.totalorder %s42, 2
      %s44 = scalar_select %p43, 0, %s42
      %s45 = ssub.s32 %s32, %s44
      %p46 = scmp.eq.s32.totalorder %s45, 0
      %s48 = sadd.s32 %s47, 1
      %s49 = scalar_select %p46, %s47, %s48
      %p52 = pneg %p46
      %p53 = scmp.eq.s32.totalorder %s25, 3
      %p54 = por %p52, %p53
      %p55 = scmp.ne.s32.totalorder %s47, %s50
      %p56 = scmp.eq.s32.totalorder %s25, 0
      %p57 = por %p55, %p56
      %p58 = scmp.ne.s32.totalorder %s47, %s50
      %p59 = scmp.eq.s32.totalorder %s30, 3
      %p60 = por %p58, %p59
      %p61 = scmp.ne.s32.totalorder %s50, %s51
      %p62 = scmp.eq.s32.totalorder %s30, 0
      %p63 = por %p61, %p62
      %p64 = scmp.ne.s32.totalorder %s50, %s51
      %p65 = scmp.eq.s32.totalorder %s31, 3
      %p66 = por %p64, %p65
      %p68 = scmp.ne.s32.totalorder %s51, %s67
      %p69 = scmp.eq.s32.totalorder %s31, 0
      %p70 = por %p68, %p69
      %s71 = ssub.s32 %s32, %s44
      %p72 = scmp.eq.s32.totalorder %s71, 0
      %s74 = sadd.s32 %s73, 1
      %s75 = scalar_select %p72, %s73, %s74
      %p78 = pneg %p72
      %p79 = scmp.eq.s32.totalorder %s25, 3
      %p80 = por %p78, %p79
      %p81 = scmp.ne.s32.totalorder %s73, %s76
      %p82 = scmp.eq.s32.totalorder %s25, 0
      %p83 = por %p81, %p82
      %p84 = scmp.ne.s32.totalorder %s73, %s76
      %p85 = scmp.eq.s32.totalorder %s30, 3
      %p86 = por %p84, %p85
      %p87 = scmp.ne.s32.totalorder %s76, %s77
      %p88 = scmp.eq.s32.totalorder %s30, 0
      %p89 = por %p87, %p88
      %p90 = scmp.ne.s32.totalorder %s76, %s77
      %p91 = scmp.eq.s32.totalorder %s31, 3
      %p92 = por %p90, %p91
      %p94 = scmp.ne.s32.totalorder %s77, %s93
      %p95 = scmp.eq.s32.totalorder %s31, 0
      %p96 = por %p94, %p95
      %s97 = ssub.s32 %s33, %s40
      %p98 = scmp.eq.s32.totalorder %s97, 0
      %s100 = sadd.s32 %s99, 1
      %s101 = scalar_select %p98, %s99, %s100
      %p104 = pneg %p98
      %p105 = scmp.eq.s32.totalorder %s25, 3
      %p106 = por %p104, %p105
      %p107 = scmp.ne.s32.totalorder %s99, %s102
      %p108 = scmp.eq.s32.totalorder %s25, 0
      %p109 = por %p107, %p108
      %p110 = scmp.ne.s32.totalorder %s99, %s102
      %p111 = scmp.eq.s32.totalorder %s30, 3
      %p112 = por %p110, %p111
      %p113 = scmp.ne.s32.totalorder %s102, %s103
      %p114 = scmp.eq.s32.totalorder %s30, 0
      %p115 = por %p113, %p114
      %p116 = scmp.ne.s32.totalorder %s102, %s103
      %p117 = scmp.eq.s32.totalorder %s31, 3
      %p118 = por %p116, %p117
      %p120 = scmp.ne.s32.totalorder %s103, %s119
      %p121 = scmp.eq.s32.totalorder %s31, 0
      %p122 = por %p120, %p121
      %s123 = ssub.s32 %s33, %s40
      %p124 = scmp.eq.s32.totalorder %s123, 0
      %s126 = sadd.s32 %s125, 1
      %s127 = scalar_select %p124, %s125, %s126
      %p130 = pneg %p124
      %p131 = scmp.eq.s32.totalorder %s25, 3
      %p132 = por %p130, %p131
      %p133 = scmp.ne.s32.totalorder %s125, %s128
      %p134 = scmp.eq.s32.totalorder %s25, 0
      %p135 = por %p133, %p134
      %p136 = scmp.ne.s32.totalorder %s125, %s128
      %p137 = scmp.eq.s32.totalorder %s30, 3
      %p138 = por %p136, %p137
      %p139 = scmp.ne.s32.totalorder %s128, %s129
      %p140 = scmp.eq.s32.totalorder %s30, 0
      %p141 = por %p139, %p140
      %p142 = scmp.ne.s32.totalorder %s128, %s129
      %p143 = scmp.eq.s32.totalorder %s31, 3
      %p144 = por %p142, %p143
      %p146 = scmp.ne.s32.totalorder %s129, %s145
      %p147 = scmp.eq.s32.totalorder %s31, 0
      %p148 = por %p146, %p147
      %s149 = ssub.s32 %s33, %s40
      %p150 = scmp.eq.s32.totalorder %s149, 0
      %s152 = sadd.s32 %s151, 1
      %s153 = scalar_select %p150, %s151, %s152
      %p156 = pneg %p150
      %p157 = scmp.eq.s32.totalorder %s25, 3
      %p158 = por %p156, %p157
      %p159 = scmp.ne.s32.totalorder %s151, %s154
      %p160 = scmp.eq.s32.totalorder %s25, 0
      %p161 = por %p159, %p160
      %p162 = scmp.ne.s32.totalorder %s151, %s154
      %p163 = scmp.eq.s32.totalorder %s30, 3
      %p164 = por %p162, %p163
      %p165 = scmp.ne.s32.totalorder %s154, %s155
      %p166 = scmp.eq.s32.totalorder %s30, 0
      %p167 = por %p165, %p166
      %p168 = scmp.ne.s32.totalorder %s154, %s155
      %p169 = scmp.eq.s32.totalorder %s31, 3
      %p170 = por %p168, %p169
      %p172 = scmp.ne.s32.totalorder %s155, %s171
      %p173 = scmp.eq.s32.totalorder %s31, 0
      %p174 = por %p172, %p173
      %s175 = ssub.s32 %s33, %s40
      %p176 = scmp.eq.s32.totalorder %s175, 0
      %s178 = sadd.s32 %s177, 1
      %s179 = scalar_select %p176, %s177, %s178
      %p182 = pneg %p176
      %p183 = scmp.eq.s32.totalorder %s25, 3
      %p184 = por %p182, %p183
      %p185 = scmp.ne.s32.totalorder %s177, %s180
      %p186 = scmp.eq.s32.totalorder %s25, 0
      %p187 = por %p185, %p186
      %p188 = scmp.ne.s32.totalorder %s177, %s180
      %p189 = scmp.eq.s32.totalorder %s30, 3
      %p190 = por %p188, %p189
      %p191 = scmp.ne.s32.totalorder %s180, %s181
      %p192 = scmp.eq.s32.totalorder %s30, 0
      %p193 = por %p191, %p192
      %p194 = scmp.ne.s32.totalorder %s180, %s181
      %p195 = scmp.eq.s32.totalorder %s31, 3
      %p196 = por %p194, %p195
      %p198 = scmp.ne.s32.totalorder %s181, %s197
      %p199 = scmp.eq.s32.totalorder %s31, 0
      %p200 = por %p198, %p199
      %s201 = ssub.s32 %s33, %s40
      %p202 = scmp.eq.s32.totalorder %s201, 0
      %s204 = sadd.s32 %s203, 1
      %s205 = scalar_select %p202, %s203, %s204
      %p208 = pneg %p202
      %p209 = scmp.eq.s32.totalorder %s25, 3
      %p210 = por %p208, %p209
      %p211 = scmp.ne.s32.totalorder %s203, %s206
      %p212 = scmp.eq.s32.totalorder %s25, 0
      %p213 = por %p211, %p212
      %p214 = scmp.ne.s32.totalorder %s203, %s206
      %p215 = scmp.eq.s32.totalorder %s30, 3
      %p216 = por %p214, %p215
      %p217 = scmp.ne.s32.totalorder %s206, %s207
      %p218 = scmp.eq.s32.totalorder %s30, 0
      %p219 = por %p217, %p218
      %p220 = scmp.ne.s32.totalorder %s206, %s207
      %p221 = scmp.eq.s32.totalorder %s31, 3
      %p222 = por %p220, %p221
      %p224 = scmp.ne.s32.totalorder %s207, %s223
      %p225 = scmp.eq.s32.totalorder %s31, 0
      %p226 = por %p224, %p225
      %s227 = ssub.s32 %s33, %s40
      %p228 = scmp.eq.s32.totalorder %s227, 0
      %s230 = sadd.s32 %s229, 1
      %s231 = scalar_select %p228, %s229, %s230
      %p234 = pneg %p228
      %p235 = scmp.eq.s32.totalorder %s25, 3
      %p236 = por %p234, %p235
      %p237 = scmp.ne.s32.totalorder %s229, %s232
      %p238 = scmp.eq.s32.totalorder %s25, 0
      %p239 = por %p237, %p238
      %p240 = scmp.ne.s32.totalorder %s229, %s232
      %p241 = scmp.eq.s32.totalorder %s30, 3
      %p242 = por %p240, %p241
      %p243 = scmp.ne.s32.totalorder %s232, %s233
      %p244 = scmp.eq.s32.totalorder %s30, 0
      %p245 = por %p243, %p244
      %p246 = scmp.ne.s32.totalorder %s232, %s233
      %p247 = scmp.eq.s32.totalorder %s31, 3
      %p248 = por %p246, %p247
      %p250 = scmp.ne.s32.totalorder %s233, %s249
      %p251 = scmp.eq.s32.totalorder %s31, 0
      %p252 = por %p250, %p251
      %s253 = ssub.s32 %s33, %s40
      %p254 = scmp.eq.s32.totalorder %s253, 0
      %s256 = sadd.s32 %s255, 1
      %s257 = scalar_select %p254, %s255, %s256
      %p260 = pneg %p254
      %p261 = scmp.eq.s32.totalorder %s25, 3
      %p262 = por %p260, %p261
      %p263 = scmp.ne.s32.totalorder %s255, %s258
      %p264 = scmp.eq.s32.totalorder %s25, 0
      %p265 = por %p263, %p264
      %p266 = scmp.ne.s32.totalorder %s255, %s258
      %p267 = scmp.eq.s32.totalorder %s30, 3
      %p268 = por %p266, %p267
      %p269 = scmp.ne.s32.totalorder %s258, %s259
      %p270 = scmp.eq.s32.totalorder %s30, 0
      %p271 = por %p269, %p270
      %p272 = scmp.ne.s32.totalorder %s258, %s259
      %p273 = scmp.eq.s32.totalorder %s31, 3
      %p274 = por %p272, %p273
      %p276 = scmp.ne.s32.totalorder %s259, %s275
      %p277 = scmp.eq.s32.totalorder %s31, 0
      %p278 = por %p276, %p277
      %s279 = ssub.s32 %s33, %s40
      %p280 = scmp.eq.s32.totalorder %s279, 0
      %s282 = sadd.s32 %s281, 1
      %s283 = scalar_select %p280, %s281, %s282
      %p286 = pneg %p280
      %p287 = scmp.eq.s32.totalorder %s25, 3
      %p288 = por %p286, %p287
      %p289 = scmp.ne.s32.totalorder %s281, %s284
      %p290 = scmp.eq.s32.totalorder %s25, 0
      %p291 = por %p289, %p290
      %p292 = scmp.ne.s32.totalorder %s281, %s284
      %p293 = scmp.eq.s32.totalorder %s30, 3
      %p294 = por %p292, %p293
      %p295 = scmp.ne.s32.totalorder %s284, %s285
      %p296 = scmp.eq.s32.totalorder %s30, 0
      %p297 = por %p295, %p296
      %p298 = scmp.ne.s32.totalorder %s284, %s285
      %p299 = scmp.eq.s32.totalorder %s31, 3
      %p300 = por %p298, %p299
      %p302 = scmp.ne.s32.totalorder %s285, %s301
      %p303 = scmp.eq.s32.totalorder %s31, 0
      %p304 = por %p302, %p303
      %s305 = ssub.s32 %s33, %s40
      %p306 = scmp.eq.s32.totalorder %s305, 0
      %s308 = sadd.s32 %s307, 1
      %s309 = scalar_select %p306, %s307, %s308
      %p312 = pneg %p306
      %p313 = scmp.eq.s32.totalorder %s25, 3
      %p314 = por %p312, %p313
      %p315 = scmp.ne.s32.totalorder %s307, %s310
      %p316 = scmp.eq.s32.totalorder %s25, 0
      %p317 = por %p315, %p316
      %p318 = scmp.ne.s32.totalorder %s307, %s310
      %p319 = scmp.eq.s32.totalorder %s30, 3
      %p320 = por %p318, %p319
      %p321 = scmp.ne.s32.totalorder %s310, %s311
      %p322 = scmp.eq.s32.totalorder %s30, 0
      %p323 = por %p321, %p322
      %p324 = scmp.ne.s32.totalorder %s310, %s311
      %p325 = scmp.eq.s32.totalorder %s31, 3
      %p326 = por %p324, %p325
      %p328 = scmp.ne.s32.totalorder %s311, %s327
      %p329 = scmp.eq.s32.totalorder %s31, 0
      %p330 = por %p328, %p329
      %s331 = ssub.s32 %s33, %s40
      %p332 = scmp.eq.s32.totalorder %s331, 0
      %s334 = sadd.s32 %s333, 1
      %s335 = scalar_select %p332, %s333, %s334
      %p338 = pneg %p332
      %p339 = scmp.eq.s32.totalorder %s25, 3
      %p340 = por %p338, %p339
      %p341 = scmp.ne.s32.totalorder %s333, %s336
      %p342 = scmp.eq.s32.totalorder %s25, 0
      %p343 = por %p341, %p342
      %p344 = scmp.ne.s32.totalorder %s333, %s336
      %p345 = scmp.eq.s32.totalorder %s30, 3
      %p346 = por %p344, %p345
      %p347 = scmp.ne.s32.totalorder %s336, %s337
      %p348 = scmp.eq.s32.totalorder %s30, 0
      %p349 = por %p347, %p348
      %p350 = scmp.ne.s32.totalorder %s336, %s337
      %p351 = scmp.eq.s32.totalorder %s31, 3
      %p352 = por %p350, %p351
      %p354 = scmp.ne.s32.totalorder %s337, %s353
      %p355 = scmp.eq.s32.totalorder %s31, 0
      %p356 = por %p354, %p355
      %s357 = ssub.s32 %s33, %s40
      %p358 = scmp.eq.s32.totalorder %s357, 0
      %s360 = sadd.s32 %s359, 1
      %s361 = scalar_select %p358, %s359, %s360
      %p364 = pneg %p358
      %p365 = scmp.eq.s32.totalorder %s25, 3
      %p366 = por %p364, %p365
      %p367 = scmp.ne.s32.totalorder %s359, %s362
      %p368 = scmp.eq.s32.totalorder %s25, 0
      %p369 = por %p367, %p368
      %p370 = scmp.ne.s32.totalorder %s359, %s362
      %p371 = scmp.eq.s32.totalorder %s30, 3
      %p372 = por %p370, %p371
      %p373 = scmp.ne.s32.totalorder %s362, %s363
      %p374 = scmp.eq.s32.totalorder %s30, 0
      %p375 = por %p373, %p374
      %p376 = scmp.ne.s32.totalorder %s362, %s363
      %p377 = scmp.eq.s32.totalorder %s31, 3
      %p378 = por %p376, %p377
      %p380 = scmp.ne.s32.totalorder %s363, %s379
      %p381 = scmp.eq.s32.totalorder %s31, 0
      %p382 = por %p380, %p381
      %s383 = ssub.s32 %s33, %s40
      %p384 = scmp.eq.s32.totalorder %s383, 0
      %s386 = sadd.s32 %s385, 1
      %s387 = scalar_select %p384, %s385, %s386
      %p390 = pneg %p384
      %p391 = scmp.eq.s32.totalorder %s25, 3
      %p392 = por %p390, %p391
      %p393 = scmp.ne.s32.totalorder %s385, %s388
      %p394 = scmp.eq.s32.totalorder %s25, 0
      %p395 = por %p393, %p394
      %p396 = scmp.ne.s32.totalorder %s385, %s388
      %p397 = scmp.eq.s32.totalorder %s30, 3
      %p398 = por %p396, %p397
      %p399 = scmp.ne.s32.totalorder %s388, %s389
      %p400 = scmp.eq.s32.totalorder %s30, 0
      %p401 = por %p399, %p400
      %p402 = scmp.ne.s32.totalorder %s388, %s389
      %p403 = scmp.eq.s32.totalorder %s31, 3
      %p404 = por %p402, %p403
      %p406 = scmp.ne.s32.totalorder %s389, %s405
      %p407 = scmp.eq.s32.totalorder %s31, 0
      %p408 = por %p406, %p407
      %s410 = sadd.s32 %s409, 1
      %p413 = scmp.eq.s32.totalorder %s25, 3
      %p414 = scmp.ne.s32.totalorder %s409, %s411
      %p415 = scmp.eq.s32.totalorder %s25, 0
      %p416 = por %p414, %p415
      %p417 = scmp.ne.s32.totalorder %s409, %s411
      %p418 = scmp.eq.s32.totalorder %s30, 3
      %p419 = por %p417, %p418
      %p420 = scmp.ne.s32.totalorder %s411, %s412
      %p421 = scmp.eq.s32.totalorder %s30, 0
      %p422 = por %p420, %p421
      %p423 = scmp.ne.s32.totalorder %s411, %s412
      %p424 = scmp.eq.s32.totalorder %s31, 3
      %p425 = por %p423, %p424
      %p427 = scmp.ne.s32.totalorder %s412, %s426
      %p428 = scmp.eq.s32.totalorder %s31, 0
      %p429 = por %p427, %p428
      %s431 = sadd.s32 %s430, 1
      %p434 = scmp.eq.s32.totalorder %s25, 3
      %p435 = scmp.ne.s32.totalorder %s430, %s432
      %p436 = scmp.eq.s32.totalorder %s25, 0
      %p437 = por %p435, %p436
      %p438 = scmp.ne.s32.totalorder %s430, %s432
      %p439 = scmp.eq.s32.totalorder %s30, 3
      %p440 = por %p438, %p439
      %p441 = scmp.ne.s32.totalorder %s432, %s433
      %p442 = scmp.eq.s32.totalorder %s30, 0
      %p443 = por %p441, %p442
      %p444 = scmp.ne.s32.totalorder %s432, %s433
      %p445 = scmp.eq.s32.totalorder %s31, 3
      %p446 = por %p444, %p445
      %p448 = scmp.ne.s32.totalorder %s433, %s447
      %p449 = scmp.eq.s32.totalorder %s31, 0
      %p450 = por %p448, %p449
      %s451 = ssub.s32 %s32, %s44
      %p452 = scmp.eq.s32.totalorder %s451, 0
      %s454 = sadd.s32 %s453, 1
      %s455 = scalar_select %p452, %s453, %s454
      %p458 = pneg %p452
      %p459 = scmp.eq.s32.totalorder %s25, 3
      %p460 = por %p458, %p459
      %p461 = scmp.ne.s32.totalorder %s453, %s456
      %p462 = scmp.eq.s32.totalorder %s25, 0
      %p463 = por %p461, %p462
      %p464 = scmp.ne.s32.totalorder %s453, %s456
      %p465 = scmp.eq.s32.totalorder %s30, 3
      %p466 = por %p464, %p465
      %p467 = scmp.ne.s32.totalorder %s456, %s457
      %p468 = scmp.eq.s32.totalorder %s30, 0
      %p469 = por %p467, %p468
      %p470 = scmp.ne.s32.totalorder %s456, %s457
      %p471 = scmp.eq.s32.totalorder %s31, 3
      %p472 = por %p470, %p471
      %p474 = scmp.ne.s32.totalorder %s457, %s473
      %p475 = scmp.eq.s32.totalorder %s31, 0
      %p476 = por %p474, %p475
      %p477 = scmp.le.s32.totalorder 1, %s25
      %p478 = scmp.lt.s32.totalorder %s25, 5
      %p479 = pnand %p477, %p478
      %p480 = pneg %p479
      // Predicated region
      $region9: #{tpu_custom_call.1} parent=5 // pred_check
        _
      $region10: #{tpu_custom_call.1} parent=5 // pred_check_branch
        %482 = sbr.rel (%p479) target = $region12
      $region11: #{tpu_custom_call.1} parent=5 // pred_region
        %s483 = ssub.s32 %s25, 1
        // Predicated region
        $region13: #{tpu_custom_call.1} parent=11 // pred_check
          %p484 = pneg %p422
        $region14: #{tpu_custom_call.1} parent=11 // pred_check_branch
          %486 = sbr.rel (%p484) target = $region16
        $region15: #{tpu_custom_call.1} parent=11 // pred_region
          _
        $region16: #{tpu_custom_call.1} parent=11 // pred_fallthru
          _
        // Predicated region
        $region17: #{tpu_custom_call.1} parent=11 // pred_check
          %p487 = pneg %p443
        $region18: #{tpu_custom_call.1} parent=11 // pred_check_branch
          %489 = sbr.rel (%p487) target = $region20
        $region19: #{tpu_custom_call.1} parent=11 // pred_region
          _
        $region20: #{tpu_custom_call.1} parent=11 // pred_fallthru
          _
      $region12: #{tpu_custom_call.1} parent=5 // pred_fallthru
        _
      %p490 = scmp.lt.s32.totalorder %s25, 4
      // Predicated region
      $region21: #{tpu_custom_call.1} parent=5 // pred_check
        %p491 = pneg %p490
      $region22: #{tpu_custom_call.1} parent=5 // pred_check_branch
        %493 = sbr.rel (%p491) target = $region24
      $region23: #{tpu_custom_call.1} parent=5 // pred_region
        // Predicated region
        $region25: #{tpu_custom_call.1} parent=23 // pred_check
          %p494 = pneg %p57
        $region26: #{tpu_custom_call.1} parent=23 // pred_check_branch
          %496 = sbr.rel (%p494) target = $region28
        $region27: #{tpu_custom_call.1} parent=23 // pred_region
          %p497 = scmp.lt.s32.totalorder %s32, 1
          %s498 = scalar_select %p497, %s32, 1
          %s499 = smul.addr %s498, 8
          %s500 = scalar_lea.vmem %s0, %s499
        $region28: #{tpu_custom_call.1} parent=23 // pred_fallthru
          _
        // Predicated region
        $region29: #{tpu_custom_call.1} parent=23 // pred_check
          %p501 = pneg %p83
        $region30: #{tpu_custom_call.1} parent=23 // pred_check_branch
          %503 = sbr.rel (%p501) target = $region32
        $region31: #{tpu_custom_call.1} parent=23 // pred_region
          %p504 = scmp.lt.s32.totalorder %s32, 1
          %s505 = scalar_select %p504, %s32, 1
          %s506 = scalar_lea.vmem %s1, %s505
        $region32: #{tpu_custom_call.1} parent=23 // pred_fallthru
          _
        // Predicated region
        $region33: #{tpu_custom_call.1} parent=23 // pred_check
          %p507 = pneg %p109
        $region34: #{tpu_custom_call.1} parent=23 // pred_check_branch
          %509 = sbr.rel (%p507) target = $region36
        $region35: #{tpu_custom_call.1} parent=23 // pred_region
          %p510 = scmp.lt.s32.totalorder %s33, 1
          %s511 = scalar_select %p510, %s33, 1
          %s512 = scalar_lea.vmem %s2, %s511
        $region36: #{tpu_custom_call.1} parent=23 // pred_fallthru
          _
        // Predicated region
        $region37: #{tpu_custom_call.1} parent=23 // pred_check
          %p513 = pneg %p135
        $region38: #{tpu_custom_call.1} parent=23 // pred_check_branch
          %515 = sbr.rel (%p513) target = $region40
        $region39: #{tpu_custom_call.1} parent=23 // pred_region
          %p516 = scmp.lt.s32.totalorder %s33, 1
          %s517 = scalar_select %p516, %s33, 1
          %s518 = scalar_lea.vmem %s3, %s517
        $region40: #{tpu_custom_call.1} parent=23 // pred_fallthru
          _
        // Predicated region
        $region41: #{tpu_custom_call.1} parent=23 // pred_check
          %p519 = pneg %p161
        $region42: #{tpu_custom_call.1} parent=23 // pred_check_branch
          %521 = sbr.rel (%p519) target = $region44
        $region43: #{tpu_custom_call.1} parent=23 // pred_region
          %p522 = scmp.lt.s32.totalorder %s33, 1
          %s523 = scalar_select %p522, %s33, 1
          %s524 = smul.addr %s523, 4
          %s525 = smul.addr %s524, 4
          %s526 = scalar_lea.vmem %s4, %s525
        $region44: #{tpu_custom_call.1} parent=23 // pred_fallthru
          _
        // Predicated region
        $region45: #{tpu_custom_call.1} parent=23 // pred_check
          %p527 = pneg %p187
        $region46: #{tpu_custom_call.1} parent=23 // pred_check_branch
          %529 = sbr.rel (%p527) target = $region48
        $region47: #{tpu_custom_call.1} parent=23 // pred_region
          %p530 = scmp.lt.s32.totalorder %s33, 1
          %s531 = scalar_select %p530, %s33, 1
          %s532 = scalar_lea.vmem %s5, %s531
        $region48: #{tpu_custom_call.1} parent=23 // pred_fallthru
          _
        // Predicated region
        $region49: #{tpu_custom_call.1} parent=23 // pred_check
          %p533 = pneg %p213
        $region50: #{tpu_custom_call.1} parent=23 // pred_check_branch
          %535 = sbr.rel (%p533) target = $region52
        $region51: #{tpu_custom_call.1} parent=23 // pred_region
          %p536 = scmp.lt.s32.totalorder %s33, 1
          %s537 = scalar_select %p536, %s33, 1
          %s538 = smul.addr %s537, 4
          %s539 = smul.addr %s538, 4
          %s540 = scalar_lea.vmem %s6, %s539
        $region52: #{tpu_custom_call.1} parent=23 // pred_fallthru
          _
        // Predicated region
        $region53: #{tpu_custom_call.1} parent=23 // pred_check
          %p541 = pneg %p239
        $region54: #{tpu_custom_call.1} parent=23 // pred_check_branch
          %543 = sbr.rel (%p541) target = $region56
        $region55: #{tpu_custom_call.1} parent=23 // pred_region
          %p544 = scmp.lt.s32.totalorder %s33, 1
          %s545 = scalar_select %p544, %s33, 1
          %s546 = scalar_lea.vmem %s7, %s545
        $region56: #{tpu_custom_call.1} parent=23 // pred_fallthru
          _
        // Predicated region
        $region57: #{tpu_custom_call.1} parent=23 // pred_check
          %p547 = pneg %p265
        $region58: #{tpu_custom_call.1} parent=23 // pred_check_branch
          %549 = sbr.rel (%p547) target = $region60
        $region59: #{tpu_custom_call.1} parent=23 // pred_region
          %p550 = scmp.lt.s32.totalorder %s33, 1
          %s551 = scalar_select %p550, %s33, 1
          %s552 = scalar_lea.vmem %s8, %s551
        $region60: #{tpu_custom_call.1} parent=23 // pred_fallthru
          _
        // Predicated region
        $region61: #{tpu_custom_call.1} parent=23 // pred_check
          %p553 = pneg %p291
        $region62: #{tpu_custom_call.1} parent=23 // pred_check_branch
          %555 = sbr.rel (%p553) target = $region64
        $region63: #{tpu_custom_call.1} parent=23 // pred_region
          %p556 = scmp.lt.s32.totalorder %s33, 1
          %s557 = scalar_select %p556, %s33, 1
          %s558 = scalar_lea.vmem %s9, %s557
        $region64: #{tpu_custom_call.1} parent=23 // pred_fallthru
          _
        // Predicated region
        $region65: #{tpu_custom_call.1} parent=23 // pred_check
          %p559 = pneg %p317
        $region66: #{tpu_custom_call.1} parent=23 // pred_check_branch
          %561 = sbr.rel (%p559) target = $region68
        $region67: #{tpu_custom_call.1} parent=23 // pred_region
          %p562 = scmp.lt.s32.totalorder %s33, 1
          %s563 = scalar_select %p562, %s33, 1
          %s564 = smul.addr %s563, 64
          %s565 = smul.addr %s564, 4
          %s566 = scalar_lea.vmem %s10, %s565
        $region68: #{tpu_custom_call.1} parent=23 // pred_fallthru
          _
        // Predicated region
        $region69: #{tpu_custom_call.1} parent=23 // pred_check
          %p567 = pneg %p343
        $region70: #{tpu_custom_call.1} parent=23 // pred_check_branch
          %569 = sbr.rel (%p567) target = $region72
        $region71: #{tpu_custom_call.1} parent=23 // pred_region
          %p570 = scmp.lt.s32.totalorder %s33, 1
          %s571 = scalar_select %p570, %s33, 1
          %s572 = smul.addr %s571, 16
          %s573 = scalar_lea.vmem %s11, %s572
        $region72: #{tpu_custom_call.1} parent=23 // pred_fallthru
          _
        // Predicated region
        $region73: #{tpu_custom_call.1} parent=23 // pred_check
          %p574 = pneg %p369
        $region74: #{tpu_custom_call.1} parent=23 // pred_check_branch
          %576 = sbr.rel (%p574) target = $region76
        $region75: #{tpu_custom_call.1} parent=23 // pred_region
          %p577 = scmp.lt.s32.totalorder %s33, 1
          %s578 = scalar_select %p577, %s33, 1
          %s579 = smul.addr %s578, 256
          %s580 = smul.addr %s579, 4
          %s581 = scalar_lea.vmem %s12, %s580
        $region76: #{tpu_custom_call.1} parent=23 // pred_fallthru
          _
        // Predicated region
        $region77: #{tpu_custom_call.1} parent=23 // pred_check
          %p582 = pneg %p395
        $region78: #{tpu_custom_call.1} parent=23 // pred_check_branch
          %584 = sbr.rel (%p582) target = $region80
        $region79: #{tpu_custom_call.1} parent=23 // pred_region
          %p585 = scmp.lt.s32.totalorder %s33, 1
          %s586 = scalar_select %p585, %s33, 1
          %s587 = scalar_lea.vmem %s13, %s586
        $region80: #{tpu_custom_call.1} parent=23 // pred_fallthru
          _
      $region24: #{tpu_custom_call.1} parent=5 // pred_fallthru
        _
      %p588 = scmp.le.s32.totalorder 1, %s25
      %p589 = scmp.lt.s32.totalorder %s25, 5
      %p590 = pnand %p588, %p589
      %p591 = pneg %p590
      // Predicated region
      $region81: #{tpu_custom_call.1} parent=5 // pred_check
        _
      $region82: #{tpu_custom_call.1} parent=5 // pred_check_branch
        %593 = sbr.rel (%p590) target = $region84
      $region83: #{tpu_custom_call.1} parent=5 // pred_region
        %s594 = ssub.s32 %s25, 1
        %p595 = scmp.lt.s32.totalorder %s34, 1
        %s596 = scalar_select %p595, %s34, 1
        %s597 = smul.addr %s596, 8
        %s598 = scalar_lea.vmem %s0, %s597
        %p599 = pneg %p63
        %p600 = pneg %p60
        %p601 = scmp.lt.s32.totalorder %s34, 1
        %s602 = scalar_select %p601, %s34, 1
        %s603 = scalar_lea.vmem %s1, %s602
        %p604 = pneg %p89
        %p605 = pneg %p86
        %p606 = scmp.lt.s32.totalorder %s35, 1
        %s607 = scalar_select %p606, %s35, 1
        %s608 = scalar_lea.vmem %s2, %s607
        %p609 = pneg %p115
        %p610 = pneg %p112
        %p611 = scmp.lt.s32.totalorder %s35, 1
        %s612 = scalar_select %p611, %s35, 1
        %s613 = scalar_lea.vmem %s3, %s612
        %p614 = pneg %p141
        %p615 = pneg %p138
        %p616 = scmp.lt.s32.totalorder %s35, 1
        %s617 = scalar_select %p616, %s35, 1
        %s618 = smul.addr %s617, 4
        %s619 = smul.addr %s618, 4
        %s620 = scalar_lea.vmem %s4, %s619
        %p621 = pneg %p167
        %p622 = pneg %p164
        %p623 = scmp.lt.s32.totalorder %s35, 1
        %s624 = scalar_select %p623, %s35, 1
        %s625 = scalar_lea.vmem %s5, %s624
        %p626 = pneg %p193
        %p627 = pneg %p190
        %p628 = scmp.lt.s32.totalorder %s35, 1
        %s629 = scalar_select %p628, %s35, 1
        %s630 = smul.addr %s629, 4
        %s631 = smul.addr %s630, 4
        %s632 = scalar_lea.vmem %s6, %s631
        %p633 = pneg %p219
        %p634 = pneg %p216
        %p635 = scmp.lt.s32.totalorder %s35, 1
        %s636 = scalar_select %p635, %s35, 1
        %s637 = scalar_lea.vmem %s7, %s636
        %p638 = pneg %p245
        %p639 = pneg %p242
        %p640 = scmp.lt.s32.totalorder %s35, 1
        %s641 = scalar_select %p640, %s35, 1
        %s642 = scalar_lea.vmem %s8, %s641
        %p643 = pneg %p271
        %p644 = pneg %p268
        %p645 = scmp.lt.s32.totalorder %s35, 1
        %s646 = scalar_select %p645, %s35, 1
        %s647 = scalar_lea.vmem %s9, %s646
        %p648 = pneg %p297
        %p649 = pneg %p294
        %p650 = scmp.lt.s32.totalorder %s35, 1
        %s651 = scalar_select %p650, %s35, 1
        %s652 = smul.addr %s651, 64
        %s653 = smul.addr %s652, 4
        %s654 = scalar_lea.vmem %s10, %s653
        %p655 = pneg %p323
        %p656 = pneg %p320
        %p657 = scmp.lt.s32.totalorder %s35, 1
        %s658 = scalar_select %p657, %s35, 1
        %s659 = smul.addr %s658, 16
        %s660 = scalar_lea.vmem %s11, %s659
        %p661 = pneg %p349
        %p662 = pneg %p346
        %p663 = scmp.lt.s32.totalorder %s35, 1
        %s664 = scalar_select %p663, %s35, 1
        %s665 = smul.addr %s664, 256
        %s666 = smul.addr %s665, 4
        %s667 = scalar_lea.vmem %s12, %s666
        %p668 = pneg %p375
        %p669 = pneg %p372
        %p670 = scmp.lt.s32.totalorder %s35, 1
        %s671 = scalar_select %p670, %s35, 1
        %s672 = scalar_lea.vmem %s13, %s671
        %p673 = pneg %p401
        %p674 = pneg %p398
        %p675 = pneg %p422
        %p676 = pneg %p419
        %p677 = pneg %p443
        %p678 = pneg %p440
        %p679 = pneg %p469
        %p680 = pneg %p466
        %s681 = sand.u32 %s456, 1
        %s682 = scalar_lea.sflag [#allocation3], %s681
        %s683 = sand.u32 %s456, 1
        %s684 = smul.addr %s683, 8
        %s685 = scalar_lea.vmem [#allocation2], %s684
        %p686 = scmp.lt.s32.totalorder %s34, 1
        %s687 = scalar_select %p686, %s34, 1
        %s688 = smul.addr %s687, 8
        %s689 = scalar_lea.vmem %s0, %s688
        %p690 = scmp.lt.s32.totalorder %s34, 1
        %s691 = scalar_select %p690, %s34, 1
        %s692 = scalar_lea.vmem %s1, %s691
        %p693 = scmp.lt.s32.totalorder %s35, 1
        %s694 = scalar_select %p693, %s35, 1
        %s695 = scalar_lea.vmem %s2, %s694
        %p696 = scmp.lt.s32.totalorder %s35, 1
        %s697 = scalar_select %p696, %s35, 1
        %s698 = scalar_lea.vmem %s3, %s697
        %p699 = scmp.lt.s32.totalorder %s35, 1
        %s700 = scalar_select %p699, %s35, 1
        %s701 = smul.addr %s700, 4
        %s702 = smul.addr %s701, 4
        %s703 = scalar_lea.vmem %s4, %s702
        %p704 = scmp.lt.s32.totalorder %s35, 1
        %s705 = scalar_select %p704, %s35, 1
        %s706 = scalar_lea.vmem %s5, %s705
        %p707 = scmp.lt.s32.totalorder %s35, 1
        %s708 = scalar_select %p707, %s35, 1
        %s709 = smul.addr %s708, 4
        %s710 = smul.addr %s709, 4
        %s711 = scalar_lea.vmem %s6, %s710
        %p712 = scmp.lt.s32.totalorder %s35, 1
        %s713 = scalar_select %p712, %s35, 1
        %s714 = scalar_lea.vmem %s7, %s713
        %p715 = scmp.lt.s32.totalorder %s35, 1
        %s716 = scalar_select %p715, %s35, 1
        %s717 = scalar_lea.vmem %s8, %s716
        %p718 = scmp.lt.s32.totalorder %s35, 1
        %s719 = scalar_select %p718, %s35, 1
        %s720 = scalar_lea.vmem %s9, %s719
        %p721 = scmp.lt.s32.totalorder %s35, 1
        %s722 = scalar_select %p721, %s35, 1
        %s723 = smul.addr %s722, 64
        %s724 = smul.addr %s723, 4
        %s725 = scalar_lea.vmem %s10, %s724
        %p726 = scmp.lt.s32.totalorder %s35, 1
        %s727 = scalar_select %p726, %s35, 1
        %s728 = smul.addr %s727, 16
        %s729 = scalar_lea.vmem %s11, %s728
        %p730 = scmp.lt.s32.totalorder %s35, 1
        %s731 = scalar_select %p730, %s35, 1
        %s732 = smul.addr %s731, 256
        %s733 = smul.addr %s732, 4
        %s734 = scalar_lea.vmem %s12, %s733
        %p735 = scmp.lt.s32.totalorder %s35, 1
        %s736 = scalar_select %p735, %s35, 1
        %s737 = scalar_lea.vmem %s13, %s736
        %p739 = scmp.eq.s32.totalorder %s35, 0
        // Predicated region
        $region85: #{tpu_custom_call.1} parent=83 // pred_check
          %p740 = pneg %p739
        $region86: #{tpu_custom_call.1} parent=83 // pred_check_branch
          %742 = sbr.rel (%p740) target = $region88
        $region87: #{tpu_custom_call.1} parent=83 // pred_region
          %v743 = vld [vmem:[%s689] sm:$0xff]
          %vm744 = vcmask 261120
          %745 = vst.msk [vmem:[%s685] sm:$0xff] %vm744, %v743
        $region88: #{tpu_custom_call.1} parent=83 // pred_fallthru
          _
        %v746 = vld [vmem:[%s685] sm:$0xff]
        %v747 = vld [vmem:[%s692] sm:$0x1]
        %vm748 = vcmp.eq.s32.totalorder %v747, 0
        %v749 = vsel %vm748, -1e+09, 0.0
        %v750 = vld [vmem:[%s695] sm:$0x1]
        %v751 = vld [vmem:[%s698] sm:$0x1]
        %vm752 = vcmask 261120
        %v753 = vsel %vm752, %v746, 0.0
        %754 = vadd.xlane.f32.xlu0 %v753
        %v755 = vpop.xlane.xlu0 %754
        %v756 = vrcp.pop 32.0
        %v757 = vmul.f32 32.0, %v756
        %v758 = vsub.f32 1.0, %v757
        %v759 = vmul.f32 %v756, %v758
        %v760 = vadd.f32 %v756, %v759
        %vm761 = vweird.f32 %v756
        %v762 = vsel %vm761, %v756, %v760
        %v763 = vmul.f32 %v755, %v762
        %v764 = vsub.f32 %v746, %v763
        %v765 = vmul.f32 %v764, %v764
        %v766 = vsel %vm752, %v765, 0.0
        %767 = vadd.xlane.f32.xlu0 %v766
        %v768 = vpop.xlane.xlu0 %767
        %v769 = vmul.f32 %v768, 0.032258064
        %v770 = vrsqrt.pop %v769
        %v771 = vmul.f32 %v770, %v769
        %v772 = vmul.f32 %v771, %v770
        %v773 = vmul.f32 0.5, %v772
        %v774 = vsub.f32 1.5, %v773
        %v775 = vmul.f32 %v770, %v774
        %v776 = vmul.f32 %v769, %v775
        %vm777 = vcmp.eq.f32.partialorder %v769, inf
        %v778 = vsel %vm777, %v769, %v776
        %vm779 = vcmp.eq.f32.partialorder %v769, 0.0
        %v780 = vand.u32 %v769, 2147483648
        %v781 = vsel %vm779, %v780, %v778
        %v782 = vadd.f32 %v781, 1e-06
        %v783 = vrcp.pop %v782
        %v784 = vmul.f32 %v782, %v783
        %v785 = vsub.f32 1.0, %v784
        %v786 = vmul.f32 %v783, %v785
        %v787 = vadd.f32 %v783, %v786
        %vm788 = vweird.f32 %v782
        %vm789 = vweird.f32 %v783
        %vm790 = vmor %vm788, %vm789
        %v791 = vsel %vm790, %v783, %v787
        %v792 = vand.u32 2147483647, %v782
        %vm793 = vcmp.eq.f32.partialorder %v792, 8.507059e+37
        %v794 = vand.u32 %v782, 2147483648
        %v795 = vor.u32 1.1754944e-38, %v794
        %v796 = vsel %vm793, %v795, %v791
        %v797 = vmul.f32 1.0, %v796
        %v798 = vmul.f32 %v764, %v797
        %v800 = vperm.slane %v750, 0
        %v802 = vmul.f32 %v800, %v798
        %v804 = vperm.slane %v751, 0
        %v806 = vadd.f32 %v802, %v804
        %v807 = vpack.c.bf16 %v806, %v806
        %v808 = vld [vmem:[%s703] sm:$0xf]
        %v809 = vld [vmem:[%s703 + $0x4] sm:$0xf]
        %v810 = vld [vmem:[%s703 + $0x8] sm:$0xf]
        %v811 = vld [vmem:[%s703 + $0xc] sm:$0xf]
        %v812 = vld [vmem:[%s706] sm:$0x1]
        %v814 = vperm.slane %v812, 0
        %v820 = vunpack.c.l.b16 %v808
        %v821 = vunpack.c.l.b16 %v809
        %v822 = vunpack.c.l.b16 %v810
        %v823 = vunpack.c.l.b16 %v811
        %v824 = vpack.c.b16 %v821, %v820
        %v825 = vpack.c.b16 %v823, %v822
        %v829 = vsel %vm752, %v807, 0
        %831 = vmatpush.bf16.msra.mxu0 0
        %832 = vmatpush.bf16.msra.mxu0 0
        %833 = vmatpush.bf16.msra.mxu0 0
        %834 = vmatpush.bf16.msra.mxu0 0
        %835 = vmatpush.bf16.msra.mxu0 0
        %836 = vmatpush.bf16.msra.mxu0 0
        %837 = vmatpush.bf16.msra.mxu0 %v825
        %838 = vmatpush.bf16.msra.mxu0 %v824
        %839 = vmatmul.bf16.gmra.mxu0 %v829
        %v840 = vpop.f32.mrf.mxu0
        %v841 = vadd.f32 %v814, %v840
        %v842 = vpop.f32.mrf.mxu0
        %843 = vdwg.mxu0
        %v844 = vmul.f32 %v841, 0.35355338
        %846 = vrot.lane.b32.xlu0 %v844, 120
        %v847 = vpop.permute.xlu0 %846
        %849 = vrot.lane.b32.xlu0 %v844, 112
        %v850 = vpop.permute.xlu0 %849
        %852 = vrot.lane.b32.xlu0 %v844, 104
        %v853 = vpop.permute.xlu0 %852
        %v855 = vpack.c.bf16 %v844, %v844
        %v856 = vpack.c.bf16 %v847, %v847
        %v857 = vpack.c.bf16 %v850, %v850
        %v858 = vpack.c.bf16 %v853, %v853
        %860 = vrot.lane.b32.xlu0 %v841, 120
        %v861 = vpop.permute.xlu0 %860
        %863 = vrot.lane.b32.xlu0 %v841, 112
        %v864 = vpop.permute.xlu0 %863
        %866 = vrot.lane.b32.xlu0 %v841, 104
        %v867 = vpop.permute.xlu0 %866
        %v869 = vpack.c.bf16 %v841, %v841
        %v870 = vpack.c.bf16 %v861, %v861
        %v871 = vpack.c.bf16 %v864, %v864
        %v872 = vpack.c.bf16 %v867, %v867
        %v874 = vunpack.c.l.b16 %v869
        %v875 = vpack.c.b16 %v874, %v874
        %876 = vrot.lane.b32.xlu0 %v875, 96
        %v877 = vpop.permute.xlu0 %876
        %vm878 = vcmask 64512
        %v880 = vsel %vm878, %v855, 0
        %v883 = vsel %vm878, %v877, 0
        %885 = vmatpush.bf16.xpose.msra.mxu0 0
        %886 = vmatpush.bf16.xpose.msra.mxu0 0
        %887 = vmatpush.bf16.xpose.msra.mxu0 0
        %888 = vmatpush.bf16.xpose.msra.mxu0 0
        %889 = vmatpush.bf16.xpose.msra.mxu0 0
        %890 = vmatpush.bf16.xpose.msra.mxu0 0
        %891 = vmatpush.bf16.xpose.msra.mxu0 0
        %892 = vmatpush.bf16.xpose.msra.mxu0 %v883
        %893 = vmatmul.bf16.gmra.mxu0 %v880
        %v894 = vpop.f32.mrf.mxu0
        %v895 = vadd.f32 0.0, %v894
        %v896 = vpop.f32.mrf.mxu0
        %897 = vdwg.mxu0
        %v899 = vunpack.c.l.b16 %v870
        %v900 = vpack.c.b16 %v899, %v899
        %901 = vrot.lane.b32.xlu0 %v900, 96
        %v902 = vpop.permute.xlu0 %901
        %v904 = vsel %vm878, %v856, 0
        %v907 = vsel %vm878, %v902, 0
        %909 = vmatpush.bf16.xpose.msra.mxu0 0
        %910 = vmatpush.bf16.xpose.msra.mxu0 0
        %911 = vmatpush.bf16.xpose.msra.mxu0 0
        %912 = vmatpush.bf16.xpose.msra.mxu0 0
        %913 = vmatpush.bf16.xpose.msra.mxu0 0
        %914 = vmatpush.bf16.xpose.msra.mxu0 0
        %915 = vmatpush.bf16.xpose.msra.mxu0 0
        %916 = vmatpush.bf16.xpose.msra.mxu0 %v907
        %917 = vmatmul.bf16.gmra.mxu0 %v904
        %v918 = vpop.f32.mrf.mxu0
        %v919 = vadd.f32 0.0, %v918
        %v920 = vpop.f32.mrf.mxu0
        %921 = vdwg.mxu0
        %v923 = vunpack.c.l.b16 %v871
        %v924 = vpack.c.b16 %v923, %v923
        %925 = vrot.lane.b32.xlu0 %v924, 96
        %v926 = vpop.permute.xlu0 %925
        %v928 = vsel %vm878, %v857, 0
        %v931 = vsel %vm878, %v926, 0
        %933 = vmatpush.bf16.xpose.msra.mxu0 0
        %934 = vmatpush.bf16.xpose.msra.mxu0 0
        %935 = vmatpush.bf16.xpose.msra.mxu0 0
        %936 = vmatpush.bf16.xpose.msra.mxu0 0
        %937 = vmatpush.bf16.xpose.msra.mxu0 0
        %938 = vmatpush.bf16.xpose.msra.mxu0 0
        %939 = vmatpush.bf16.xpose.msra.mxu0 0
        %940 = vmatpush.bf16.xpose.msra.mxu0 %v931
        %941 = vmatmul.bf16.gmra.mxu0 %v928
        %v942 = vpop.f32.mrf.mxu0
        %v943 = vadd.f32 0.0, %v942
        %v944 = vpop.f32.mrf.mxu0
        %945 = vdwg.mxu0
        %v947 = vunpack.c.l.b16 %v872
        %v948 = vpack.c.b16 %v947, %v947
        %949 = vrot.lane.b32.xlu0 %v948, 96
        %v950 = vpop.permute.xlu0 %949
        %v952 = vsel %vm878, %v858, 0
        %v955 = vsel %vm878, %v950, 0
        %957 = vmatpush.bf16.xpose.msra.mxu0 0
        %958 = vmatpush.bf16.xpose.msra.mxu0 0
        %959 = vmatpush.bf16.xpose.msra.mxu0 0
        %960 = vmatpush.bf16.xpose.msra.mxu0 0
        %961 = vmatpush.bf16.xpose.msra.mxu0 0
        %962 = vmatpush.bf16.xpose.msra.mxu0 0
        %963 = vmatpush.bf16.xpose.msra.mxu0 0
        %964 = vmatpush.bf16.xpose.msra.mxu0 %v955
        %965 = vmatmul.bf16.gmra.mxu0 %v952
        %v966 = vpop.f32.mrf.mxu0
        %v967 = vadd.f32 0.0, %v966
        %v968 = vpop.f32.mrf.mxu0
        %969 = vdwg.mxu0
        %v971 = vperm.slane %v749, 0
        %v973 = vadd.f32 %v895, %v971
        %v974 = vadd.f32 %v919, %v971
        %v975 = vadd.f32 %v943, %v971
        %v976 = vadd.f32 %v967, %v971
        %v977 = vsel %vm878, %v973, -inf
        %978 = vmax.xlane.f32.xlu0 %v977
        %v979 = vpop.xlane.xlu0 %978
        %v980 = vsel %vm878, %v974, -inf
        %981 = vmax.xlane.f32.xlu0 %v980
        %v982 = vpop.xlane.xlu0 %981
        %v983 = vsel %vm878, %v975, -inf
        %984 = vmax.xlane.f32.xlu0 %v983
        %v985 = vpop.xlane.xlu0 %984
        %v986 = vsel %vm878, %v976, -inf
        %987 = vmax.xlane.f32.xlu0 %v986
        %v988 = vpop.xlane.xlu0 %987
        %v989 = vsub.f32 %v973, %v979
        %v990 = vsub.f32 %v974, %v982
        %v991 = vsub.f32 %v975, %v985
        %v992 = vsub.f32 %v976, %v988
        %v993 = vmul.f32 %v989, 1.442695
        %v994 = vpow.pop %v993
        %v995 = vmul.f32 %v990, 1.442695
        %v996 = vpow.pop %v995
        %v997 = vmul.f32 %v991, 1.442695
        %v998 = vpow.pop %v997
        %v999 = vmul.f32 %v992, 1.442695
        %v1000 = vpow.pop %v999
        %v1001 = vsel %vm878, %v994, 0.0
        %1002 = vadd.xlane.f32.xlu0 %v1001
        %v1003 = vpop.xlane.xlu0 %1002
        %v1004 = vsel %vm878, %v996, 0.0
        %1005 = vadd.xlane.f32.xlu0 %v1004
        %v1006 = vpop.xlane.xlu0 %1005
        %v1007 = vsel %vm878, %v998, 0.0
        %1008 = vadd.xlane.f32.xlu0 %v1007
        %v1009 = vpop.xlane.xlu0 %1008
        %v1010 = vsel %vm878, %v1000, 0.0
        %1011 = vadd.xlane.f32.xlu0 %v1010
        %v1012 = vpop.xlane.xlu0 %1011
        %v1013 = vrcp.pop %v1003
        %v1014 = vrcp.pop %v1006
        %v1015 = vrcp.pop %v1009
        %v1016 = vrcp.pop %v1012
        %v1017 = vmul.f32 %v994, %v1013
        %v1018 = vmul.f32 %v996, %v1014
        %v1019 = vmul.f32 %v998, %v1015
        %v1020 = vmul.f32 %v1000, %v1016
        %v1021 = vpack.c.bf16 %v1017, %v1017
        %v1022 = vpack.c.bf16 %v1018, %v1018
        %v1023 = vpack.c.bf16 %v1019, %v1019
        %v1024 = vpack.c.bf16 %v1020, %v1020
        %1025 = vrot.lane.b32.xlu0 %v875, 64
        %v1026 = vpop.permute.xlu0 %1025
        %v1028 = vsel %vm878, %v1021, 0
        %vm1030 = vcmask 1043456
        %v1032 = vsel %vm1030, %v1026, 0
        %1034 = vmatpush.bf16.msra.mxu0 0
        %1035 = vmatpush.bf16.msra.mxu0 0
        %1036 = vmatpush.bf16.msra.mxu0 0
        %1037 = vmatpush.bf16.msra.mxu0 0
        %1038 = vmatpush.bf16.msra.mxu0 0
        %1039 = vmatpush.bf16.msra.mxu0 0
        %1040 = vmatpush.bf16.msra.mxu0 0
        %1041 = vmatpush.bf16.msra.mxu0 %v1032
        %1042 = vmatmul.bf16.gmra.mxu0 %v1028
        %v1043 = vpop.f32.mrf.mxu0
        %v1044 = vadd.f32 0.0, %v1043
        %v1045 = vpop.f32.mrf.mxu0
        %1046 = vdwg.mxu0
        %1047 = vrot.lane.b32.xlu0 %v900, 64
        %v1048 = vpop.permute.xlu0 %1047
        %v1050 = vsel %vm878, %v1022, 0
        %v1053 = vsel %vm1030, %v1048, 0
        %1055 = vmatpush.bf16.msra.mxu0 0
        %1056 = vmatpush.bf16.msra.mxu0 0
        %1057 = vmatpush.bf16.msra.mxu0 0
        %1058 = vmatpush.bf16.msra.mxu0 0
        %1059 = vmatpush.bf16.msra.mxu0 0
        %1060 = vmatpush.bf16.msra.mxu0 0
        %1061 = vmatpush.bf16.msra.mxu0 0
        %1062 = vmatpush.bf16.msra.mxu0 %v1053
        %1063 = vmatmul.bf16.gmra.mxu0 %v1050
        %v1064 = vpop.f32.mrf.mxu0
        %v1065 = vadd.f32 0.0, %v1064
        %v1066 = vpop.f32.mrf.mxu0
        %1067 = vdwg.mxu0
        %1068 = vrot.lane.b32.xlu0 %v924, 64
        %v1069 = vpop.permute.xlu0 %1068
        %v1071 = vsel %vm878, %v1023, 0
        %v1074 = vsel %vm1030, %v1069, 0
        %1076 = vmatpush.bf16.msra.mxu0 0
        %1077 = vmatpush.bf16.msra.mxu0 0
        %1078 = vmatpush.bf16.msra.mxu0 0
        %1079 = vmatpush.bf16.msra.mxu0 0
        %1080 = vmatpush.bf16.msra.mxu0 0
        %1081 = vmatpush.bf16.msra.mxu0 0
        %1082 = vmatpush.bf16.msra.mxu0 0
        %1083 = vmatpush.bf16.msra.mxu0 %v1074
        %1084 = vmatmul.bf16.gmra.mxu0 %v1071
        %v1085 = vpop.f32.mrf.mxu0
        %v1086 = vadd.f32 0.0, %v1085
        %v1087 = vpop.f32.mrf.mxu0
        %1088 = vdwg.mxu0
        %1089 = vrot.lane.b32.xlu0 %v948, 64
        %v1090 = vpop.permute.xlu0 %1089
        %v1092 = vsel %vm878, %v1024, 0
        %v1095 = vsel %vm1030, %v1090, 0
        %1097 = vmatpush.bf16.msra.mxu0 0
        %1098 = vmatpush.bf16.msra.mxu0 0
        %1099 = vmatpush.bf16.msra.mxu0 0
        %1100 = vmatpush.bf16.msra.mxu0 0
        %1101 = vmatpush.bf16.msra.mxu0 0
        %1102 = vmatpush.bf16.msra.mxu0 0
        %1103 = vmatpush.bf16.msra.mxu0 0
        %1104 = vmatpush.bf16.msra.mxu0 %v1095
        %1105 = vmatmul.bf16.gmra.mxu0 %v1092
        %v1106 = vpop.f32.mrf.mxu0
        %v1107 = vadd.f32 0.0, %v1106
        %v1108 = vpop.f32.mrf.mxu0
        %1109 = vdwg.mxu0
        %1111 = vrot.lane.b32.xlu0 %v1065, 8
        %v1112 = vpop.permute.xlu0 %1111
        %1115 = vrot.lane.b32.xlu0 %v1086, 16
        %v1116 = vpop.permute.xlu0 %1115
        %1119 = vrot.lane.b32.xlu0 %v1107, 24
        %v1120 = vpop.permute.xlu0 %1119
        %v1122 = vsel %vm878, %v1044, %v1112
        %vm1123 = vcmask 130048
        %v1124 = vsel %vm1123, %v1122, %v1116
        %vm1125 = vcmask 195584
        %v1126 = vsel %vm1125, %v1124, %v1120
        %v1127 = vpack.c.bf16 %v1126, %v1126
        %v1128 = vld [vmem:[%s711] sm:$0xf]
        %v1129 = vld [vmem:[%s711 + $0x4] sm:$0xf]
        %v1130 = vld [vmem:[%s711 + $0x8] sm:$0xf]
        %v1131 = vld [vmem:[%s711 + $0xc] sm:$0xf]
        %v1132 = vld [vmem:[%s714] sm:$0x1]
        %v1134 = vperm.slane %v1132, 0
        %v1140 = vunpack.c.l.b16 %v1128
        %v1141 = vunpack.c.l.b16 %v1129
        %v1142 = vunpack.c.l.b16 %v1130
        %v1143 = vunpack.c.l.b16 %v1131
        %v1144 = vpack.c.b16 %v1141, %v1140
        %v1145 = vpack.c.b16 %v1143, %v1142
        %v1149 = vsel %vm752, %v1127, 0
        %1151 = vmatpush.bf16.msra.mxu0 0
        %1152 = vmatpush.bf16.msra.mxu0 0
        %1153 = vmatpush.bf16.msra.mxu0 0
        %1154 = vmatpush.bf16.msra.mxu0 0
        %1155 = vmatpush.bf16.msra.mxu0 0
        %1156 = vmatpush.bf16.msra.mxu0 0
        %1157 = vmatpush.bf16.msra.mxu0 %v1145
        %1158 = vmatpush.bf16.msra.mxu0 %v1144
        %1159 = vmatmul.bf16.gmra.mxu0 %v1149
        %v1160 = vpop.f32.mrf.mxu0
        %v1161 = vadd.f32 %v1134, %v1160
        %v1162 = vpop.f32.mrf.mxu0
        %1163 = vdwg.mxu0
        %v1164 = vadd.f32 %v746, %v1161
        %v1165 = vld [vmem:[%s717] sm:$0x1]
        %v1166 = vld [vmem:[%s720] sm:$0x1]
        %v1167 = vsel %vm752, %v1164, 0.0
        %1168 = vadd.xlane.f32.xlu0 %v1167
        %v1169 = vpop.xlane.xlu0 %1168
        %v1170 = vmul.f32 %v1169, %v762
        %v1171 = vsub.f32 %v1164, %v1170
        %v1172 = vmul.f32 %v1171, %v1171
        %v1173 = vsel %vm752, %v1172, 0.0
        %1174 = vadd.xlane.f32.xlu0 %v1173
        %v1175 = vpop.xlane.xlu0 %1174
        %v1176 = vmul.f32 %v1175, 0.032258064
        %v1177 = vrsqrt.pop %v1176
        %v1178 = vmul.f32 %v1177, %v1176
        %v1179 = vmul.f32 %v1178, %v1177
        %v1180 = vmul.f32 0.5, %v1179
        %v1181 = vsub.f32 1.5, %v1180
        %v1182 = vmul.f32 %v1177, %v1181
        %v1183 = vmul.f32 %v1176, %v1182
        %vm1184 = vcmp.eq.f32.partialorder %v1176, inf
        %v1185 = vsel %vm1184, %v1176, %v1183
        %vm1186 = vcmp.eq.f32.partialorder %v1176, 0.0
        %v1187 = vand.u32 %v1176, 2147483648
        %v1188 = vsel %vm1186, %v1187, %v1185
        %v1189 = vadd.f32 %v1188, 1e-06
        %v1190 = vrcp.pop %v1189
        %v1191 = vmul.f32 %v1189, %v1190
        %v1192 = vsub.f32 1.0, %v1191
        %v1193 = vmul.f32 %v1190, %v1192
        %v1194 = vadd.f32 %v1190, %v1193
        %vm1195 = vweird.f32 %v1189
        %vm1196 = vweird.f32 %v1190
        %vm1197 = vmor %vm1195, %vm1196
        %v1198 = vsel %vm1197, %v1190, %v1194
        %v1199 = vand.u32 2147483647, %v1189
        %vm1200 = vcmp.eq.f32.partialorder %v1199, 8.507059e+37
        %v1201 = vand.u32 %v1189, 2147483648
        %v1202 = vor.u32 1.1754944e-38, %v1201
        %v1203 = vsel %vm1200, %v1202, %v1198
        %v1204 = vmul.f32 1.0, %v1203
        %v1205 = vmul.f32 %v1171, %v1204
        %v1207 = vperm.slane %v1165, 0
        %v1209 = vmul.f32 %v1207, %v1205
        %v1211 = vperm.slane %v1166, 0
        %v1213 = vadd.f32 %v1209, %v1211
        %v1214 = vpack.c.bf16 %v1213, %v1213
        %v1215 = vld [vmem:[%s725] sm:$0xff]
        %v1216 = vld [vmem:[%s725 + $0x8] sm:$0xff]
        %v1217 = vld [vmem:[%s725 + $0x40] sm:$0xff]
        %v1218 = vld [vmem:[%s725 + $0x48] sm:$0xff]
        %v1219 = vld [vmem:[%s725 + $0x80] sm:$0xff]
        %v1220 = vld [vmem:[%s725 + $0x88] sm:$0xff]
        %v1221 = vld [vmem:[%s725 + $0xc0] sm:$0xff]
        %v1222 = vld [vmem:[%s725 + $0xc8] sm:$0xff]
        %v1223 = vld [vmem:[%s729] sm:$0xf]
        %v1225 = vperm.slane %v1223, 0
        %v1226 = vperm.slane %v1223, 1
        %v1227 = vperm.slane %v1223, 2
        %v1228 = vperm.slane %v1223, 3
        %v1241 = vunpack.c.l.b16 %v1215
        %v1242 = vunpack.c.h.b16 %v1215
        %v1243 = vunpack.c.l.b16 %v1216
        %v1244 = vunpack.c.h.b16 %v1216
        %v1245 = vunpack.c.l.b16 %v1217
        %v1246 = vunpack.c.h.b16 %v1217
        %v1247 = vunpack.c.l.b16 %v1218
        %v1248 = vunpack.c.h.b16 %v1218
        %v1249 = vunpack.c.l.b16 %v1219
        %v1250 = vunpack.c.h.b16 %v1219
        %v1251 = vunpack.c.l.b16 %v1220
        %v1252 = vunpack.c.h.b16 %v1220
        %v1253 = vunpack.c.l.b16 %v1221
        %v1254 = vunpack.c.h.b16 %v1221
        %v1255 = vunpack.c.l.b16 %v1222
        %v1256 = vunpack.c.h.b16 %v1222
        %v1257 = vpack.c.b16 %v1245, %v1241
        %v1258 = vpack.c.b16 %v1246, %v1242
        %v1259 = vpack.c.b16 %v1247, %v1243
        %v1260 = vpack.c.b16 %v1248, %v1244
        %v1261 = vpack.c.b16 %v1253, %v1249
        %v1262 = vpack.c.b16 %v1254, %v1250
        %v1263 = vpack.c.b16 %v1255, %v1251
        %v1264 = vpack.c.b16 %v1256, %v1252
        %v1274 = vsel %vm752, %v1214, 0
        %1276 = vmatpush.bf16.msra.mxu0 0
        %1277 = vmatpush.bf16.msra.mxu0 0
        %1278 = vmatpush.bf16.msra.mxu0 0
        %1279 = vmatpush.bf16.msra.mxu0 0
        %1280 = vmatpush.bf16.msra.mxu0 0
        %1281 = vmatpush.bf16.msra.mxu0 0
        %1282 = vmatpush.bf16.msra.mxu0 %v1261
        %1283 = vmatpush.bf16.msra.mxu0 %v1257
        %1284 = vmatmul.bf16.gmra.mxu0 %v1274
        %v1285 = vpop.f32.mrf.mxu0
        %v1286 = vadd.f32 %v1225, %v1285
        %v1287 = vpop.f32.mrf.mxu0
        %1288 = vdwg.mxu0
        %1289 = vmatpush.bf16.msra.mxu0 0
        %1290 = vmatpush.bf16.msra.mxu0 0
        %1291 = vmatpush.bf16.msra.mxu0 0
        %1292 = vmatpush.bf16.msra.mxu0 0
        %1293 = vmatpush.bf16.msra.mxu0 0
        %1294 = vmatpush.bf16.msra.mxu0 0
        %1295 = vmatpush.bf16.msra.mxu0 %v1262
        %1296 = vmatpush.bf16.msra.mxu0 %v1258
        %1297 = vmatmul.bf16.gmra.mxu0 %v1274
        %v1298 = vpop.f32.mrf.mxu0
        %v1299 = vadd.f32 %v1226, %v1298
        %v1300 = vpop.f32.mrf.mxu0
        %1301 = vdwg.mxu0
        %1302 = vmatpush.bf16.msra.mxu0 0
        %1303 = vmatpush.bf16.msra.mxu0 0
        %1304 = vmatpush.bf16.msra.mxu0 0
        %1305 = vmatpush.bf16.msra.mxu0 0
        %1306 = vmatpush.bf16.msra.mxu0 0
        %1307 = vmatpush.bf16.msra.mxu0 0
        %1308 = vmatpush.bf16.msra.mxu0 %v1263
        %1309 = vmatpush.bf16.msra.mxu0 %v1259
        %1310 = vmatmul.bf16.gmra.mxu0 %v1274
        %v1311 = vpop.f32.mrf.mxu0
        %v1312 = vadd.f32 %v1227, %v1311
        %v1313 = vpop.f32.mrf.mxu0
        %1314 = vdwg.mxu0
        %1315 = vmatpush.bf16.msra.mxu0 0
        %1316 = vmatpush.bf16.msra.mxu0 0
        %1317 = vmatpush.bf16.msra.mxu0 0
        %1318 = vmatpush.bf16.msra.mxu0 0
        %1319 = vmatpush.bf16.msra.mxu0 0
        %1320 = vmatpush.bf16.msra.mxu0 0
        %1321 = vmatpush.bf16.msra.mxu0 %v1264
        %1322 = vmatpush.bf16.msra.mxu0 %v1260
        %1323 = vmatmul.bf16.gmra.mxu0 %v1274
        %v1324 = vpop.f32.mrf.mxu0
        %v1325 = vadd.f32 %v1228, %v1324
        %v1326 = vpop.f32.mrf.mxu0
        %1327 = vdwg.mxu0
        %v1328 = vmax.f32 %v1286, 0.0
        %v1329 = vmax.f32 %v1299, 0.0
        %v1330 = vmax.f32 %v1312, 0.0
        %v1331 = vmax.f32 %v1325, 0.0
        %v1332 = vpack.c.bf16 %v1328, %v1328
        %v1333 = vpack.c.bf16 %v1329, %v1329
        %v1334 = vpack.c.bf16 %v1330, %v1330
        %v1335 = vpack.c.bf16 %v1331, %v1331
        %v1336 = vld [vmem:[%s734] sm:$0xf]
        %v1337 = vld [vmem:[%s734 + $0x4] sm:$0xf]
        %v1338 = vld [vmem:[%s734 + $0x8] sm:$0xf]
        %v1339 = vld [vmem:[%s734 + $0xc] sm:$0xf]
        %v1340 = vld [vmem:[%s734 + $0x10] sm:$0xf]
        %v1341 = vld [vmem:[%s734 + $0x14] sm:$0xf]
        %v1342 = vld [vmem:[%s734 + $0x18] sm:$0xf]
        %v1343 = vld [vmem:[%s734 + $0x1c] sm:$0xf]
        %v1344 = vld [vmem:[%s734 + $0x20] sm:$0xf]
        %v1345 = vld [vmem:[%s734 + $0x24] sm:$0xf]
        %v1346 = vld [vmem:[%s734 + $0x28] sm:$0xf]
        %v1347 = vld [vmem:[%s734 + $0x2c] sm:$0xf]
        %v1348 = vld [vmem:[%s734 + $0x30] sm:$0xf]
        %v1349 = vld [vmem:[%s734 + $0x34] sm:$0xf]
        %v1350 = vld [vmem:[%s734 + $0x38] sm:$0xf]
        %v1351 = vld [vmem:[%s734 + $0x3c] sm:$0xf]
        %v1352 = vld [vmem:[%s734 + $0x40] sm:$0xf]
        %v1353 = vld [vmem:[%s734 + $0x44] sm:$0xf]
        %v1354 = vld [vmem:[%s734 + $0x48] sm:$0xf]
        %v1355 = vld [vmem:[%s734 + $0x4c] sm:$0xf]
        %v1356 = vld [vmem:[%s734 + $0x50] sm:$0xf]
        %v1357 = vld [vmem:[%s734 + $0x54] sm:$0xf]
        %v1358 = vld [vmem:[%s734 + $0x58] sm:$0xf]
        %v1359 = vld [vmem:[%s734 + $0x5c] sm:$0xf]
        %v1360 = vld [vmem:[%s734 + $0x60] sm:$0xf]
        %v1361 = vld [vmem:[%s734 + $0x64] sm:$0xf]
        %v1362 = vld [vmem:[%s734 + $0x68] sm:$0xf]
        %v1363 = vld [vmem:[%s734 + $0x6c] sm:$0xf]
        %v1364 = vld [vmem:[%s734 + $0x70] sm:$0xf]
        %v1365 = vld [vmem:[%s734 + $0x74] sm:$0xf]
        %v1366 = vld [vmem:[%s734 + $0x78] sm:$0xf]
        %v1367 = vld [vmem:[%s734 + $0x7c] sm:$0xf]
        %v1368 = vld [vmem:[%s734 + $0x80] sm:$0xf]
        %v1369 = vld [vmem:[%s734 + $0x84] sm:$0xf]
        %v1370 = vld [vmem:[%s734 + $0x88] sm:$0xf]
        %v1371 = vld [vmem:[%s734 + $0x8c] sm:$0xf]
        %v1372 = vld [vmem:[%s734 + $0x90] sm:$0xf]
        %v1373 = vld [vmem:[%s734 + $0x94] sm:$0xf]
        %v1374 = vld [vmem:[%s734 + $0x98] sm:$0xf]
        %v1375 = vld [vmem:[%s734 + $0x9c] sm:$0xf]
        %v1376 = vld [vmem:[%s734 + $0xa0] sm:$0xf]
        %v1377 = vld [vmem:[%s734 + $0xa4] sm:$0xf]
        %v1378 = vld [vmem:[%s734 + $0xa8] sm:$0xf]
        %v1379 = vld [vmem:[%s734 + $0xac] sm:$0xf]
        %v1380 = vld [vmem:[%s734 + $0xb0] sm:$0xf]
        %v1381 = vld [vmem:[%s734 + $0xb4] sm:$0xf]
        %v1382 = vld [vmem:[%s734 + $0xb8] sm:$0xf]
        %v1383 = vld [vmem:[%s734 + $0xbc] sm:$0xf]
        %v1384 = vld [vmem:[%s734 + $0xc0] sm:$0xf]
        %v1385 = vld [vmem:[%s734 + $0xc4] sm:$0xf]
        %v1386 = vld [vmem:[%s734 + $0xc8] sm:$0xf]
        %v1387 = vld [vmem:[%s734 + $0xcc] sm:$0xf]
        %v1388 = vld [vmem:[%s734 + $0xd0] sm:$0xf]
        %v1389 = vld [vmem:[%s734 + $0xd4] sm:$0xf]
        %v1390 = vld [vmem:[%s734 + $0xd8] sm:$0xf]
        %v1391 = vld [vmem:[%s734 + $0xdc] sm:$0xf]
        %v1392 = vld [vmem:[%s734 + $0xe0] sm:$0xf]
        %v1393 = vld [vmem:[%s734 + $0xe4] sm:$0xf]
        %v1394 = vld [vmem:[%s734 + $0xe8] sm:$0xf]
        %v1395 = vld [vmem:[%s734 + $0xec] sm:$0xf]
        %v1396 = vld [vmem:[%s734 + $0xf0] sm:$0xf]
        %v1397 = vld [vmem:[%s734 + $0xf4] sm:$0xf]
        %v1398 = vld [vmem:[%s734 + $0xf8] sm:$0xf]
        %v1399 = vld [vmem:[%s734 + $0xfc] sm:$0xf]
        %v1400 = vld [vmem:[%s725 + $0x10] sm:$0xff]
        %v1401 = vld [vmem:[%s725 + $0x18] sm:$0xff]
        %v1402 = vld [vmem:[%s725 + $0x50] sm:$0xff]
        %v1403 = vld [vmem:[%s725 + $0x58] sm:$0xff]
        %v1404 = vld [vmem:[%s725 + $0x90] sm:$0xff]
        %v1405 = vld [vmem:[%s725 + $0x98] sm:$0xff]
        %v1406 = vld [vmem:[%s725 + $0xd0] sm:$0xff]
        %v1407 = vld [vmem:[%s725 + $0xd8] sm:$0xff]
        %v1408 = vld [vmem:[%s729 + $0x4] sm:$0xf]
        %v1410 = vperm.slane %v1408, 0
        %v1411 = vperm.slane %v1408, 1
        %v1412 = vperm.slane %v1408, 2
        %v1413 = vperm.slane %v1408, 3
        %v1426 = vunpack.c.l.b16 %v1400
        %v1427 = vunpack.c.h.b16 %v1400
        %v1428 = vunpack.c.l.b16 %v1401
        %v1429 = vunpack.c.h.b16 %v1401
        %v1430 = vunpack.c.l.b16 %v1402
        %v1431 = vunpack.c.h.b16 %v1402
        %v1432 = vunpack.c.l.b16 %v1403
        %v1433 = vunpack.c.h.b16 %v1403
        %v1434 = vunpack.c.l.b16 %v1404
        %v1435 = vunpack.c.h.b16 %v1404
        %v1436 = vunpack.c.l.b16 %v1405
        %v1437 = vunpack.c.h.b16 %v1405
        %v1438 = vunpack.c.l.b16 %v1406
        %v1439 = vunpack.c.h.b16 %v1406
        %v1440 = vunpack.c.l.b16 %v1407
        %v1441 = vunpack.c.h.b16 %v1407
        %v1442 = vpack.c.b16 %v1430, %v1426
        %v1443 = vpack.c.b16 %v1431, %v1427
        %v1444 = vpack.c.b16 %v1432, %v1428
        %v1445 = vpack.c.b16 %v1433, %v1429
        %v1446 = vpack.c.b16 %v1438, %v1434
        %v1447 = vpack.c.b16 %v1439, %v1435
        %v1448 = vpack.c.b16 %v1440, %v1436
        %v1449 = vpack.c.b16 %v1441, %v1437
        %1458 = vmatpush.bf16.msra.mxu0 0
        %1459 = vmatpush.bf16.msra.mxu0 0
        %1460 = vmatpush.bf16.msra.mxu0 0
        %1461 = vmatpush.bf16.msra.mxu0 0
        %1462 = vmatpush.bf16.msra.mxu0 0
        %1463 = vmatpush.bf16.msra.mxu0 0
        %1464 = vmatpush.bf16.msra.mxu0 %v1446
        %1465 = vmatpush.bf16.msra.mxu0 %v1442
        %1466 = vmatmul.bf16.gmra.mxu0 %v1274
        %v1467 = vpop.f32.mrf.mxu0
        %v1468 = vadd.f32 %v1410, %v1467
        %v1469 = vpop.f32.mrf.mxu0
        %1470 = vdwg.mxu0
        %1471 = vmatpush.bf16.msra.mxu0 0
        %1472 = vmatpush.bf16.msra.mxu0 0
        %1473 = vmatpush.bf16.msra.mxu0 0
        %1474 = vmatpush.bf16.msra.mxu0 0
        %1475 = vmatpush.bf16.msra.mxu0 0
        %1476 = vmatpush.bf16.msra.mxu0 0
        %1477 = vmatpush.bf16.msra.mxu0 %v1447
        %1478 = vmatpush.bf16.msra.mxu0 %v1443
        %1479 = vmatmul.bf16.gmra.mxu0 %v1274
        %v1480 = vpop.f32.mrf.mxu0
        %v1481 = vadd.f32 %v1411, %v1480
        %v1482 = vpop.f32.mrf.mxu0
        %1483 = vdwg.mxu0
        %1484 = vmatpush.bf16.msra.mxu0 0
        %1485 = vmatpush.bf16.msra.mxu0 0
        %1486 = vmatpush.bf16.msra.mxu0 0
        %1487 = vmatpush.bf16.msra.mxu0 0
        %1488 = vmatpush.bf16.msra.mxu0 0
        %1489 = vmatpush.bf16.msra.mxu0 0
        %1490 = vmatpush.bf16.msra.mxu0 %v1448
        %1491 = vmatpush.bf16.msra.mxu0 %v1444
        %1492 = vmatmul.bf16.gmra.mxu0 %v1274
        %v1493 = vpop.f32.mrf.mxu0
        %v1494 = vadd.f32 %v1412, %v1493
        %v1495 = vpop.f32.mrf.mxu0
        %1496 = vdwg.mxu0
        %1497 = vmatpush.bf16.msra.mxu0 0
        %1498 = vmatpush.bf16.msra.mxu0 0
        %1499 = vmatpush.bf16.msra.mxu0 0
        %1500 = vmatpush.bf16.msra.mxu0 0
        %1501 = vmatpush.bf16.msra.mxu0 0
        %1502 = vmatpush.bf16.msra.mxu0 0
        %1503 = vmatpush.bf16.msra.mxu0 %v1449
        %1504 = vmatpush.bf16.msra.mxu0 %v1445
        %1505 = vmatmul.bf16.gmra.mxu0 %v1274
        %v1506 = vpop.f32.mrf.mxu0
        %v1507 = vadd.f32 %v1413, %v1506
        %v1508 = vpop.f32.mrf.mxu0
        %1509 = vdwg.mxu0
        %v1510 = vmax.f32 %v1468, 0.0
        %v1511 = vmax.f32 %v1481, 0.0
        %v1512 = vmax.f32 %v1494, 0.0
        %v1513 = vmax.f32 %v1507, 0.0
        %v1514 = vpack.c.bf16 %v1510, %v1510
        %v1515 = vpack.c.bf16 %v1511, %v1511
        %v1516 = vpack.c.bf16 %v1512, %v1512
        %v1517 = vpack.c.bf16 %v1513, %v1513
        %v1518 = vld [vmem:[%s734 + $0x100] sm:$0xf]
        %v1519 = vld [vmem:[%s734 + $0x104] sm:$0xf]
        %v1520 = vld [vmem:[%s734 + $0x108] sm:$0xf]
        %v1521 = vld [vmem:[%s734 + $0x10c] sm:$0xf]
        %v1522 = vld [vmem:[%s734 + $0x110] sm:$0xf]
        %v1523 = vld [vmem:[%s734 + $0x114] sm:$0xf]
        %v1524 = vld [vmem:[%s734 + $0x118] sm:$0xf]
        %v1525 = vld [vmem:[%s734 + $0x11c] sm:$0xf]
        %v1526 = vld [vmem:[%s734 + $0x120] sm:$0xf]
        %v1527 = vld [vmem:[%s734 + $0x124] sm:$0xf]
        %v1528 = vld [vmem:[%s734 + $0x128] sm:$0xf]
        %v1529 = vld [vmem:[%s734 + $0x12c] sm:$0xf]
        %v1530 = vld [vmem:[%s734 + $0x130] sm:$0xf]
        %v1531 = vld [vmem:[%s734 + $0x134] sm:$0xf]
        %v1532 = vld [vmem:[%s734 + $0x138] sm:$0xf]
        %v1533 = vld [vmem:[%s734 + $0x13c] sm:$0xf]
        %v1534 = vld [vmem:[%s734 + $0x140] sm:$0xf]
        %v1535 = vld [vmem:[%s734 + $0x144] sm:$0xf]
        %v1536 = vld [vmem:[%s734 + $0x148] sm:$0xf]
        %v1537 = vld [vmem:[%s734 + $0x14c] sm:$0xf]
        %v1538 = vld [vmem:[%s734 + $0x150] sm:$0xf]
        %v1539 = vld [vmem:[%s734 + $0x154] sm:$0xf]
        %v1540 = vld [vmem:[%s734 + $0x158] sm:$0xf]
        %v1541 = vld [vmem:[%s734 + $0x15c] sm:$0xf]
        %v1542 = vld [vmem:[%s734 + $0x160] sm:$0xf]
        %v1543 = vld [vmem:[%s734 + $0x164] sm:$0xf]
        %v1544 = vld [vmem:[%s734 + $0x168] sm:$0xf]
        %v1545 = vld [vmem:[%s734 + $0x16c] sm:$0xf]
        %v1546 = vld [vmem:[%s734 + $0x170] sm:$0xf]
        %v1547 = vld [vmem:[%s734 + $0x174] sm:$0xf]
        %v1548 = vld [vmem:[%s734 + $0x178] sm:$0xf]
        %v1549 = vld [vmem:[%s734 + $0x17c] sm:$0xf]
        %v1550 = vld [vmem:[%s734 + $0x180] sm:$0xf]
        %v1551 = vld [vmem:[%s734 + $0x184] sm:$0xf]
        %v1552 = vld [vmem:[%s734 + $0x188] sm:$0xf]
        %v1553 = vld [vmem:[%s734 + $0x18c] sm:$0xf]
        %v1554 = vld [vmem:[%s734 + $0x190] sm:$0xf]
        %v1555 = vld [vmem:[%s734 + $0x194] sm:$0xf]
        %v1556 = vld [vmem:[%s734 + $0x198] sm:$0xf]
        %v1557 = vld [vmem:[%s734 + $0x19c] sm:$0xf]
        %v1558 = vld [vmem:[%s734 + $0x1a0] sm:$0xf]
        %v1559 = vld [vmem:[%s734 + $0x1a4] sm:$0xf]
        %v1560 = vld [vmem:[%s734 + $0x1a8] sm:$0xf]
        %v1561 = vld [vmem:[%s734 + $0x1ac] sm:$0xf]
        %v1562 = vld [vmem:[%s734 + $0x1b0] sm:$0xf]
        %v1563 = vld [vmem:[%s734 + $0x1b4] sm:$0xf]
        %v1564 = vld [vmem:[%s734 + $0x1b8] sm:$0xf]
        %v1565 = vld [vmem:[%s734 + $0x1bc] sm:$0xf]
        %v1566 = vld [vmem:[%s734 + $0x1c0] sm:$0xf]
        %v1567 = vld [vmem:[%s734 + $0x1c4] sm:$0xf]
        %v1568 = vld [vmem:[%s734 + $0x1c8] sm:$0xf]
        %v1569 = vld [vmem:[%s734 + $0x1cc] sm:$0xf]
        %v1570 = vld [vmem:[%s734 + $0x1d0] sm:$0xf]
        %v1571 = vld [vmem:[%s734 + $0x1d4] sm:$0xf]
        %v1572 = vld [vmem:[%s734 + $0x1d8] sm:$0xf]
        %v1573 = vld [vmem:[%s734 + $0x1dc] sm:$0xf]
        %v1574 = vld [vmem:[%s734 + $0x1e0] sm:$0xf]
        %v1575 = vld [vmem:[%s734 + $0x1e4] sm:$0xf]
        %v1576 = vld [vmem:[%s734 + $0x1e8] sm:$0xf]
        %v1577 = vld [vmem:[%s734 + $0x1ec] sm:$0xf]
        %v1578 = vld [vmem:[%s734 + $0x1f0] sm:$0xf]
        %v1579 = vld [vmem:[%s734 + $0x1f4] sm:$0xf]
        %v1580 = vld [vmem:[%s734 + $0x1f8] sm:$0xf]
        %v1581 = vld [vmem:[%s734 + $0x1fc] sm:$0xf]
        %v1646 = vunpack.c.l.b16 %v1518
        %v1647 = vunpack.c.l.b16 %v1519
        %v1648 = vunpack.c.l.b16 %v1520
        %v1649 = vunpack.c.l.b16 %v1521
        %v1650 = vunpack.c.l.b16 %v1522
        %v1651 = vunpack.c.l.b16 %v1523
        %v1652 = vunpack.c.l.b16 %v1524
        %v1653 = vunpack.c.l.b16 %v1525
        %v1654 = vunpack.c.l.b16 %v1526
        %v1655 = vunpack.c.l.b16 %v1527
        %v1656 = vunpack.c.l.b16 %v1528
        %v1657 = vunpack.c.l.b16 %v1529
        %v1658 = vunpack.c.l.b16 %v1530
        %v1659 = vunpack.c.l.b16 %v1531
        %v1660 = vunpack.c.l.b16 %v1532
        %v1661 = vunpack.c.l.b16 %v1533
        %v1662 = vunpack.c.l.b16 %v1534
        %v1663 = vunpack.c.l.b16 %v1535
        %v1664 = vunpack.c.l.b16 %v1536
        %v1665 = vunpack.c.l.b16 %v1537
        %v1666 = vunpack.c.l.b16 %v1538
        %v1667 = vunpack.c.l.b16 %v1539
        %v1668 = vunpack.c.l.b16 %v1540
        %v1669 = vunpack.c.l.b16 %v1541
        %v1670 = vunpack.c.l.b16 %v1542
        %v1671 = vunpack.c.l.b16 %v1543
        %v1672 = vunpack.c.l.b16 %v1544
        %v1673 = vunpack.c.l.b16 %v1545
        %v1674 = vunpack.c.l.b16 %v1546
        %v1675 = vunpack.c.l.b16 %v1547
        %v1676 = vunpack.c.l.b16 %v1548
        %v1677 = vunpack.c.l.b16 %v1549
        %v1678 = vunpack.c.l.b16 %v1550
        %v1679 = vunpack.c.l.b16 %v1551
        %v1680 = vunpack.c.l.b16 %v1552
        %v1681 = vunpack.c.l.b16 %v1553
        %v1682 = vunpack.c.l.b16 %v1554
        %v1683 = vunpack.c.l.b16 %v1555
        %v1684 = vunpack.c.l.b16 %v1556
        %v1685 = vunpack.c.l.b16 %v1557
        %v1686 = vunpack.c.l.b16 %v1558
        %v1687 = vunpack.c.l.b16 %v1559
        %v1688 = vunpack.c.l.b16 %v1560
        %v1689 = vunpack.c.l.b16 %v1561
        %v1690 = vunpack.c.l.b16 %v1562
        %v1691 = vunpack.c.l.b16 %v1563
        %v1692 = vunpack.c.l.b16 %v1564
        %v1693 = vunpack.c.l.b16 %v1565
        %v1694 = vunpack.c.l.b16 %v1566
        %v1695 = vunpack.c.l.b16 %v1567
        %v1696 = vunpack.c.l.b16 %v1568
        %v1697 = vunpack.c.l.b16 %v1569
        %v1698 = vunpack.c.l.b16 %v1570
        %v1699 = vunpack.c.l.b16 %v1571
        %v1700 = vunpack.c.l.b16 %v1572
        %v1701 = vunpack.c.l.b16 %v1573
        %v1702 = vunpack.c.l.b16 %v1574
        %v1703 = vunpack.c.l.b16 %v1575
        %v1704 = vunpack.c.l.b16 %v1576
        %v1705 = vunpack.c.l.b16 %v1577
        %v1706 = vunpack.c.l.b16 %v1578
        %v1707 = vunpack.c.l.b16 %v1579
        %v1708 = vunpack.c.l.b16 %v1580
        %v1709 = vunpack.c.l.b16 %v1581
        %v1710 = vpack.c.b16 %v1647, %v1646
        %v1711 = vpack.c.b16 %v1649, %v1648
        %v1712 = vpack.c.b16 %v1651, %v1650
        %v1713 = vpack.c.b16 %v1653, %v1652
        %v1714 = vpack.c.b16 %v1655, %v1654
        %v1715 = vpack.c.b16 %v1657, %v1656
        %v1716 = vpack.c.b16 %v1659, %v1658
        %v1717 = vpack.c.b16 %v1661, %v1660
        %v1718 = vpack.c.b16 %v1663, %v1662
        %v1719 = vpack.c.b16 %v1665, %v1664
        %v1720 = vpack.c.b16 %v1667, %v1666
        %v1721 = vpack.c.b16 %v1669, %v1668
        %v1722 = vpack.c.b16 %v1671, %v1670
        %v1723 = vpack.c.b16 %v1673, %v1672
        %v1724 = vpack.c.b16 %v1675, %v1674
        %v1725 = vpack.c.b16 %v1677, %v1676
        %v1726 = vpack.c.b16 %v1679, %v1678
        %v1727 = vpack.c.b16 %v1681, %v1680
        %v1728 = vpack.c.b16 %v1683, %v1682
        %v1729 = vpack.c.b16 %v1685, %v1684
        %v1730 = vpack.c.b16 %v1687, %v1686
        %v1731 = vpack.c.b16 %v1689, %v1688
        %v1732 = vpack.c.b16 %v1691, %v1690
        %v1733 = vpack.c.b16 %v1693, %v1692
        %v1734 = vpack.c.b16 %v1695, %v1694
        %v1735 = vpack.c.b16 %v1697, %v1696
        %v1736 = vpack.c.b16 %v1699, %v1698
        %v1737 = vpack.c.b16 %v1701, %v1700
        %v1738 = vpack.c.b16 %v1703, %v1702
        %v1739 = vpack.c.b16 %v1705, %v1704
        %v1740 = vpack.c.b16 %v1707, %v1706
        %v1741 = vpack.c.b16 %v1709, %v1708
        %1774 = vmatpush.bf16.msra.mxu0 %v1717
        %1775 = vmatpush.bf16.msra.mxu0 %v1716
        %1776 = vmatpush.bf16.msra.mxu0 %v1715
        %1777 = vmatpush.bf16.msra.mxu0 %v1714
        %1778 = vmatpush.bf16.msra.mxu0 %v1713
        %1779 = vmatpush.bf16.msra.mxu0 %v1712
        %1780 = vmatpush.bf16.msra.mxu0 %v1711
        %1781 = vmatpush.bf16.msra.mxu0 %v1710
        %1782 = vmatmul.bf16.gmra.mxu0 %v1514
        %v1783 = vpop.f32.mrf.mxu0
        %v1784 = vadd.f32 0.0, %v1783
        %v1785 = vpop.f32.mrf.mxu0
        %1786 = vdwg.mxu0
        %1787 = vmatpush.bf16.msra.mxu0 %v1725
        %1788 = vmatpush.bf16.msra.mxu0 %v1724
        %1789 = vmatpush.bf16.msra.mxu0 %v1723
        %1790 = vmatpush.bf16.msra.mxu0 %v1722
        %1791 = vmatpush.bf16.msra.mxu0 %v1721
        %1792 = vmatpush.bf16.msra.mxu0 %v1720
        %1793 = vmatpush.bf16.msra.mxu0 %v1719
        %1794 = vmatpush.bf16.msra.mxu0 %v1718
        %1795 = vmatmul.bf16.gmra.mxu0 %v1515
        %v1796 = vpop.f32.mrf.mxu0
        %v1797 = vadd.f32 %v1784, %v1796
        %v1798 = vpop.f32.mrf.mxu0
        %1799 = vdwg.mxu0
        %1800 = vmatpush.bf16.msra.mxu0 %v1733
        %1801 = vmatpush.bf16.msra.mxu0 %v1732
        %1802 = vmatpush.bf16.msra.mxu0 %v1731
        %1803 = vmatpush.bf16.msra.mxu0 %v1730
        %1804 = vmatpush.bf16.msra.mxu0 %v1729
        %1805 = vmatpush.bf16.msra.mxu0 %v1728
        %1806 = vmatpush.bf16.msra.mxu0 %v1727
        %1807 = vmatpush.bf16.msra.mxu0 %v1726
        %1808 = vmatmul.bf16.gmra.mxu0 %v1516
        %v1809 = vpop.f32.mrf.mxu0
        %v1810 = vadd.f32 %v1797, %v1809
        %v1811 = vpop.f32.mrf.mxu0
        %1812 = vdwg.mxu0
        %1813 = vmatpush.bf16.msra.mxu0 %v1741
        %1814 = vmatpush.bf16.msra.mxu0 %v1740
        %1815 = vmatpush.bf16.msra.mxu0 %v1739
        %1816 = vmatpush.bf16.msra.mxu0 %v1738
        %1817 = vmatpush.bf16.msra.mxu0 %v1737
        %1818 = vmatpush.bf16.msra.mxu0 %v1736
        %1819 = vmatpush.bf16.msra.mxu0 %v1735
        %1820 = vmatpush.bf16.msra.mxu0 %v1734
        %1821 = vmatmul.bf16.gmra.mxu0 %v1517
        %v1822 = vpop.f32.mrf.mxu0
        %v1823 = vadd.f32 %v1810, %v1822
        %v1824 = vpop.f32.mrf.mxu0
        %1825 = vdwg.mxu0
        %v1890 = vunpack.c.l.b16 %v1336
        %v1891 = vunpack.c.l.b16 %v1337
        %v1892 = vunpack.c.l.b16 %v1338
        %v1893 = vunpack.c.l.b16 %v1339
        %v1894 = vunpack.c.l.b16 %v1340
        %v1895 = vunpack.c.l.b16 %v1341
        %v1896 = vunpack.c.l.b16 %v1342
        %v1897 = vunpack.c.l.b16 %v1343
        %v1898 = vunpack.c.l.b16 %v1344
        %v1899 = vunpack.c.l.b16 %v1345
        %v1900 = vunpack.c.l.b16 %v1346
        %v1901 = vunpack.c.l.b16 %v1347
        %v1902 = vunpack.c.l.b16 %v1348
        %v1903 = vunpack.c.l.b16 %v1349
        %v1904 = vunpack.c.l.b16 %v1350
        %v1905 = vunpack.c.l.b16 %v1351
        %v1906 = vunpack.c.l.b16 %v1352
        %v1907 = vunpack.c.l.b16 %v1353
        %v1908 = vunpack.c.l.b16 %v1354
        %v1909 = vunpack.c.l.b16 %v1355
        %v1910 = vunpack.c.l.b16 %v1356
        %v1911 = vunpack.c.l.b16 %v1357
        %v1912 = vunpack.c.l.b16 %v1358
        %v1913 = vunpack.c.l.b16 %v1359
        %v1914 = vunpack.c.l.b16 %v1360
        %v1915 = vunpack.c.l.b16 %v1361
        %v1916 = vunpack.c.l.b16 %v1362
        %v1917 = vunpack.c.l.b16 %v1363
        %v1918 = vunpack.c.l.b16 %v1364
        %v1919 = vunpack.c.l.b16 %v1365
        %v1920 = vunpack.c.l.b16 %v1366
        %v1921 = vunpack.c.l.b16 %v1367
        %v1922 = vunpack.c.l.b16 %v1368
        %v1923 = vunpack.c.l.b16 %v1369
        %v1924 = vunpack.c.l.b16 %v1370
        %v1925 = vunpack.c.l.b16 %v1371
        %v1926 = vunpack.c.l.b16 %v1372
        %v1927 = vunpack.c.l.b16 %v1373
        %v1928 = vunpack.c.l.b16 %v1374
        %v1929 = vunpack.c.l.b16 %v1375
        %v1930 = vunpack.c.l.b16 %v1376
        %v1931 = vunpack.c.l.b16 %v1377
        %v1932 = vunpack.c.l.b16 %v1378
        %v1933 = vunpack.c.l.b16 %v1379
        %v1934 = vunpack.c.l.b16 %v1380
        %v1935 = vunpack.c.l.b16 %v1381
        %v1936 = vunpack.c.l.b16 %v1382
        %v1937 = vunpack.c.l.b16 %v1383
        %v1938 = vunpack.c.l.b16 %v1384
        %v1939 = vunpack.c.l.b16 %v1385
        %v1940 = vunpack.c.l.b16 %v1386
        %v1941 = vunpack.c.l.b16 %v1387
        %v1942 = vunpack.c.l.b16 %v1388
        %v1943 = vunpack.c.l.b16 %v1389
        %v1944 = vunpack.c.l.b16 %v1390
        %v1945 = vunpack.c.l.b16 %v1391
        %v1946 = vunpack.c.l.b16 %v1392
        %v1947 = vunpack.c.l.b16 %v1393
        %v1948 = vunpack.c.l.b16 %v1394
        %v1949 = vunpack.c.l.b16 %v1395
        %v1950 = vunpack.c.l.b16 %v1396
        %v1951 = vunpack.c.l.b16 %v1397
        %v1952 = vunpack.c.l.b16 %v1398
        %v1953 = vunpack.c.l.b16 %v1399
        %v1954 = vpack.c.b16 %v1891, %v1890
        %v1955 = vpack.c.b16 %v1893, %v1892
        %v1956 = vpack.c.b16 %v1895, %v1894
        %v1957 = vpack.c.b16 %v1897, %v1896
        %v1958 = vpack.c.b16 %v1899, %v1898
        %v1959 = vpack.c.b16 %v1901, %v1900
        %v1960 = vpack.c.b16 %v1903, %v1902
        %v1961 = vpack.c.b16 %v1905, %v1904
        %v1962 = vpack.c.b16 %v1907, %v1906
        %v1963 = vpack.c.b16 %v1909, %v1908
        %v1964 = vpack.c.b16 %v1911, %v1910
        %v1965 = vpack.c.b16 %v1913, %v1912
        %v1966 = vpack.c.b16 %v1915, %v1914
        %v1967 = vpack.c.b16 %v1917, %v1916
        %v1968 = vpack.c.b16 %v1919, %v1918
        %v1969 = vpack.c.b16 %v1921, %v1920
        %v1970 = vpack.c.b16 %v1923, %v1922
        %v1971 = vpack.c.b16 %v1925, %v1924
        %v1972 = vpack.c.b16 %v1927, %v1926
        %v1973 = vpack.c.b16 %v1929, %v1928
        %v1974 = vpack.c.b16 %v1931, %v1930
        %v1975 = vpack.c.b16 %v1933, %v1932
        %v1976 = vpack.c.b16 %v1935, %v1934
        %v1977 = vpack.c.b16 %v1937, %v1936
        %v1978 = vpack.c.b16 %v1939, %v1938
        %v1979 = vpack.c.b16 %v1941, %v1940
        %v1980 = vpack.c.b16 %v1943, %v1942
        %v1981 = vpack.c.b16 %v1945, %v1944
        %v1982 = vpack.c.b16 %v1947, %v1946
        %v1983 = vpack.c.b16 %v1949, %v1948
        %v1984 = vpack.c.b16 %v1951, %v1950
        %v1985 = vpack.c.b16 %v1953, %v1952
        %2018 = vmatpush.bf16.msra.mxu0 %v1961
        %2019 = vmatpush.bf16.msra.mxu0 %v1960
        %2020 = vmatpush.bf16.msra.mxu0 %v1959
        %2021 = vmatpush.bf16.msra.mxu0 %v1958
        %2022 = vmatpush.bf16.msra.mxu0 %v1957
        %2023 = vmatpush.bf16.msra.mxu0 %v1956
        %2024 = vmatpush.bf16.msra.mxu0 %v1955
        %2025 = vmatpush.bf16.msra.mxu0 %v1954
        %2026 = vmatmul.bf16.gmra.mxu0 %v1332
        %v2027 = vpop.f32.mrf.mxu0
        %v2028 = vadd.f32 %v1823, %v2027
        %v2029 = vpop.f32.mrf.mxu0
        %2030 = vdwg.mxu0
        %2031 = vmatpush.bf16.msra.mxu0 %v1969
        %2032 = vmatpush.bf16.msra.mxu0 %v1968
        %2033 = vmatpush.bf16.msra.mxu0 %v1967
        %2034 = vmatpush.bf16.msra.mxu0 %v1966
        %2035 = vmatpush.bf16.msra.mxu0 %v1965
        %2036 = vmatpush.bf16.msra.mxu0 %v1964
        %2037 = vmatpush.bf16.msra.mxu0 %v1963
        %2038 = vmatpush.bf16.msra.mxu0 %v1962
        %2039 = vmatmul.bf16.gmra.mxu0 %v1333
        %v2040 = vpop.f32.mrf.mxu0
        %v2041 = vadd.f32 %v2028, %v2040
        %v2042 = vpop.f32.mrf.mxu0
        %2043 = vdwg.mxu0
        %2044 = vmatpush.bf16.msra.mxu0 %v1977
        %2045 = vmatpush.bf16.msra.mxu0 %v1976
        %2046 = vmatpush.bf16.msra.mxu0 %v1975
        %2047 = vmatpush.bf16.msra.mxu0 %v1974
        %2048 = vmatpush.bf16.msra.mxu0 %v1973
        %2049 = vmatpush.bf16.msra.mxu0 %v1972
        %2050 = vmatpush.bf16.msra.mxu0 %v1971
        %2051 = vmatpush.bf16.msra.mxu0 %v1970
        %2052 = vmatmul.bf16.gmra.mxu0 %v1334
        %v2053 = vpop.f32.mrf.mxu0
        %v2054 = vadd.f32 %v2041, %v2053
        %v2055 = vpop.f32.mrf.mxu0
        %2056 = vdwg.mxu0
        %2057 = vmatpush.bf16.msra.mxu0 %v1985
        %2058 = vmatpush.bf16.msra.mxu0 %v1984
        %2059 = vmatpush.bf16.msra.mxu0 %v1983
        %2060 = vmatpush.bf16.msra.mxu0 %v1982
        %2061 = vmatpush.bf16.msra.mxu0 %v1981
        %2062 = vmatpush.bf16.msra.mxu0 %v1980
        %2063 = vmatpush.bf16.msra.mxu0 %v1979
        %2064 = vmatpush.bf16.msra.mxu0 %v1978
        %2065 = vmatmul.bf16.gmra.mxu0 %v1335
        %v2066 = vpop.f32.mrf.mxu0
        %v2067 = vadd.f32 %v2054, %v2066
        %v2068 = vpop.f32.mrf.mxu0
        %2069 = vdwg.mxu0
        %v2070 = vld [vmem:[%s725 + $0x20] sm:$0xff]
        %v2071 = vld [vmem:[%s725 + $0x28] sm:$0xff]
        %v2072 = vld [vmem:[%s725 + $0x60] sm:$0xff]
        %v2073 = vld [vmem:[%s725 + $0x68] sm:$0xff]
        %v2074 = vld [vmem:[%s725 + $0xa0] sm:$0xff]
        %v2075 = vld [vmem:[%s725 + $0xa8] sm:$0xff]
        %v2076 = vld [vmem:[%s725 + $0xe0] sm:$0xff]
        %v2077 = vld [vmem:[%s725 + $0xe8] sm:$0xff]
        %v2078 = vld [vmem:[%s729 + $0x8] sm:$0xf]
        %v2080 = vperm.slane %v2078, 0
        %v2081 = vperm.slane %v2078, 1
        %v2082 = vperm.slane %v2078, 2
        %v2083 = vperm.slane %v2078, 3
        %v2096 = vunpack.c.l.b16 %v2070
        %v2097 = vunpack.c.h.b16 %v2070
        %v2098 = vunpack.c.l.b16 %v2071
        %v2099 = vunpack.c.h.b16 %v2071
        %v2100 = vunpack.c.l.b16 %v2072
        %v2101 = vunpack.c.h.b16 %v2072
        %v2102 = vunpack.c.l.b16 %v2073
        %v2103 = vunpack.c.h.b16 %v2073
        %v2104 = vunpack.c.l.b16 %v2074
        %v2105 = vunpack.c.h.b16 %v2074
        %v2106 = vunpack.c.l.b16 %v2075
        %v2107 = vunpack.c.h.b16 %v2075
        %v2108 = vunpack.c.l.b16 %v2076
        %v2109 = vunpack.c.h.b16 %v2076
        %v2110 = vunpack.c.l.b16 %v2077
        %v2111 = vunpack.c.h.b16 %v2077
        %v2112 = vpack.c.b16 %v2100, %v2096
        %v2113 = vpack.c.b16 %v2101, %v2097
        %v2114 = vpack.c.b16 %v2102, %v2098
        %v2115 = vpack.c.b16 %v2103, %v2099
        %v2116 = vpack.c.b16 %v2108, %v2104
        %v2117 = vpack.c.b16 %v2109, %v2105
        %v2118 = vpack.c.b16 %v2110, %v2106
        %v2119 = vpack.c.b16 %v2111, %v2107
        %2128 = vmatpush.bf16.msra.mxu0 0
        %2129 = vmatpush.bf16.msra.mxu0 0
        %2130 = vmatpush.bf16.msra.mxu0 0
        %2131 = vmatpush.bf16.msra.mxu0 0
        %2132 = vmatpush.bf16.msra.mxu0 0
        %2133 = vmatpush.bf16.msra.mxu0 0
        %2134 = vmatpush.bf16.msra.mxu0 %v2116
        %2135 = vmatpush.bf16.msra.mxu0 %v2112
        %2136 = vmatmul.bf16.gmra.mxu0 %v1274
        %v2137 = vpop.f32.mrf.mxu0
        %v2138 = vadd.f32 %v2080, %v2137
        %v2139 = vpop.f32.mrf.mxu0
        %2140 = vdwg.mxu0
        %2141 = vmatpush.bf16.msra.mxu0 0
        %2142 = vmatpush.bf16.msra.mxu0 0
        %2143 = vmatpush.bf16.msra.mxu0 0
        %2144 = vmatpush.bf16.msra.mxu0 0
        %2145 = vmatpush.bf16.msra.mxu0 0
        %2146 = vmatpush.bf16.msra.mxu0 0
        %2147 = vmatpush.bf16.msra.mxu0 %v2117
        %2148 = vmatpush.bf16.msra.mxu0 %v2113
        %2149 = vmatmul.bf16.gmra.mxu0 %v1274
        %v2150 = vpop.f32.mrf.mxu0
        %v2151 = vadd.f32 %v2081, %v2150
        %v2152 = vpop.f32.mrf.mxu0
        %2153 = vdwg.mxu0
        %2154 = vmatpush.bf16.msra.mxu0 0
        %2155 = vmatpush.bf16.msra.mxu0 0
        %2156 = vmatpush.bf16.msra.mxu0 0
        %2157 = vmatpush.bf16.msra.mxu0 0
        %2158 = vmatpush.bf16.msra.mxu0 0
        %2159 = vmatpush.bf16.msra.mxu0 0
        %2160 = vmatpush.bf16.msra.mxu0 %v2118
        %2161 = vmatpush.bf16.msra.mxu0 %v2114
        %2162 = vmatmul.bf16.gmra.mxu0 %v1274
        %v2163 = vpop.f32.mrf.mxu0
        %v2164 = vadd.f32 %v2082, %v2163
        %v2165 = vpop.f32.mrf.mxu0
        %2166 = vdwg.mxu0
        %2167 = vmatpush.bf16.msra.mxu0 0
        %2168 = vmatpush.bf16.msra.mxu0 0
        %2169 = vmatpush.bf16.msra.mxu0 0
        %2170 = vmatpush.bf16.msra.mxu0 0
        %2171 = vmatpush.bf16.msra.mxu0 0
        %2172 = vmatpush.bf16.msra.mxu0 0
        %2173 = vmatpush.bf16.msra.mxu0 %v2119
        %2174 = vmatpush.bf16.msra.mxu0 %v2115
        %2175 = vmatmul.bf16.gmra.mxu0 %v1274
        %v2176 = vpop.f32.mrf.mxu0
        %v2177 = vadd.f32 %v2083, %v2176
        %v2178 = vpop.f32.mrf.mxu0
        %2179 = vdwg.mxu0
        %v2180 = vmax.f32 %v2138, 0.0
        %v2181 = vmax.f32 %v2151, 0.0
        %v2182 = vmax.f32 %v2164, 0.0
        %v2183 = vmax.f32 %v2177, 0.0
        %v2184 = vpack.c.bf16 %v2180, %v2180
        %v2185 = vpack.c.bf16 %v2181, %v2181
        %v2186 = vpack.c.bf16 %v2182, %v2182
        %v2187 = vpack.c.bf16 %v2183, %v2183
        %v2188 = vld [vmem:[%s734 + $0x200] sm:$0xf]
        %v2189 = vld [vmem:[%s734 + $0x204] sm:$0xf]
        %v2190 = vld [vmem:[%s734 + $0x208] sm:$0xf]
        %v2191 = vld [vmem:[%s734 + $0x20c] sm:$0xf]
        %v2192 = vld [vmem:[%s734 + $0x210] sm:$0xf]
        %v2193 = vld [vmem:[%s734 + $0x214] sm:$0xf]
        %v2194 = vld [vmem:[%s734 + $0x218] sm:$0xf]
        %v2195 = vld [vmem:[%s734 + $0x21c] sm:$0xf]
        %v2196 = vld [vmem:[%s734 + $0x220] sm:$0xf]
        %v2197 = vld [vmem:[%s734 + $0x224] sm:$0xf]
        %v2198 = vld [vmem:[%s734 + $0x228] sm:$0xf]
        %v2199 = vld [vmem:[%s734 + $0x22c] sm:$0xf]
        %v2200 = vld [vmem:[%s734 + $0x230] sm:$0xf]
        %v2201 = vld [vmem:[%s734 + $0x234] sm:$0xf]
        %v2202 = vld [vmem:[%s734 + $0x238] sm:$0xf]
        %v2203 = vld [vmem:[%s734 + $0x23c] sm:$0xf]
        %v2204 = vld [vmem:[%s734 + $0x240] sm:$0xf]
        %v2205 = vld [vmem:[%s734 + $0x244] sm:$0xf]
        %v2206 = vld [vmem:[%s734 + $0x248] sm:$0xf]
        %v2207 = vld [vmem:[%s734 + $0x24c] sm:$0xf]
        %v2208 = vld [vmem:[%s734 + $0x250] sm:$0xf]
        %v2209 = vld [vmem:[%s734 + $0x254] sm:$0xf]
        %v2210 = vld [vmem:[%s734 + $0x258] sm:$0xf]
        %v2211 = vld [vmem:[%s734 + $0x25c] sm:$0xf]
        %v2212 = vld [vmem:[%s734 + $0x260] sm:$0xf]
        %v2213 = vld [vmem:[%s734 + $0x264] sm:$0xf]
        %v2214 = vld [vmem:[%s734 + $0x268] sm:$0xf]
        %v2215 = vld [vmem:[%s734 + $0x26c] sm:$0xf]
        %v2216 = vld [vmem:[%s734 + $0x270] sm:$0xf]
        %v2217 = vld [vmem:[%s734 + $0x274] sm:$0xf]
        %v2218 = vld [vmem:[%s734 + $0x278] sm:$0xf]
        %v2219 = vld [vmem:[%s734 + $0x27c] sm:$0xf]
        %v2220 = vld [vmem:[%s734 + $0x280] sm:$0xf]
        %v2221 = vld [vmem:[%s734 + $0x284] sm:$0xf]
        %v2222 = vld [vmem:[%s734 + $0x288] sm:$0xf]
        %v2223 = vld [vmem:[%s734 + $0x28c] sm:$0xf]
        %v2224 = vld [vmem:[%s734 + $0x290] sm:$0xf]
        %v2225 = vld [vmem:[%s734 + $0x294] sm:$0xf]
        %v2226 = vld [vmem:[%s734 + $0x298] sm:$0xf]
        %v2227 = vld [vmem:[%s734 + $0x29c] sm:$0xf]
        %v2228 = vld [vmem:[%s734 + $0x2a0] sm:$0xf]
        %v2229 = vld [vmem:[%s734 + $0x2a4] sm:$0xf]
        %v2230 = vld [vmem:[%s734 + $0x2a8] sm:$0xf]
        %v2231 = vld [vmem:[%s734 + $0x2ac] sm:$0xf]
        %v2232 = vld [vmem:[%s734 + $0x2b0] sm:$0xf]
        %v2233 = vld [vmem:[%s734 + $0x2b4] sm:$0xf]
        %v2234 = vld [vmem:[%s734 + $0x2b8] sm:$0xf]
        %v2235 = vld [vmem:[%s734 + $0x2bc] sm:$0xf]
        %v2236 = vld [vmem:[%s734 + $0x2c0] sm:$0xf]
        %v2237 = vld [vmem:[%s734 + $0x2c4] sm:$0xf]
        %v2238 = vld [vmem:[%s734 + $0x2c8] sm:$0xf]
        %v2239 = vld [vmem:[%s734 + $0x2cc] sm:$0xf]
        %v2240 = vld [vmem:[%s734 + $0x2d0] sm:$0xf]
        %v2241 = vld [vmem:[%s734 + $0x2d4] sm:$0xf]
        %v2242 = vld [vmem:[%s734 + $0x2d8] sm:$0xf]
        %v2243 = vld [vmem:[%s734 + $0x2dc] sm:$0xf]
        %v2244 = vld [vmem:[%s734 + $0x2e0] sm:$0xf]
        %v2245 = vld [vmem:[%s734 + $0x2e4] sm:$0xf]
        %v2246 = vld [vmem:[%s734 + $0x2e8] sm:$0xf]
        %v2247 = vld [vmem:[%s734 + $0x2ec] sm:$0xf]
        %v2248 = vld [vmem:[%s734 + $0x2f0] sm:$0xf]
        %v2249 = vld [vmem:[%s734 + $0x2f4] sm:$0xf]
        %v2250 = vld [vmem:[%s734 + $0x2f8] sm:$0xf]
        %v2251 = vld [vmem:[%s734 + $0x2fc] sm:$0xf]
        %v2316 = vunpack.c.l.b16 %v2188
        %v2317 = vunpack.c.l.b16 %v2189
        %v2318 = vunpack.c.l.b16 %v2190
        %v2319 = vunpack.c.l.b16 %v2191
        %v2320 = vunpack.c.l.b16 %v2192
        %v2321 = vunpack.c.l.b16 %v2193
        %v2322 = vunpack.c.l.b16 %v2194
        %v2323 = vunpack.c.l.b16 %v2195
        %v2324 = vunpack.c.l.b16 %v2196
        %v2325 = vunpack.c.l.b16 %v2197
        %v2326 = vunpack.c.l.b16 %v2198
        %v2327 = vunpack.c.l.b16 %v2199
        %v2328 = vunpack.c.l.b16 %v2200
        %v2329 = vunpack.c.l.b16 %v2201
        %v2330 = vunpack.c.l.b16 %v2202
        %v2331 = vunpack.c.l.b16 %v2203
        %v2332 = vunpack.c.l.b16 %v2204
        %v2333 = vunpack.c.l.b16 %v2205
        %v2334 = vunpack.c.l.b16 %v2206
        %v2335 = vunpack.c.l.b16 %v2207
        %v2336 = vunpack.c.l.b16 %v2208
        %v2337 = vunpack.c.l.b16 %v2209
        %v2338 = vunpack.c.l.b16 %v2210
        %v2339 = vunpack.c.l.b16 %v2211
        %v2340 = vunpack.c.l.b16 %v2212
        %v2341 = vunpack.c.l.b16 %v2213
        %v2342 = vunpack.c.l.b16 %v2214
        %v2343 = vunpack.c.l.b16 %v2215
        %v2344 = vunpack.c.l.b16 %v2216
        %v2345 = vunpack.c.l.b16 %v2217
        %v2346 = vunpack.c.l.b16 %v2218
        %v2347 = vunpack.c.l.b16 %v2219
        %v2348 = vunpack.c.l.b16 %v2220
        %v2349 = vunpack.c.l.b16 %v2221
        %v2350 = vunpack.c.l.b16 %v2222
        %v2351 = vunpack.c.l.b16 %v2223
        %v2352 = vunpack.c.l.b16 %v2224
        %v2353 = vunpack.c.l.b16 %v2225
        %v2354 = vunpack.c.l.b16 %v2226
        %v2355 = vunpack.c.l.b16 %v2227
        %v2356 = vunpack.c.l.b16 %v2228
        %v2357 = vunpack.c.l.b16 %v2229
        %v2358 = vunpack.c.l.b16 %v2230
        %v2359 = vunpack.c.l.b16 %v2231
        %v2360 = vunpack.c.l.b16 %v2232
        %v2361 = vunpack.c.l.b16 %v2233
        %v2362 = vunpack.c.l.b16 %v2234
        %v2363 = vunpack.c.l.b16 %v2235
        %v2364 = vunpack.c.l.b16 %v2236
        %v2365 = vunpack.c.l.b16 %v2237
        %v2366 = vunpack.c.l.b16 %v2238
        %v2367 = vunpack.c.l.b16 %v2239
        %v2368 = vunpack.c.l.b16 %v2240
        %v2369 = vunpack.c.l.b16 %v2241
        %v2370 = vunpack.c.l.b16 %v2242
        %v2371 = vunpack.c.l.b16 %v2243
        %v2372 = vunpack.c.l.b16 %v2244
        %v2373 = vunpack.c.l.b16 %v2245
        %v2374 = vunpack.c.l.b16 %v2246
        %v2375 = vunpack.c.l.b16 %v2247
        %v2376 = vunpack.c.l.b16 %v2248
        %v2377 = vunpack.c.l.b16 %v2249
        %v2378 = vunpack.c.l.b16 %v2250
        %v2379 = vunpack.c.l.b16 %v2251
        %v2380 = vpack.c.b16 %v2317, %v2316
        %v2381 = vpack.c.b16 %v2319, %v2318
        %v2382 = vpack.c.b16 %v2321, %v2320
        %v2383 = vpack.c.b16 %v2323, %v2322
        %v2384 = vpack.c.b16 %v2325, %v2324
        %v2385 = vpack.c.b16 %v2327, %v2326
        %v2386 = vpack.c.b16 %v2329, %v2328
        %v2387 = vpack.c.b16 %v2331, %v2330
        %v2388 = vpack.c.b16 %v2333, %v2332
        %v2389 = vpack.c.b16 %v2335, %v2334
        %v2390 = vpack.c.b16 %v2337, %v2336
        %v2391 = vpack.c.b16 %v2339, %v2338
        %v2392 = vpack.c.b16 %v2341, %v2340
        %v2393 = vpack.c.b16 %v2343, %v2342
        %v2394 = vpack.c.b16 %v2345, %v2344
        %v2395 = vpack.c.b16 %v2347, %v2346
        %v2396 = vpack.c.b16 %v2349, %v2348
        %v2397 = vpack.c.b16 %v2351, %v2350
        %v2398 = vpack.c.b16 %v2353, %v2352
        %v2399 = vpack.c.b16 %v2355, %v2354
        %v2400 = vpack.c.b16 %v2357, %v2356
        %v2401 = vpack.c.b16 %v2359, %v2358
        %v2402 = vpack.c.b16 %v2361, %v2360
        %v2403 = vpack.c.b16 %v2363, %v2362
        %v2404 = vpack.c.b16 %v2365, %v2364
        %v2405 = vpack.c.b16 %v2367, %v2366
        %v2406 = vpack.c.b16 %v2369, %v2368
        %v2407 = vpack.c.b16 %v2371, %v2370
        %v2408 = vpack.c.b16 %v2373, %v2372
        %v2409 = vpack.c.b16 %v2375, %v2374
        %v2410 = vpack.c.b16 %v2377, %v2376
        %v2411 = vpack.c.b16 %v2379, %v2378
        %2444 = vmatpush.bf16.msra.mxu0 %v2387
        %2445 = vmatpush.bf16.msra.mxu0 %v2386
        %2446 = vmatpush.bf16.msra.mxu0 %v2385
        %2447 = vmatpush.bf16.msra.mxu0 %v2384
        %2448 = vmatpush.bf16.msra.mxu0 %v2383
        %2449 = vmatpush.bf16.msra.mxu0 %v2382
        %2450 = vmatpush.bf16.msra.mxu0 %v2381
        %2451 = vmatpush.bf16.msra.mxu0 %v2380
        %2452 = vmatmul.bf16.gmra.mxu0 %v2184
        %v2453 = vpop.f32.mrf.mxu0
        %v2454 = vadd.f32 0.0, %v2453
        %v2455 = vpop.f32.mrf.mxu0
        %2456 = vdwg.mxu0
        %2457 = vmatpush.bf16.msra.mxu0 %v2395
        %2458 = vmatpush.bf16.msra.mxu0 %v2394
        %2459 = vmatpush.bf16.msra.mxu0 %v2393
        %2460 = vmatpush.bf16.msra.mxu0 %v2392
        %2461 = vmatpush.bf16.msra.mxu0 %v2391
        %2462 = vmatpush.bf16.msra.mxu0 %v2390
        %2463 = vmatpush.bf16.msra.mxu0 %v2389
        %2464 = vmatpush.bf16.msra.mxu0 %v2388
        %2465 = vmatmul.bf16.gmra.mxu0 %v2185
        %v2466 = vpop.f32.mrf.mxu0
        %v2467 = vadd.f32 %v2454, %v2466
        %v2468 = vpop.f32.mrf.mxu0
        %2469 = vdwg.mxu0
        %2470 = vmatpush.bf16.msra.mxu0 %v2403
        %2471 = vmatpush.bf16.msra.mxu0 %v2402
        %2472 = vmatpush.bf16.msra.mxu0 %v2401
        %2473 = vmatpush.bf16.msra.mxu0 %v2400
        %2474 = vmatpush.bf16.msra.mxu0 %v2399
        %2475 = vmatpush.bf16.msra.mxu0 %v2398
        %2476 = vmatpush.bf16.msra.mxu0 %v2397
        %2477 = vmatpush.bf16.msra.mxu0 %v2396
        %2478 = vmatmul.bf16.gmra.mxu0 %v2186
        %v2479 = vpop.f32.mrf.mxu0
        %v2480 = vadd.f32 %v2467, %v2479
        %v2481 = vpop.f32.mrf.mxu0
        %2482 = vdwg.mxu0
        %2483 = vmatpush.bf16.msra.mxu0 %v2411
        %2484 = vmatpush.bf16.msra.mxu0 %v2410
        %2485 = vmatpush.bf16.msra.mxu0 %v2409
        %2486 = vmatpush.bf16.msra.mxu0 %v2408
        %2487 = vmatpush.bf16.msra.mxu0 %v2407
        %2488 = vmatpush.bf16.msra.mxu0 %v2406
        %2489 = vmatpush.bf16.msra.mxu0 %v2405
        %2490 = vmatpush.bf16.msra.mxu0 %v2404
        %2491 = vmatmul.bf16.gmra.mxu0 %v2187
        %v2492 = vpop.f32.mrf.mxu0
        %v2493 = vadd.f32 %v2480, %v2492
        %v2494 = vpop.f32.mrf.mxu0
        %2495 = vdwg.mxu0
        %v2496 = vadd.f32 %v2067, %v2493
        %v2497 = vld [vmem:[%s725 + $0x30] sm:$0xff]
        %v2498 = vld [vmem:[%s725 + $0x38] sm:$0xff]
        %v2499 = vld [vmem:[%s725 + $0x70] sm:$0xff]
        %v2500 = vld [vmem:[%s725 + $0x78] sm:$0xff]
        %v2501 = vld [vmem:[%s725 + $0xb0] sm:$0xff]
        %v2502 = vld [vmem:[%s725 + $0xb8] sm:$0xff]
        %v2503 = vld [vmem:[%s725 + $0xf0] sm:$0xff]
        %v2504 = vld [vmem:[%s725 + $0xf8] sm:$0xff]
        %v2505 = vld [vmem:[%s729 + $0xc] sm:$0xf]
        %v2507 = vperm.slane %v2505, 0
        %v2508 = vperm.slane %v2505, 1
        %v2509 = vperm.slane %v2505, 2
        %v2510 = vperm.slane %v2505, 3
        %v2523 = vunpack.c.l.b16 %v2497
        %v2524 = vunpack.c.h.b16 %v2497
        %v2525 = vunpack.c.l.b16 %v2498
        %v2526 = vunpack.c.h.b16 %v2498
        %v2527 = vunpack.c.l.b16 %v2499
        %v2528 = vunpack.c.h.b16 %v2499
        %v2529 = vunpack.c.l.b16 %v2500
        %v2530 = vunpack.c.h.b16 %v2500
        %v2531 = vunpack.c.l.b16 %v2501
        %v2532 = vunpack.c.h.b16 %v2501
        %v2533 = vunpack.c.l.b16 %v2502
        %v2534 = vunpack.c.h.b16 %v2502
        %v2535 = vunpack.c.l.b16 %v2503
        %v2536 = vunpack.c.h.b16 %v2503
        %v2537 = vunpack.c.l.b16 %v2504
        %v2538 = vunpack.c.h.b16 %v2504
        %v2539 = vpack.c.b16 %v2527, %v2523
        %v2540 = vpack.c.b16 %v2528, %v2524
        %v2541 = vpack.c.b16 %v2529, %v2525
        %v2542 = vpack.c.b16 %v2530, %v2526
        %v2543 = vpack.c.b16 %v2535, %v2531
        %v2544 = vpack.c.b16 %v2536, %v2532
        %v2545 = vpack.c.b16 %v2537, %v2533
        %v2546 = vpack.c.b16 %v2538, %v2534
        %2555 = vmatpush.bf16.msra.mxu0 0
        %2556 = vmatpush.bf16.msra.mxu0 0
        %2557 = vmatpush.bf16.msra.mxu0 0
        %2558 = vmatpush.bf16.msra.mxu0 0
        %2559 = vmatpush.bf16.msra.mxu0 0
        %2560 = vmatpush.bf16.msra.mxu0 0
        %2561 = vmatpush.bf16.msra.mxu0 %v2543
        %2562 = vmatpush.bf16.msra.mxu0 %v2539
        %2563 = vmatmul.bf16.gmra.mxu0 %v1274
        %v2564 = vpop.f32.mrf.mxu0
        %v2565 = vadd.f32 %v2507, %v2564
        %v2566 = vpop.f32.mrf.mxu0
        %2567 = vdwg.mxu0
        %2568 = vmatpush.bf16.msra.mxu0 0
        %2569 = vmatpush.bf16.msra.mxu0 0
        %2570 = vmatpush.bf16.msra.mxu0 0
        %2571 = vmatpush.bf16.msra.mxu0 0
        %2572 = vmatpush.bf16.msra.mxu0 0
        %2573 = vmatpush.bf16.msra.mxu0 0
        %2574 = vmatpush.bf16.msra.mxu0 %v2544
        %2575 = vmatpush.bf16.msra.mxu0 %v2540
        %2576 = vmatmul.bf16.gmra.mxu0 %v1274
        %v2577 = vpop.f32.mrf.mxu0
        %v2578 = vadd.f32 %v2508, %v2577
        %v2579 = vpop.f32.mrf.mxu0
        %2580 = vdwg.mxu0
        %2581 = vmatpush.bf16.msra.mxu0 0
        %2582 = vmatpush.bf16.msra.mxu0 0
        %2583 = vmatpush.bf16.msra.mxu0 0
        %2584 = vmatpush.bf16.msra.mxu0 0
        %2585 = vmatpush.bf16.msra.mxu0 0
        %2586 = vmatpush.bf16.msra.mxu0 0
        %2587 = vmatpush.bf16.msra.mxu0 %v2545
        %2588 = vmatpush.bf16.msra.mxu0 %v2541
        %2589 = vmatmul.bf16.gmra.mxu0 %v1274
        %v2590 = vpop.f32.mrf.mxu0
        %v2591 = vadd.f32 %v2509, %v2590
        %v2592 = vpop.f32.mrf.mxu0
        %2593 = vdwg.mxu0
        %2594 = vmatpush.bf16.msra.mxu0 0
        %2595 = vmatpush.bf16.msra.mxu0 0
        %2596 = vmatpush.bf16.msra.mxu0 0
        %2597 = vmatpush.bf16.msra.mxu0 0
        %2598 = vmatpush.bf16.msra.mxu0 0
        %2599 = vmatpush.bf16.msra.mxu0 0
        %2600 = vmatpush.bf16.msra.mxu0 %v2546
        %2601 = vmatpush.bf16.msra.mxu0 %v2542
        %2602 = vmatmul.bf16.gmra.mxu0 %v1274
        %v2603 = vpop.f32.mrf.mxu0
        %v2604 = vadd.f32 %v2510, %v2603
        %v2605 = vpop.f32.mrf.mxu0
        %2606 = vdwg.mxu0
        %v2607 = vmax.f32 %v2565, 0.0
        %v2608 = vmax.f32 %v2578, 0.0
        %v2609 = vmax.f32 %v2591, 0.0
        %v2610 = vmax.f32 %v2604, 0.0
        %v2611 = vpack.c.bf16 %v2607, %v2607
        %v2612 = vpack.c.bf16 %v2608, %v2608
        %v2613 = vpack.c.bf16 %v2609, %v2609
        %v2614 = vpack.c.bf16 %v2610, %v2610
        %v2615 = vld [vmem:[%s734 + $0x300] sm:$0xf]
        %v2616 = vld [vmem:[%s734 + $0x304] sm:$0xf]
        %v2617 = vld [vmem:[%s734 + $0x308] sm:$0xf]
        %v2618 = vld [vmem:[%s734 + $0x30c] sm:$0xf]
        %v2619 = vld [vmem:[%s734 + $0x310] sm:$0xf]
        %v2620 = vld [vmem:[%s734 + $0x314] sm:$0xf]
        %v2621 = vld [vmem:[%s734 + $0x318] sm:$0xf]
        %v2622 = vld [vmem:[%s734 + $0x31c] sm:$0xf]
        %v2623 = vld [vmem:[%s734 + $0x320] sm:$0xf]
        %v2624 = vld [vmem:[%s734 + $0x324] sm:$0xf]
        %v2625 = vld [vmem:[%s734 + $0x328] sm:$0xf]
        %v2626 = vld [vmem:[%s734 + $0x32c] sm:$0xf]
        %v2627 = vld [vmem:[%s734 + $0x330] sm:$0xf]
        %v2628 = vld [vmem:[%s734 + $0x334] sm:$0xf]
        %v2629 = vld [vmem:[%s734 + $0x338] sm:$0xf]
        %v2630 = vld [vmem:[%s734 + $0x33c] sm:$0xf]
        %v2631 = vld [vmem:[%s734 + $0x340] sm:$0xf]
        %v2632 = vld [vmem:[%s734 + $0x344] sm:$0xf]
        %v2633 = vld [vmem:[%s734 + $0x348] sm:$0xf]
        %v2634 = vld [vmem:[%s734 + $0x34c] sm:$0xf]
        %v2635 = vld [vmem:[%s734 + $0x350] sm:$0xf]
        %v2636 = vld [vmem:[%s734 + $0x354] sm:$0xf]
        %v2637 = vld [vmem:[%s734 + $0x358] sm:$0xf]
        %v2638 = vld [vmem:[%s734 + $0x35c] sm:$0xf]
        %v2639 = vld [vmem:[%s734 + $0x360] sm:$0xf]
        %v2640 = vld [vmem:[%s734 + $0x364] sm:$0xf]
        %v2641 = vld [vmem:[%s734 + $0x368] sm:$0xf]
        %v2642 = vld [vmem:[%s734 + $0x36c] sm:$0xf]
        %v2643 = vld [vmem:[%s734 + $0x370] sm:$0xf]
        %v2644 = vld [vmem:[%s734 + $0x374] sm:$0xf]
        %v2645 = vld [vmem:[%s734 + $0x378] sm:$0xf]
        %v2646 = vld [vmem:[%s734 + $0x37c] sm:$0xf]
        %v2647 = vld [vmem:[%s734 + $0x380] sm:$0xf]
        %v2648 = vld [vmem:[%s734 + $0x384] sm:$0xf]
        %v2649 = vld [vmem:[%s734 + $0x388] sm:$0xf]
        %v2650 = vld [vmem:[%s734 + $0x38c] sm:$0xf]
        %v2651 = vld [vmem:[%s734 + $0x390] sm:$0xf]
        %v2652 = vld [vmem:[%s734 + $0x394] sm:$0xf]
        %v2653 = vld [vmem:[%s734 + $0x398] sm:$0xf]
        %v2654 = vld [vmem:[%s734 + $0x39c] sm:$0xf]
        %v2655 = vld [vmem:[%s734 + $0x3a0] sm:$0xf]
        %v2656 = vld [vmem:[%s734 + $0x3a4] sm:$0xf]
        %v2657 = vld [vmem:[%s734 + $0x3a8] sm:$0xf]
        %v2658 = vld [vmem:[%s734 + $0x3ac] sm:$0xf]
        %v2659 = vld [vmem:[%s734 + $0x3b0] sm:$0xf]
        %v2660 = vld [vmem:[%s734 + $0x3b4] sm:$0xf]
        %v2661 = vld [vmem:[%s734 + $0x3b8] sm:$0xf]
        %v2662 = vld [vmem:[%s734 + $0x3bc] sm:$0xf]
        %v2663 = vld [vmem:[%s734 + $0x3c0] sm:$0xf]
        %v2664 = vld [vmem:[%s734 + $0x3c4] sm:$0xf]
        %v2665 = vld [vmem:[%s734 + $0x3c8] sm:$0xf]
        %v2666 = vld [vmem:[%s734 + $0x3cc] sm:$0xf]
        %v2667 = vld [vmem:[%s734 + $0x3d0] sm:$0xf]
        %v2668 = vld [vmem:[%s734 + $0x3d4] sm:$0xf]
        %v2669 = vld [vmem:[%s734 + $0x3d8] sm:$0xf]
        %v2670 = vld [vmem:[%s734 + $0x3dc] sm:$0xf]
        %v2671 = vld [vmem:[%s734 + $0x3e0] sm:$0xf]
        %v2672 = vld [vmem:[%s734 + $0x3e4] sm:$0xf]
        %v2673 = vld [vmem:[%s734 + $0x3e8] sm:$0xf]
        %v2674 = vld [vmem:[%s734 + $0x3ec] sm:$0xf]
        %v2675 = vld [vmem:[%s734 + $0x3f0] sm:$0xf]
        %v2676 = vld [vmem:[%s734 + $0x3f4] sm:$0xf]
        %v2677 = vld [vmem:[%s734 + $0x3f8] sm:$0xf]
        %v2678 = vld [vmem:[%s734 + $0x3fc] sm:$0xf]
        %v2743 = vunpack.c.l.b16 %v2615
        %v2744 = vunpack.c.l.b16 %v2616
        %v2745 = vunpack.c.l.b16 %v2617
        %v2746 = vunpack.c.l.b16 %v2618
        %v2747 = vunpack.c.l.b16 %v2619
        %v2748 = vunpack.c.l.b16 %v2620
        %v2749 = vunpack.c.l.b16 %v2621
        %v2750 = vunpack.c.l.b16 %v2622
        %v2751 = vunpack.c.l.b16 %v2623
        %v2752 = vunpack.c.l.b16 %v2624
        %v2753 = vunpack.c.l.b16 %v2625
        %v2754 = vunpack.c.l.b16 %v2626
        %v2755 = vunpack.c.l.b16 %v2627
        %v2756 = vunpack.c.l.b16 %v2628
        %v2757 = vunpack.c.l.b16 %v2629
        %v2758 = vunpack.c.l.b16 %v2630
        %v2759 = vunpack.c.l.b16 %v2631
        %v2760 = vunpack.c.l.b16 %v2632
        %v2761 = vunpack.c.l.b16 %v2633
        %v2762 = vunpack.c.l.b16 %v2634
        %v2763 = vunpack.c.l.b16 %v2635
        %v2764 = vunpack.c.l.b16 %v2636
        %v2765 = vunpack.c.l.b16 %v2637
        %v2766 = vunpack.c.l.b16 %v2638
        %v2767 = vunpack.c.l.b16 %v2639
        %v2768 = vunpack.c.l.b16 %v2640
        %v2769 = vunpack.c.l.b16 %v2641
        %v2770 = vunpack.c.l.b16 %v2642
        %v2771 = vunpack.c.l.b16 %v2643
        %v2772 = vunpack.c.l.b16 %v2644
        %v2773 = vunpack.c.l.b16 %v2645
        %v2774 = vunpack.c.l.b16 %v2646
        %v2775 = vunpack.c.l.b16 %v2647
        %v2776 = vunpack.c.l.b16 %v2648
        %v2777 = vunpack.c.l.b16 %v2649
        %v2778 = vunpack.c.l.b16 %v2650
        %v2779 = vunpack.c.l.b16 %v2651
        %v2780 = vunpack.c.l.b16 %v2652
        %v2781 = vunpack.c.l.b16 %v2653
        %v2782 = vunpack.c.l.b16 %v2654
        %v2783 = vunpack.c.l.b16 %v2655
        %v2784 = vunpack.c.l.b16 %v2656
        %v2785 = vunpack.c.l.b16 %v2657
        %v2786 = vunpack.c.l.b16 %v2658
        %v2787 = vunpack.c.l.b16 %v2659
        %v2788 = vunpack.c.l.b16 %v2660
        %v2789 = vunpack.c.l.b16 %v2661
        %v2790 = vunpack.c.l.b16 %v2662
        %v2791 = vunpack.c.l.b16 %v2663
        %v2792 = vunpack.c.l.b16 %v2664
        %v2793 = vunpack.c.l.b16 %v2665
        %v2794 = vunpack.c.l.b16 %v2666
        %v2795 = vunpack.c.l.b16 %v2667
        %v2796 = vunpack.c.l.b16 %v2668
        %v2797 = vunpack.c.l.b16 %v2669
        %v2798 = vunpack.c.l.b16 %v2670
        %v2799 = vunpack.c.l.b16 %v2671
        %v2800 = vunpack.c.l.b16 %v2672
        %v2801 = vunpack.c.l.b16 %v2673
        %v2802 = vunpack.c.l.b16 %v2674
        %v2803 = vunpack.c.l.b16 %v2675
        %v2804 = vunpack.c.l.b16 %v2676
        %v2805 = vunpack.c.l.b16 %v2677
        %v2806 = vunpack.c.l.b16 %v2678
        %v2807 = vpack.c.b16 %v2744, %v2743
        %v2808 = vpack.c.b16 %v2746, %v2745
        %v2809 = vpack.c.b16 %v2748, %v2747
        %v2810 = vpack.c.b16 %v2750, %v2749
        %v2811 = vpack.c.b16 %v2752, %v2751
        %v2812 = vpack.c.b16 %v2754, %v2753
        %v2813 = vpack.c.b16 %v2756, %v2755
        %v2814 = vpack.c.b16 %v2758, %v2757
        %v2815 = vpack.c.b16 %v2760, %v2759
        %v2816 = vpack.c.b16 %v2762, %v2761
        %v2817 = vpack.c.b16 %v2764, %v2763
        %v2818 = vpack.c.b16 %v2766, %v2765
        %v2819 = vpack.c.b16 %v2768, %v2767
        %v2820 = vpack.c.b16 %v2770, %v2769
        %v2821 = vpack.c.b16 %v2772, %v2771
        %v2822 = vpack.c.b16 %v2774, %v2773
        %v2823 = vpack.c.b16 %v2776, %v2775
        %v2824 = vpack.c.b16 %v2778, %v2777
        %v2825 = vpack.c.b16 %v2780, %v2779
        %v2826 = vpack.c.b16 %v2782, %v2781
        %v2827 = vpack.c.b16 %v2784, %v2783
        %v2828 = vpack.c.b16 %v2786, %v2785
        %v2829 = vpack.c.b16 %v2788, %v2787
        %v2830 = vpack.c.b16 %v2790, %v2789
        %v2831 = vpack.c.b16 %v2792, %v2791
        %v2832 = vpack.c.b16 %v2794, %v2793
        %v2833 = vpack.c.b16 %v2796, %v2795
        %v2834 = vpack.c.b16 %v2798, %v2797
        %v2835 = vpack.c.b16 %v2800, %v2799
        %v2836 = vpack.c.b16 %v2802, %v2801
        %v2837 = vpack.c.b16 %v2804, %v2803
        %v2838 = vpack.c.b16 %v2806, %v2805
        %2871 = vmatpush.bf16.msra.mxu0 %v2814
        %2872 = vmatpush.bf16.msra.mxu0 %v2813
        %2873 = vmatpush.bf16.msra.mxu0 %v2812
        %2874 = vmatpush.bf16.msra.mxu0 %v2811
        %2875 = vmatpush.bf16.msra.mxu0 %v2810
        %2876 = vmatpush.bf16.msra.mxu0 %v2809
        %2877 = vmatpush.bf16.msra.mxu0 %v2808
        %2878 = vmatpush.bf16.msra.mxu0 %v2807
        %2879 = vmatmul.bf16.gmra.mxu0 %v2611
        %v2880 = vpop.f32.mrf.mxu0
        %v2881 = vadd.f32 0.0, %v2880
        %v2882 = vpop.f32.mrf.mxu0
        %2883 = vdwg.mxu0
        %2884 = vmatpush.bf16.msra.mxu0 %v2822
        %2885 = vmatpush.bf16.msra.mxu0 %v2821
        %2886 = vmatpush.bf16.msra.mxu0 %v2820
        %2887 = vmatpush.bf16.msra.mxu0 %v2819
        %2888 = vmatpush.bf16.msra.mxu0 %v2818
        %2889 = vmatpush.bf16.msra.mxu0 %v2817
        %2890 = vmatpush.bf16.msra.mxu0 %v2816
        %2891 = vmatpush.bf16.msra.mxu0 %v2815
        %2892 = vmatmul.bf16.gmra.mxu0 %v2612
        %v2893 = vpop.f32.mrf.mxu0
        %v2894 = vadd.f32 %v2881, %v2893
        %v2895 = vpop.f32.mrf.mxu0
        %2896 = vdwg.mxu0
        %2897 = vmatpush.bf16.msra.mxu0 %v2830
        %2898 = vmatpush.bf16.msra.mxu0 %v2829
        %2899 = vmatpush.bf16.msra.mxu0 %v2828
        %2900 = vmatpush.bf16.msra.mxu0 %v2827
        %2901 = vmatpush.bf16.msra.mxu0 %v2826
        %2902 = vmatpush.bf16.msra.mxu0 %v2825
        %2903 = vmatpush.bf16.msra.mxu0 %v2824
        %2904 = vmatpush.bf16.msra.mxu0 %v2823
        %2905 = vmatmul.bf16.gmra.mxu0 %v2613
        %v2906 = vpop.f32.mrf.mxu0
        %v2907 = vadd.f32 %v2894, %v2906
        %v2908 = vpop.f32.mrf.mxu0
        %2909 = vdwg.mxu0
        %2910 = vmatpush.bf16.msra.mxu0 %v2838
        %2911 = vmatpush.bf16.msra.mxu0 %v2837
        %2912 = vmatpush.bf16.msra.mxu0 %v2836
        %2913 = vmatpush.bf16.msra.mxu0 %v2835
        %2914 = vmatpush.bf16.msra.mxu0 %v2834
        %2915 = vmatpush.bf16.msra.mxu0 %v2833
        %2916 = vmatpush.bf16.msra.mxu0 %v2832
        %2917 = vmatpush.bf16.msra.mxu0 %v2831
        %2918 = vmatmul.bf16.gmra.mxu0 %v2614
        %v2919 = vpop.f32.mrf.mxu0
        %v2920 = vadd.f32 %v2907, %v2919
        %v2921 = vpop.f32.mrf.mxu0
        %2922 = vdwg.mxu0
        %v2923 = vadd.f32 %v2496, %v2920
        %v2924 = vadd.f32 %v1164, %v2923
        %v2925 = vld [vmem:[%s737] sm:$0x1]
        %v2927 = vperm.slane %v2925, 0
        %v2929 = vadd.f32 %v2924, %v2927
        %2930 = vst.msk [vmem:[%s685] sm:$0xff] %vm752, %v2929
        %p2931 = scmp.eq.s32.totalorder %s35, 1
        // Predicated region
        $region89: #{tpu_custom_call.1} parent=83 // pred_check
          %p2932 = pneg %p2931
        $region90: #{tpu_custom_call.1} parent=83 // pred_check_branch
          %2934 = sbr.rel (%p2932) target = $region92
        $region91: #{tpu_custom_call.1} parent=83 // pred_region
          %v2935 = vld [vmem:[%s14] sm:$0x1]
          %v2936 = vld [vmem:[%s15] sm:$0x1]
          %v2937 = vsel %vm752, %v2929, 0.0
          %2938 = vadd.xlane.f32.xlu0 %v2937
          %v2939 = vpop.xlane.xlu0 %2938
          %v2940 = vmul.f32 %v2939, %v762
          %v2941 = vsub.f32 %v2929, %v2940
          %v2942 = vmul.f32 %v2941, %v2941
          %v2943 = vsel %vm752, %v2942, 0.0
          %2944 = vadd.xlane.f32.xlu0 %v2943
          %v2945 = vpop.xlane.xlu0 %2944
          %v2946 = vmul.f32 %v2945, 0.032258064
          %v2947 = vrsqrt.pop %v2946
          %v2948 = vmul.f32 %v2947, %v2946
          %v2949 = vmul.f32 %v2948, %v2947
          %v2950 = vmul.f32 0.5, %v2949
          %v2951 = vsub.f32 1.5, %v2950
          %v2952 = vmul.f32 %v2947, %v2951
          %v2953 = vmul.f32 %v2946, %v2952
          %vm2954 = vcmp.eq.f32.partialorder %v2946, inf
          %v2955 = vsel %vm2954, %v2946, %v2953
          %vm2956 = vcmp.eq.f32.partialorder %v2946, 0.0
          %v2957 = vand.u32 %v2946, 2147483648
          %v2958 = vsel %vm2956, %v2957, %v2955
          %v2959 = vadd.f32 %v2958, 1e-06
          %v2960 = vrcp.pop %v2959
          %v2961 = vmul.f32 %v2959, %v2960
          %v2962 = vsub.f32 1.0, %v2961
          %v2963 = vmul.f32 %v2960, %v2962
          %v2964 = vadd.f32 %v2960, %v2963
          %vm2965 = vweird.f32 %v2959
          %vm2966 = vweird.f32 %v2960
          %vm2967 = vmor %vm2965, %vm2966
          %v2968 = vsel %vm2967, %v2960, %v2964
          %v2969 = vand.u32 2147483647, %v2959
          %vm2970 = vcmp.eq.f32.partialorder %v2969, 8.507059e+37
          %v2971 = vand.u32 %v2959, 2147483648
          %v2972 = vor.u32 1.1754944e-38, %v2971
          %v2973 = vsel %vm2970, %v2972, %v2968
          %v2974 = vmul.f32 1.0, %v2973
          %v2975 = vmul.f32 %v2941, %v2974
          %v2977 = vperm.slane %v2935, 0
          %v2979 = vmul.f32 %v2977, %v2975
          %v2981 = vperm.slane %v2936, 0
          %v2983 = vadd.f32 %v2979, %v2981
          %2984 = vst.msk [vmem:[%s685] sm:$0xff] %vm752, %v2983
        $region92: #{tpu_custom_call.1} parent=83 // pred_fallthru
          _
        %s2985 = sand.u32 %s456, 1
        %s2986 = scalar_lea.sflag [#allocation3], %s2985
        %s2987 = sand.u32 %s456, 1
        %s2988 = smul.addr %s2987, 8
        %s2989 = scalar_lea.vmem [#allocation2], %s2988
        // Predicated region
        $region93: #{tpu_custom_call.1} parent=83 // pred_check
          %p2990 = pneg %p466
        $region94: #{tpu_custom_call.1} parent=83 // pred_check_branch
          %2992 = sbr.rel (%p2990) target = $region96
        $region95: #{tpu_custom_call.1} parent=83 // pred_region
          %2994 = vsyncadd %s2986, 0
          %s2995 = smul.addr %s34, 8
          %s2996 = scalar_lea.hbm %s16, %s2995
          %s2998 = sshll.u32 %s2989, 4
          %s2999 = int_to_ptr.vmem [resolvable:$true] %s2998
          %s3000 = sshll.u32 %s2996, 4
          %s3001 = int_to_ptr.hbm [resolvable:$true] %s3000
          %3003 = dma.vmem_to_hbm [thread:$0]  %s2999, 128, %s3001, %s2986
        $region96: #{tpu_custom_call.1} parent=83 // pred_fallthru
          _
      $region84: #{tpu_custom_call.1} parent=5 // pred_fallthru
        _
      %p3004 = scmp.le.s32.totalorder 2, %s25
      // Predicated region
      $region97: #{tpu_custom_call.1} parent=5 // pred_check
        %p3005 = pneg %p3004
      $region98: #{tpu_custom_call.1} parent=5 // pred_check_branch
        %3007 = sbr.rel (%p3005) target = $region100
      $region99: #{tpu_custom_call.1} parent=5 // pred_region
        %s3008 = ssub.s32 %s25, 2
        // Predicated region
        $region101: #{tpu_custom_call.1} parent=99 // pred_check
          %p3009 = pneg %p472
        $region102: #{tpu_custom_call.1} parent=99 // pred_check_branch
          %3011 = sbr.rel (%p3009) target = $region104
        $region103: #{tpu_custom_call.1} parent=99 // pred_region
          %s3012 = sand.u32 %s457, 1
          %s3013 = scalar_lea.sflag [#allocation3], %s3012
          %s3014 = sand.u32 %s457, 1
          %s3015 = smul.addr %s3014, 8
          %s3016 = scalar_lea.vmem [#allocation2], %s3015
          %3018 = dma.done %s3013, 128
        $region104: #{tpu_custom_call.1} parent=99 // pred_fallthru
          _
      $region100: #{tpu_custom_call.1} parent=5 // pred_fallthru
        _
    $region6: #{tpu_custom_call.1} parent=1 // loop_footer
      %s29 = sadd.s32 1, %s25
    $region7: #{tpu_custom_call.1} parent=1 // loop_footer_branch
      %24 = sbr.rel target = $region3
    $region8: #{tpu_custom_call.1} parent=1 // loop_exit
      _
    %3019 = vsyncpa [#allocation3], 1
    %s3020 = scalar_lea.sflag [#allocation3], 1
    %3021 = vsyncpa %s3020, 1

</llo_original>
